<compile_context>
chip_gen: v6e
topology: v6e:2x2x1
jax: 0.10.0
libtpu: 0.0.40
codegen_flags: <defaults>
</compile_context>

<pallas_src>
import jax
import jax.numpy as jnp
from jax import lax
from jax.experimental import pallas as pl
from jax.experimental.pallas import tpu as pltpu


def _basic_conv3x3(img, w_ref, b, gamma, beta, pad_ref, *, relu):
    """One BasicConv: reflect-pad(1) -> 3x3 conv -> bias -> InstanceNorm(affine) -> [ReLU].

    img:      (H, W, c_img) f32 value (c_img <= Cp; lanes >= c_img in pad_ref are zero)
    w_ref:    (9*Cp, Cp) bf16 ref, im2col weight layout (kh, kw, ci) x co
    b, gamma, beta: (1, Cp) f32 values
    pad_ref:  (H+2, W+2, Cp) f32 VMEM scratch
    returns:  (H*W, Cp) f32
    """
    H, W, c_img = img.shape
    Cp = pad_ref.shape[-1]

    # ---- in-kernel 1-pixel reflection pad (small halo copies into VMEM) -----
    pad_ref[1:H + 1, 1:W + 1, 0:c_img] = img                    # interior
    pad_ref[0:1, 1:W + 1, 0:c_img] = img[1:2]                   # top    = row 1
    pad_ref[H + 1:H + 2, 1:W + 1, 0:c_img] = img[H - 2:H - 1]   # bottom = row H-2
    pad_ref[:, 0:1, :] = pad_ref[:, 2:3, :]                     # left   = col 1
    pad_ref[:, W + 1:W + 2, :] = pad_ref[:, W - 1:W, :]         # right  = col W-2

    # ---- im2col: 9 shifted window reads -> one (H*W, 9*Cp) patch matrix -----
    # Taps are direct (offset) loads from the scratch ref; the reshape only
    # merges leading dims (layout-free) and concat pieces are 128-lane aligned.
    taps = []
    for kh in range(3):
        for kw in range(3):
            t = pad_ref[kh:kh + H, kw:kw + W, :]                # (H, W, Cp)
            taps.append(t.reshape(H * W, Cp).astype(jnp.bfloat16))
    patches = jnp.concatenate(taps, axis=-1)                    # (H*W, 9*Cp) bf16

    # ---- single MXU matmul, bf16 operands / f32 accumulation ----------------
    y = jnp.dot(patches, w_ref[...], preferred_element_type=jnp.float32)
    y = y + b

    # ---- InstanceNorm2d (affine, eps=1e-5, biased var), single-pass stats ---
    inv_n = 1.0 / (H * W)
    s = jnp.sum(y, axis=0, keepdims=True)
    ss = jnp.sum(y * y, axis=0, keepdims=True)
    mean = s * inv_n
    var = ss * inv_n - mean * mean                              # biased variance
    y = (y - mean) * lax.rsqrt(var + 1e-5)
    y = y * gamma + beta
    if relu:
        y = jnp.maximum(y, 0.0)
    return y


def _residual_block_kernel(x_ref, w1_ref, b1_ref, g1_ref, be1_ref,
                           w2_ref, b2_ref, g2_ref, be2_ref,
                           out_ref, pad_ref, resid_ref):
    """One grid step = one batch element: conv->IN->ReLU->conv->IN, + residual."""
    _, H, W, C = x_ref.shape
    Cp = pad_ref.shape[-1]

    x = x_ref[0].astype(jnp.float32)                            # (H, W, C)

    # Zero the channel-padded scratches (only needed when C < Cp; also protects
    # against NaN garbage in uninitialized VMEM reaching the zero-weight lanes).
    if C < Cp:
        pad_ref[...] = jnp.zeros(pad_ref.shape, jnp.float32)
        resid_ref[...] = jnp.zeros(resid_ref.shape, jnp.float32)
    resid_ref[:, 0:C] = x.reshape(H * W, C)

    h = _basic_conv3x3(x, w1_ref, b1_ref[...], g1_ref[...], be1_ref[...],
                       pad_ref, relu=True)                      # (H*W, Cp), stays in VMEM
    y = _basic_conv3x3(h.reshape(H, W, Cp), w2_ref, b2_ref[...], g2_ref[...],
                       be2_ref[...], pad_ref, relu=False)       # (H*W, Cp)

    out_ref[0] = (y + resid_ref[...]).astype(out_ref.dtype)     # lane-dense store


def residual_block_pallas(x_nchw, params):
    """ResidualBlock.forward: block(x) + x. Input/output in NCHW (PyTorch layout)."""
    N, C, H, W = x_nchw.shape
    K = 3
    assert params["w1"].shape == (K, K, C, C)
    cp = ((C + 127) // 128) * 128          # lane-dense channel padding

    x = jnp.transpose(x_nchw, (0, 2, 3, 1))                     # NCHW -> NHWC

    def prep(w, b, g, be):
        w = jnp.pad(w, ((0, 0), (0, 0), (0, cp - C), (0, cp - C)))
        return (w.reshape(K * K * cp, cp).astype(jnp.bfloat16),      # im2col layout
                jnp.pad(b, (0, cp - C)).reshape(1, cp).astype(jnp.float32),
                jnp.pad(g, (0, cp - C)).reshape(1, cp).astype(jnp.float32),
                jnp.pad(be, (0, cp - C)).reshape(1, cp).astype(jnp.float32))

    w1, b1, g1, be1 = prep(params["w1"], params["b1"], params["g1"], params["be1"])
    w2, b2, g2, be2 = prep(params["w2"], params["b2"], params["g2"], params["be2"])

    # Parameters use constant index maps -> DMA'd once, stay resident in VMEM.
    vec = pl.BlockSpec((1, cp), lambda n: (0, 0))
    wsp = pl.BlockSpec((K * K * cp, cp), lambda n: (0, 0))

    out = pl.pallas_call(
        _residual_block_kernel,
        out_shape=jax.ShapeDtypeStruct((N, H * W, cp), x.dtype),
        grid=(N,),
        in_specs=[pl.BlockSpec((1, H, W, C), lambda n: (n, 0, 0, 0)),
                  wsp, vec, vec, vec,
                  wsp, vec, vec, vec],
        out_specs=pl.BlockSpec((1, H * W, cp), lambda n: (n, 0, 0)),
        scratch_shapes=[pltpu.VMEM((H + K - 1, W + K - 1, cp), jnp.float32),  # pad scratch
                        pltpu.VMEM((H * W, cp), jnp.float32)],                # residual
        compiler_params=pltpu.CompilerParams(
            dimension_semantics=("parallel",),        # v7x: shard batch across both TCs
            vmem_limit_bytes=32 * 1024 * 1024),
    )(x, w1, b1, g1, be1, w2, b2, g2, be2)

    out = out[:, :, :C].reshape(N, H, W, C)                     # drop channel padding
    return jnp.transpose(out, (0, 3, 1, 2))                     # NHWC -> NCHW


# ---------------- pure-JAX reference (for correctness check) ----------------
def _ref_basic_conv(x_nhwc, w, b, gamma, beta, use_relu):
    p = w.shape[0] // 2
    xp = jnp.pad(x_nhwc, ((0, 0), (p, p), (p, p), (0, 0)), mode="reflect")
    y = lax.conv_general_dilated(
        xp, w, window_strides=(1, 1), padding="VALID",
        dimension_numbers=("NHWC", "HWIO", "NHWC")) + b
    mean = jnp.mean(y, axis=(1, 2), keepdims=True)
    var = jnp.mean((y - mean) ** 2, axis=(1, 2), keepdims=True)
    y = (y - mean) * lax.rsqrt(var + 1e-5) * gamma + beta
    if use_relu:
        y = jnp.maximum(y, 0.0)
    return y


def residual_block_ref(x_nchw, params):
    x = jnp.transpose(x_nchw, (0, 2, 3, 1))
    h = _ref_basic_conv(x, params["w1"], params["b1"], params["g1"],
                        params["be1"], True)
    h = _ref_basic_conv(h, params["w2"], params["b2"], params["g2"],
                        params["be2"], False)
    return jnp.transpose(h + x, (0, 3, 1, 2))


if __name__ == "__main__":
    N, C, H, W, K = 2, 4, 16, 16, 3

    key = jax.random.PRNGKey(0)
    k_x, k_w1, k_b1, k_w2, k_b2 = jax.random.split(key, 5)

    # PyTorch-style Conv2d init bound; InstanceNorm affine init gamma=1, beta=0.
    bound = 1.0 / jnp.sqrt(jnp.float32(C * K * K))
    params = {
        "w1": jax.random.uniform(k_w1, (K, K, C, C), jnp.float32, -bound, bound),
        "b1": jax.random.uniform(k_b1, (C,), jnp.float32, -bound, bound),
        "g1": jnp.ones((C,), jnp.float32),
        "be1": jnp.zeros((C,), jnp.float32),
        "w2": jax.random.uniform(k_w2, (K, K, C, C), jnp.float32, -bound, bound),
        "b2": jax.random.uniform(k_b2, (C,), jnp.float32, -bound, bound),
        "g2": jnp.ones((C,), jnp.float32),
        "be2": jnp.zeros((C,), jnp.float32),
    }

    x = jax.random.normal(k_x, (N, C, H, W), jnp.float32)  # NCHW, like PyTorch

    out = jax.block_until_ready(residual_block_pallas(x, params))
    ref = jax.block_until_ready(residual_block_ref(x, params))

    assert out.shape == (N, C, H, W)
    # bf16 MXU operands (f32 accumulation) -> tolerance loosened vs the f32 reference.
    max_err = jnp.max(jnp.abs(out - ref))
    assert jnp.allclose(out, ref, rtol=2e-2, atol=2e-2), f"max abs err {max_err}"

    print("KERNEL_OK")
</pallas_src>

<mosaic_0001>
module attributes {stable_mosaic.version = 11 : i64} {
  func.func @_residual_block_kernel(%arg0: i32, %arg1: memref<1x16x16x4xf32, #tpu.memory_space<vmem>>, %arg2: memref<1152x128xbf16, #tpu.memory_space<vmem>>, %arg3: memref<1x128xf32, #tpu.memory_space<vmem>>, %arg4: memref<1x128xf32, #tpu.memory_space<vmem>>, %arg5: memref<1x128xf32, #tpu.memory_space<vmem>>, %arg6: memref<1152x128xbf16, #tpu.memory_space<vmem>>, %arg7: memref<1x128xf32, #tpu.memory_space<vmem>>, %arg8: memref<1x128xf32, #tpu.memory_space<vmem>>, %arg9: memref<1x128xf32, #tpu.memory_space<vmem>>, %arg10: memref<1x256x128xf32, #tpu.memory_space<vmem>>, %arg11: memref<18x18x128xf32, #tpu.memory_space<vmem>>, %arg12: memref<256x128xf32, #tpu.memory_space<vmem>>) attributes {dimension_semantics = [#tpu.dimension_semantics<parallel>], iteration_bounds = array<i64: 2>, scalar_prefetch = 0 : i64, scratch_operands = 2 : i64, tpu.core_type = #tpu.core_type<tc>, window_params = [{transform_indices = @transform_0, window_bounds = array<i64: 1, 16, 16, 4>}, {pipeline_mode = #tpu.pipeline_mode<synchronous>, transform_indices = @transform_1, window_bounds = array<i64: 1152, 128>}, {pipeline_mode = #tpu.pipeline_mode<synchronous>, transform_indices = @transform_2, window_bounds = array<i64: 1, 128>}, {pipeline_mode = #tpu.pipeline_mode<synchronous>, transform_indices = @transform_3, window_bounds = array<i64: 1, 128>}, {pipeline_mode = #tpu.pipeline_mode<synchronous>, transform_indices = @transform_4, window_bounds = array<i64: 1, 128>}, {pipeline_mode = #tpu.pipeline_mode<synchronous>, transform_indices = @transform_5, window_bounds = array<i64: 1152, 128>}, {pipeline_mode = #tpu.pipeline_mode<synchronous>, transform_indices = @transform_6, window_bounds = array<i64: 1, 128>}, {pipeline_mode = #tpu.pipeline_mode<synchronous>, transform_indices = @transform_7, window_bounds = array<i64: 1, 128>}, {pipeline_mode = #tpu.pipeline_mode<synchronous>, transform_indices = @transform_8, window_bounds = array<i64: 1, 128>}, {transform_indices = @transform_9, window_bounds = array<i64: 1, 256, 128>}]} {
    %c0 = arith.constant 0 : index
    %c0_0 = arith.constant 0 : index
    %c0_1 = arith.constant 0 : index
    %c0_2 = arith.constant 0 : index
    %0 = vector.load %arg1[%c0, %c0_0, %c0_1, %c0_2] : memref<1x16x16x4xf32, #tpu.memory_space<vmem>>, vector<1x16x16x4xf32>
    %1 = vector.shape_cast %0 : vector<1x16x16x4xf32> to vector<16x16x4xf32>
    %cst = arith.constant 0.000000e+00 : f32
    %2 = vector.broadcast %cst : f32 to vector<18x18x128xf32>
    %c0_3 = arith.constant 0 : index
    %c0_4 = arith.constant 0 : index
    %c0_5 = arith.constant 0 : index
    %3 = vector.load %arg11[%c0_3, %c0_4, %c0_5] : memref<18x18x128xf32, #tpu.memory_space<vmem>>, vector<18x18x128xf32>
    tpu.vector_store %arg11[%c0_3, %c0_4, %c0_5], %2 {strides = array<i32>} : memref<18x18x128xf32, #tpu.memory_space<vmem>>, vector<18x18x128xf32>,
    %cst_6 = arith.constant 0.000000e+00 : f32
    %4 = vector.broadcast %cst_6 : f32 to vector<256x128xf32>
    %c0_7 = arith.constant 0 : index
    %c0_8 = arith.constant 0 : index
    %5 = vector.load %arg12[%c0_7, %c0_8] : memref<256x128xf32, #tpu.memory_space<vmem>>, vector<256x128xf32>
    tpu.vector_store %arg12[%c0_7, %c0_8], %4 {strides = array<i32>} : memref<256x128xf32, #tpu.memory_space<vmem>>, vector<256x128xf32>,
    %6 = vector.shape_cast %1 : vector<16x16x4xf32> to vector<256x4xf32>
    %c0_9 = arith.constant 0 : index
    %c0_10 = arith.constant 0 : index
    %7 = vector.load %arg12[%c0_9, %c0_10] : memref<256x128xf32, #tpu.memory_space<vmem>>, vector<256x4xf32>
    tpu.vector_store %arg12[%c0_9, %c0_10], %6 {strides = array<i32>} : memref<256x128xf32, #tpu.memory_space<vmem>>, vector<256x4xf32>,
    %c0_11 = arith.constant 0 : index
    %c0_12 = arith.constant 0 : index
    %8 = vector.load %arg3[%c0_11, %c0_12] : memref<1x128xf32, #tpu.memory_space<vmem>>, vector<1x128xf32>
    %c0_13 = arith.constant 0 : index
    %c0_14 = arith.constant 0 : index
    %9 = vector.load %arg4[%c0_13, %c0_14] : memref<1x128xf32, #tpu.memory_space<vmem>>, vector<1x128xf32>
    %c0_15 = arith.constant 0 : index
    %c0_16 = arith.constant 0 : index
    %10 = vector.load %arg5[%c0_15, %c0_16] : memref<1x128xf32, #tpu.memory_space<vmem>>, vector<1x128xf32>
    %c1 = arith.constant 1 : index
    %c1_17 = arith.constant 1 : index
    %c0_18 = arith.constant 0 : index
    %11 = vector.load %arg11[%c1, %c1_17, %c0_18] : memref<18x18x128xf32, #tpu.memory_space<vmem>>, vector<16x16x4xf32>
    tpu.vector_store %arg11[%c1, %c1_17, %c0_18], %1 {strides = array<i32>} : memref<18x18x128xf32, #tpu.memory_space<vmem>>, vector<16x16x4xf32>,
    %12 = vector.extract_strided_slice %1 {offsets = [1, 0, 0], sizes = [1, 16, 4], strides = [1, 1, 1]} : vector<16x16x4xf32> to vector<1x16x4xf32>
    %c0_19 = arith.constant 0 : index
    %c1_20 = arith.constant 1 : index
    %c0_21 = arith.constant 0 : index
    %13 = vector.load %arg11[%c0_19, %c1_20, %c0_21] : memref<18x18x128xf32, #tpu.memory_space<vmem>>, vector<1x16x4xf32>
    tpu.vector_store %arg11[%c0_19, %c1_20, %c0_21], %12 {strides = array<i32>} : memref<18x18x128xf32, #tpu.memory_space<vmem>>, vector<1x16x4xf32>,
    %14 = vector.extract_strided_slice %1 {offsets = [14, 0, 0], sizes = [1, 16, 4], strides = [1, 1, 1]} : vector<16x16x4xf32> to vector<1x16x4xf32>
    %c17 = arith.constant 17 : index
    %c1_22 = arith.constant 1 : index
    %c0_23 = arith.constant 0 : index
    %15 = vector.load %arg11[%c17, %c1_22, %c0_23] : memref<18x18x128xf32, #tpu.memory_space<vmem>>, vector<1x16x4xf32>
    tpu.vector_store %arg11[%c17, %c1_22, %c0_23], %14 {strides = array<i32>} : memref<18x18x128xf32, #tpu.memory_space<vmem>>, vector<1x16x4xf32>,
    %c0_24 = arith.constant 0 : index
    %c2 = arith.constant 2 : index
    %c0_25 = arith.constant 0 : index
    %16 = vector.load %arg11[%c0_24, %c2, %c0_25] : memref<18x18x128xf32, #tpu.memory_space<vmem>>, vector<18x1x128xf32>
    %c0_26 = arith.constant 0 : index
    %c0_27 = arith.constant 0 : index
    %c0_28 = arith.constant 0 : index
    %17 = vector.load %arg11[%c0_26, %c0_27, %c0_28] : memref<18x18x128xf32, #tpu.memory_space<vmem>>, vector<18x1x128xf32>
    tpu.vector_store %arg11[%c0_26, %c0_27, %c0_28], %16 {strides = array<i32>} : memref<18x18x128xf32, #tpu.memory_space<vmem>>, vector<18x1x128xf32>,
    %c0_29 = arith.constant 0 : index
    %c15 = arith.constant 15 : index
    %c0_30 = arith.constant 0 : index
    %18 = vector.load %arg11[%c0_29, %c15, %c0_30] : memref<18x18x128xf32, #tpu.memory_space<vmem>>, vector<18x1x128xf32>
    %c0_31 = arith.constant 0 : index
    %c17_32 = arith.constant 17 : index
    %c0_33 = arith.constant 0 : index
    %19 = vector.load %arg11[%c0_31, %c17_32, %c0_33] : memref<18x18x128xf32, #tpu.memory_space<vmem>>, vector<18x1x128xf32>
    tpu.vector_store %arg11[%c0_31, %c17_32, %c0_33], %18 {strides = array<i32>} : memref<18x18x128xf32, #tpu.memory_space<vmem>>, vector<18x1x128xf32>,
    %c0_34 = arith.constant 0 : index
    %c0_35 = arith.constant 0 : index
    %c0_36 = arith.constant 0 : index
    %20 = vector.load %arg11[%c0_34, %c0_35, %c0_36] : memref<18x18x128xf32, #tpu.memory_space<vmem>>, vector<16x16x128xf32>
    %21 = vector.shape_cast %20 : vector<16x16x128xf32> to vector<256x128xf32>
    %22 = arith.truncf %21 : vector<256x128xf32> to vector<256x128xbf16>
    %c0_37 = arith.constant 0 : index
    %c1_38 = arith.constant 1 : index
    %c0_39 = arith.constant 0 : index
    %23 = vector.load %arg11[%c0_37, %c1_38, %c0_39] : memref<18x18x128xf32, #tpu.memory_space<vmem>>, vector<16x16x128xf32>
    %24 = vector.shape_cast %23 : vector<16x16x128xf32> to vector<256x128xf32>
    %25 = arith.truncf %24 : vector<256x128xf32> to vector<256x128xbf16>
    %c0_40 = arith.constant 0 : index
    %c2_41 = arith.constant 2 : index
    %c0_42 = arith.constant 0 : index
    %26 = vector.load %arg11[%c0_40, %c2_41, %c0_42] : memref<18x18x128xf32, #tpu.memory_space<vmem>>, vector<16x16x128xf32>
    %27 = vector.shape_cast %26 : vector<16x16x128xf32> to vector<256x128xf32>
    %28 = arith.truncf %27 : vector<256x128xf32> to vector<256x128xbf16>
    %c1_43 = arith.constant 1 : index
    %c0_44 = arith.constant 0 : index
    %c0_45 = arith.constant 0 : index
    %29 = vector.load %arg11[%c1_43, %c0_44, %c0_45] : memref<18x18x128xf32, #tpu.memory_space<vmem>>, vector<16x16x128xf32>
    %30 = vector.shape_cast %29 : vector<16x16x128xf32> to vector<256x128xf32>
    %31 = arith.truncf %30 : vector<256x128xf32> to vector<256x128xbf16>
    %c1_46 = arith.constant 1 : index
    %c1_47 = arith.constant 1 : index
    %c0_48 = arith.constant 0 : index
    %32 = vector.load %arg11[%c1_46, %c1_47, %c0_48] : memref<18x18x128xf32, #tpu.memory_space<vmem>>, vector<16x16x128xf32>
    %33 = vector.shape_cast %32 : vector<16x16x128xf32> to vector<256x128xf32>
    %34 = arith.truncf %33 : vector<256x128xf32> to vector<256x128xbf16>
    %c1_49 = arith.constant 1 : index
    %c2_50 = arith.constant 2 : index
    %c0_51 = arith.constant 0 : index
    %35 = vector.load %arg11[%c1_49, %c2_50, %c0_51] : memref<18x18x128xf32, #tpu.memory_space<vmem>>, vector<16x16x128xf32>
    %36 = vector.shape_cast %35 : vector<16x16x128xf32> to vector<256x128xf32>
    %37 = arith.truncf %36 : vector<256x128xf32> to vector<256x128xbf16>
    %c2_52 = arith.constant 2 : index
    %c0_53 = arith.constant 0 : index
    %c0_54 = arith.constant 0 : index
    %38 = vector.load %arg11[%c2_52, %c0_53, %c0_54] : memref<18x18x128xf32, #tpu.memory_space<vmem>>, vector<16x16x128xf32>
    %39 = vector.shape_cast %38 : vector<16x16x128xf32> to vector<256x128xf32>
    %40 = arith.truncf %39 : vector<256x128xf32> to vector<256x128xbf16>
    %c2_55 = arith.constant 2 : index
    %c1_56 = arith.constant 1 : index
    %c0_57 = arith.constant 0 : index
    %41 = vector.load %arg11[%c2_55, %c1_56, %c0_57] : memref<18x18x128xf32, #tpu.memory_space<vmem>>, vector<16x16x128xf32>
    %42 = vector.shape_cast %41 : vector<16x16x128xf32> to vector<256x128xf32>
    %43 = arith.truncf %42 : vector<256x128xf32> to vector<256x128xbf16>
    %c2_58 = arith.constant 2 : index
    %c2_59 = arith.constant 2 : index
    %c0_60 = arith.constant 0 : index
    %44 = vector.load %arg11[%c2_58, %c2_59, %c0_60] : memref<18x18x128xf32, #tpu.memory_space<vmem>>, vector<16x16x128xf32>
    %45 = vector.shape_cast %44 : vector<16x16x128xf32> to vector<256x128xf32>
    %46 = arith.truncf %45 : vector<256x128xf32> to vector<256x128xbf16>
    %47 = tpu.concatenate %22, %25, %28, %31, %34, %37, %40, %43, %46 in 1 : vector<256x128xbf16>, vector<256x128xbf16>, vector<256x128xbf16>, vector<256x128xbf16>, vector<256x128xbf16>, vector<256x128xbf16>, vector<256x128xbf16>, vector<256x128xbf16>, vector<256x128xbf16> -> vector<256x1152xbf16>
    %c0_61 = arith.constant 0 : index
    %c0_62 = arith.constant 0 : index
    %48 = vector.load %arg2[%c0_61, %c0_62] : memref<1152x128xbf16, #tpu.memory_space<vmem>>, vector<1152x128xbf16>
    %cst_63 = arith.constant dense<0.000000e+00> : vector<256x128xf32>
    %49 = tpu.matmul %47, %48, %cst_63 {dimension_numbers = #tpu.dot_dimension_numbers<[1], [0], [0], [1], [0, 0, 1, 1], [], []>} : vector<256x1152xbf16>, vector<1152x128xbf16>, vector<256x128xf32> -> vector<256x128xf32>
    %50 = vector.broadcast %8 : vector<1x128xf32> to vector<256x128xf32>
    %51 = arith.addf %49, %50 : vector<256x128xf32>
    %cst_64 = arith.constant dense<0.000000e+00> : vector<128xf32>
    %52 = vector.multi_reduction <add>, %51, %cst_64 [0] : vector<256x128xf32> to vector<128xf32>
    %53 = vector.shape_cast %52 : vector<128xf32> to vector<1x128xf32>
    %54 = arith.mulf %51, %51 : vector<256x128xf32>
    %cst_65 = arith.constant dense<0.000000e+00> : vector<128xf32>
    %55 = vector.multi_reduction <add>, %54, %cst_65 [0] : vector<256x128xf32> to vector<128xf32>
    %56 = vector.shape_cast %55 : vector<128xf32> to vector<1x128xf32>
    %cst_66 = arith.constant 3.906250e-03 : f32
    %57 = vector.broadcast %cst_66 : f32 to vector<1x128xf32>
    %58 = arith.mulf %53, %57 : vector<1x128xf32>
    %cst_67 = arith.constant 3.906250e-03 : f32
    %59 = vector.broadcast %cst_67 : f32 to vector<1x128xf32>
    %60 = arith.mulf %56, %59 : vector<1x128xf32>
    %61 = arith.mulf %58, %58 : vector<1x128xf32>
    %62 = arith.subf %60, %61 : vector<1x128xf32>
    %63 = vector.broadcast %58 : vector<1x128xf32> to vector<256x128xf32>
    %64 = arith.subf %51, %63 : vector<256x128xf32>
    %cst_68 = arith.constant 9.99999974E-6 : f32
    %65 = vector.broadcast %cst_68 : f32 to vector<1x128xf32>
    %66 = arith.addf %62, %65 : vector<1x128xf32>
    %67 = math.rsqrt %66 : vector<1x128xf32>
    %68 = vector.broadcast %67 : vector<1x128xf32> to vector<256x128xf32>
    %69 = arith.mulf %64, %68 : vector<256x128xf32>
    %70 = vector.broadcast %9 : vector<1x128xf32> to vector<256x128xf32>
    %71 = arith.mulf %69, %70 : vector<256x128xf32>
    %72 = vector.broadcast %10 : vector<1x128xf32> to vector<256x128xf32>
    %73 = arith.addf %71, %72 : vector<256x128xf32>
    %cst_69 = arith.constant 0.000000e+00 : f32
    %74 = vector.broadcast %cst_69 : f32 to vector<256x128xf32>
    %75 = arith.maximumf %73, %74 : vector<256x128xf32>
    %76 = vector.shape_cast %75 : vector<256x128xf32> to vector<16x16x128xf32>
    %c0_70 = arith.constant 0 : index
    %c0_71 = arith.constant 0 : index
    %77 = vector.load %arg7[%c0_70, %c0_71] : memref<1x128xf32, #tpu.memory_space<vmem>>, vector<1x128xf32>
    %c0_72 = arith.constant 0 : index
    %c0_73 = arith.constant 0 : index
    %78 = vector.load %arg8[%c0_72, %c0_73] : memref<1x128xf32, #tpu.memory_space<vmem>>, vector<1x128xf32>
    %c0_74 = arith.constant 0 : index
    %c0_75 = arith.constant 0 : index
    %79 = vector.load %arg9[%c0_74, %c0_75] : memref<1x128xf32, #tpu.memory_space<vmem>>, vector<1x128xf32>
    %c1_76 = arith.constant 1 : index
    %c1_77 = arith.constant 1 : index
    %c0_78 = arith.constant 0 : index
    %80 = vector.load %arg11[%c1_76, %c1_77, %c0_78] : memref<18x18x128xf32, #tpu.memory_space<vmem>>, vector<16x16x128xf32>
    tpu.vector_store %arg11[%c1_76, %c1_77, %c0_78], %76 {strides = array<i32>} : memref<18x18x128xf32, #tpu.memory_space<vmem>>, vector<16x16x128xf32>,
    %81 = vector.extract_strided_slice %76 {offsets = [1, 0, 0], sizes = [1, 16, 128], strides = [1, 1, 1]} : vector<16x16x128xf32> to vector<1x16x128xf32>
    %c0_79 = arith.constant 0 : index
    %c1_80 = arith.constant 1 : index
    %c0_81 = arith.constant 0 : index
    %82 = vector.load %arg11[%c0_79, %c1_80, %c0_81] : memref<18x18x128xf32, #tpu.memory_space<vmem>>, vector<1x16x128xf32>
    tpu.vector_store %arg11[%c0_79, %c1_80, %c0_81], %81 {strides = array<i32>} : memref<18x18x128xf32, #tpu.memory_space<vmem>>, vector<1x16x128xf32>,
    %83 = vector.extract_strided_slice %76 {offsets = [14, 0, 0], sizes = [1, 16, 128], strides = [1, 1, 1]} : vector<16x16x128xf32> to vector<1x16x128xf32>
    %c17_82 = arith.constant 17 : index
    %c1_83 = arith.constant 1 : index
    %c0_84 = arith.constant 0 : index
    %84 = vector.load %arg11[%c17_82, %c1_83, %c0_84] : memref<18x18x128xf32, #tpu.memory_space<vmem>>, vector<1x16x128xf32>
    tpu.vector_store %arg11[%c17_82, %c1_83, %c0_84], %83 {strides = array<i32>} : memref<18x18x128xf32, #tpu.memory_space<vmem>>, vector<1x16x128xf32>,
    %c0_85 = arith.constant 0 : index
    %c2_86 = arith.constant 2 : index
    %c0_87 = arith.constant 0 : index
    %85 = vector.load %arg11[%c0_85, %c2_86, %c0_87] : memref<18x18x128xf32, #tpu.memory_space<vmem>>, vector<18x1x128xf32>
    %c0_88 = arith.constant 0 : index
    %c0_89 = arith.constant 0 : index
    %c0_90 = arith.constant 0 : index
    %86 = vector.load %arg11[%c0_88, %c0_89, %c0_90] : memref<18x18x128xf32, #tpu.memory_space<vmem>>, vector<18x1x128xf32>
    tpu.vector_store %arg11[%c0_88, %c0_89, %c0_90], %85 {strides = array<i32>} : memref<18x18x128xf32, #tpu.memory_space<vmem>>, vector<18x1x128xf32>,
    %c0_91 = arith.constant 0 : index
    %c15_92 = arith.constant 15 : index
    %c0_93 = arith.constant 0 : index
    %87 = vector.load %arg11[%c0_91, %c15_92, %c0_93] : memref<18x18x128xf32, #tpu.memory_space<vmem>>, vector<18x1x128xf32>
    %c0_94 = arith.constant 0 : index
    %c17_95 = arith.constant 17 : index
    %c0_96 = arith.constant 0 : index
    %88 = vector.load %arg11[%c0_94, %c17_95, %c0_96] : memref<18x18x128xf32, #tpu.memory_space<vmem>>, vector<18x1x128xf32>
    tpu.vector_store %arg11[%c0_94, %c17_95, %c0_96], %87 {strides = array<i32>} : memref<18x18x128xf32, #tpu.memory_space<vmem>>, vector<18x1x128xf32>,
    %c0_97 = arith.constant 0 : index
    %c0_98 = arith.constant 0 : index
    %c0_99 = arith.constant 0 : index
    %89 = vector.load %arg11[%c0_97, %c0_98, %c0_99] : memref<18x18x128xf32, #tpu.memory_space<vmem>>, vector<16x16x128xf32>
    %90 = vector.shape_cast %89 : vector<16x16x128xf32> to vector<256x128xf32>
    %91 = arith.truncf %90 : vector<256x128xf32> to vector<256x128xbf16>
    %c0_100 = arith.constant 0 : index
    %c1_101 = arith.constant 1 : index
    %c0_102 = arith.constant 0 : index
    %92 = vector.load %arg11[%c0_100, %c1_101, %c0_102] : memref<18x18x128xf32, #tpu.memory_space<vmem>>, vector<16x16x128xf32>
    %93 = vector.shape_cast %92 : vector<16x16x128xf32> to vector<256x128xf32>
    %94 = arith.truncf %93 : vector<256x128xf32> to vector<256x128xbf16>
    %c0_103 = arith.constant 0 : index
    %c2_104 = arith.constant 2 : index
    %c0_105 = arith.constant 0 : index
    %95 = vector.load %arg11[%c0_103, %c2_104, %c0_105] : memref<18x18x128xf32, #tpu.memory_space<vmem>>, vector<16x16x128xf32>
    %96 = vector.shape_cast %95 : vector<16x16x128xf32> to vector<256x128xf32>
    %97 = arith.truncf %96 : vector<256x128xf32> to vector<256x128xbf16>
    %c1_106 = arith.constant 1 : index
    %c0_107 = arith.constant 0 : index
    %c0_108 = arith.constant 0 : index
    %98 = vector.load %arg11[%c1_106, %c0_107, %c0_108] : memref<18x18x128xf32, #tpu.memory_space<vmem>>, vector<16x16x128xf32>
    %99 = vector.shape_cast %98 : vector<16x16x128xf32> to vector<256x128xf32>
    %100 = arith.truncf %99 : vector<256x128xf32> to vector<256x128xbf16>
    %c1_109 = arith.constant 1 : index
    %c1_110 = arith.constant 1 : index
    %c0_111 = arith.constant 0 : index
    %101 = vector.load %arg11[%c1_109, %c1_110, %c0_111] : memref<18x18x128xf32, #tpu.memory_space<vmem>>, vector<16x16x128xf32>
    %102 = vector.shape_cast %101 : vector<16x16x128xf32> to vector<256x128xf32>
    %103 = arith.truncf %102 : vector<256x128xf32> to vector<256x128xbf16>
    %c1_112 = arith.constant 1 : index
    %c2_113 = arith.constant 2 : index
    %c0_114 = arith.constant 0 : index
    %104 = vector.load %arg11[%c1_112, %c2_113, %c0_114] : memref<18x18x128xf32, #tpu.memory_space<vmem>>, vector<16x16x128xf32>
    %105 = vector.shape_cast %104 : vector<16x16x128xf32> to vector<256x128xf32>
    %106 = arith.truncf %105 : vector<256x128xf32> to vector<256x128xbf16>
    %c2_115 = arith.constant 2 : index
    %c0_116 = arith.constant 0 : index
    %c0_117 = arith.constant 0 : index
    %107 = vector.load %arg11[%c2_115, %c0_116, %c0_117] : memref<18x18x128xf32, #tpu.memory_space<vmem>>, vector<16x16x128xf32>
    %108 = vector.shape_cast %107 : vector<16x16x128xf32> to vector<256x128xf32>
    %109 = arith.truncf %108 : vector<256x128xf32> to vector<256x128xbf16>
    %c2_118 = arith.constant 2 : index
    %c1_119 = arith.constant 1 : index
    %c0_120 = arith.constant 0 : index
    %110 = vector.load %arg11[%c2_118, %c1_119, %c0_120] : memref<18x18x128xf32, #tpu.memory_space<vmem>>, vector<16x16x128xf32>
    %111 = vector.shape_cast %110 : vector<16x16x128xf32> to vector<256x128xf32>
    %112 = arith.truncf %111 : vector<256x128xf32> to vector<256x128xbf16>
    %c2_121 = arith.constant 2 : index
    %c2_122 = arith.constant 2 : index
    %c0_123 = arith.constant 0 : index
    %113 = vector.load %arg11[%c2_121, %c2_122, %c0_123] : memref<18x18x128xf32, #tpu.memory_space<vmem>>, vector<16x16x128xf32>
    %114 = vector.shape_cast %113 : vector<16x16x128xf32> to vector<256x128xf32>
    %115 = arith.truncf %114 : vector<256x128xf32> to vector<256x128xbf16>
    %116 = tpu.concatenate %91, %94, %97, %100, %103, %106, %109, %112, %115 in 1 : vector<256x128xbf16>, vector<256x128xbf16>, vector<256x128xbf16>, vector<256x128xbf16>, vector<256x128xbf16>, vector<256x128xbf16>, vector<256x128xbf16>, vector<256x128xbf16>, vector<256x128xbf16> -> vector<256x1152xbf16>
    %c0_124 = arith.constant 0 : index
    %c0_125 = arith.constant 0 : index
    %117 = vector.load %arg6[%c0_124, %c0_125] : memref<1152x128xbf16, #tpu.memory_space<vmem>>, vector<1152x128xbf16>
    %cst_126 = arith.constant dense<0.000000e+00> : vector<256x128xf32>
    %118 = tpu.matmul %116, %117, %cst_126 {dimension_numbers = #tpu.dot_dimension_numbers<[1], [0], [0], [1], [0, 0, 1, 1], [], []>} : vector<256x1152xbf16>, vector<1152x128xbf16>, vector<256x128xf32> -> vector<256x128xf32>
    %119 = vector.broadcast %77 : vector<1x128xf32> to vector<256x128xf32>
    %120 = arith.addf %118, %119 : vector<256x128xf32>
    %cst_127 = arith.constant dense<0.000000e+00> : vector<128xf32>
    %121 = vector.multi_reduction <add>, %120, %cst_127 [0] : vector<256x128xf32> to vector<128xf32>
    %122 = vector.shape_cast %121 : vector<128xf32> to vector<1x128xf32>
    %123 = arith.mulf %120, %120 : vector<256x128xf32>
    %cst_128 = arith.constant dense<0.000000e+00> : vector<128xf32>
    %124 = vector.multi_reduction <add>, %123, %cst_128 [0] : vector<256x128xf32> to vector<128xf32>
    %125 = vector.shape_cast %124 : vector<128xf32> to vector<1x128xf32>
    %cst_129 = arith.constant 3.906250e-03 : f32
    %126 = vector.broadcast %cst_129 : f32 to vector<1x128xf32>
    %127 = arith.mulf %122, %126 : vector<1x128xf32>
    %cst_130 = arith.constant 3.906250e-03 : f32
    %128 = vector.broadcast %cst_130 : f32 to vector<1x128xf32>
    %129 = arith.mulf %125, %128 : vector<1x128xf32>
    %130 = arith.mulf %127, %127 : vector<1x128xf32>
    %131 = arith.subf %129, %130 : vector<1x128xf32>
    %132 = vector.broadcast %127 : vector<1x128xf32> to vector<256x128xf32>
    %133 = arith.subf %120, %132 : vector<256x128xf32>
    %cst_131 = arith.constant 9.99999974E-6 : f32
    %134 = vector.broadcast %cst_131 : f32 to vector<1x128xf32>
    %135 = arith.addf %131, %134 : vector<1x128xf32>
    %136 = math.rsqrt %135 : vector<1x128xf32>
    %137 = vector.broadcast %136 : vector<1x128xf32> to vector<256x128xf32>
    %138 = arith.mulf %133, %137 : vector<256x128xf32>
    %139 = vector.broadcast %78 : vector<1x128xf32> to vector<256x128xf32>
    %140 = arith.mulf %138, %139 : vector<256x128xf32>
    %141 = vector.broadcast %79 : vector<1x128xf32> to vector<256x128xf32>
    %142 = arith.addf %140, %141 : vector<256x128xf32>
    %c0_132 = arith.constant 0 : index
    %c0_133 = arith.constant 0 : index
    %143 = vector.load %arg12[%c0_132, %c0_133] : memref<256x128xf32, #tpu.memory_space<vmem>>, vector<256x128xf32>
    %144 = arith.addf %142, %143 : vector<256x128xf32>
    %c0_134 = arith.constant 0 : index
    %c0_135 = arith.constant 0 : index
    %c0_136 = arith.constant 0 : index
    %145 = vector.load %arg10[%c0_134, %c0_135, %c0_136] : memref<1x256x128xf32, #tpu.memory_space<vmem>>, vector<1x256x128xf32>
    %146 = vector.shape_cast %145 : vector<1x256x128xf32> to vector<256x128xf32>
    %147 = vector.shape_cast %144 : vector<256x128xf32> to vector<1x256x128xf32>
    tpu.vector_store %arg10[%c0_134, %c0_135, %c0_136], %147 {strides = array<i32>} : memref<1x256x128xf32, #tpu.memory_space<vmem>>, vector<1x256x128xf32>,
    return
  }
  func.func @transform_0(%arg0: i32) -> (i32, i32, i32, i32) {
    %c0_i32 = arith.constant 0 : i32
    %c0_i32_0 = arith.constant 0 : i32
    %c0_i32_1 = arith.constant 0 : i32
    %c0_i32_2 = arith.constant 0 : i32
    return %arg0, %c0_i32, %c0_i32_0, %c0_i32_1 : i32, i32, i32, i32
  }
  func.func @transform_1(%arg0: i32) -> (i32, i32) {
    %c0_i32 = arith.constant 0 : i32
    %c0_i32_0 = arith.constant 0 : i32
    %c0_i32_1 = arith.constant 0 : i32
    return %c0_i32, %c0_i32_0 : i32, i32
  }
  func.func @transform_2(%arg0: i32) -> (i32, i32) {
    %c0_i32 = arith.constant 0 : i32
    %c0_i32_0 = arith.constant 0 : i32
    %c0_i32_1 = arith.constant 0 : i32
    return %c0_i32, %c0_i32_0 : i32, i32
  }
  func.func @transform_3(%arg0: i32) -> (i32, i32) {
    %c0_i32 = arith.constant 0 : i32
    %c0_i32_0 = arith.constant 0 : i32
    %c0_i32_1 = arith.constant 0 : i32
    return %c0_i32, %c0_i32_0 : i32, i32
  }
  func.func @transform_4(%arg0: i32) -> (i32, i32) {
    %c0_i32 = arith.constant 0 : i32
    %c0_i32_0 = arith.constant 0 : i32
    %c0_i32_1 = arith.constant 0 : i32
    return %c0_i32, %c0_i32_0 : i32, i32
  }
  func.func @transform_5(%arg0: i32) -> (i32, i32) {
    %c0_i32 = arith.constant 0 : i32
    %c0_i32_0 = arith.constant 0 : i32
    %c0_i32_1 = arith.constant 0 : i32
    return %c0_i32, %c0_i32_0 : i32, i32
  }
  func.func @transform_6(%arg0: i32) -> (i32, i32) {
    %c0_i32 = arith.constant 0 : i32
    %c0_i32_0 = arith.constant 0 : i32
    %c0_i32_1 = arith.constant 0 : i32
    return %c0_i32, %c0_i32_0 : i32, i32
  }
  func.func @transform_7(%arg0: i32) -> (i32, i32) {
    %c0_i32 = arith.constant 0 : i32
    %c0_i32_0 = arith.constant 0 : i32
    %c0_i32_1 = arith.constant 0 : i32
    return %c0_i32, %c0_i32_0 : i32, i32
  }
  func.func @transform_8(%arg0: i32) -> (i32, i32) {
    %c0_i32 = arith.constant 0 : i32
    %c0_i32_0 = arith.constant 0 : i32
    %c0_i32_1 = arith.constant 0 : i32
    return %c0_i32, %c0_i32_0 : i32, i32
  }
  func.func @transform_9(%arg0: i32) -> (i32, i32, i32) {
    %c0_i32 = arith.constant 0 : i32
    %c0_i32_0 = arith.constant 0 : i32
    %c0_i32_1 = arith.constant 0 : i32
    return %arg0, %c0_i32, %c0_i32_0 : i32, i32, i32
  }
}

</mosaic_0001>

<llo_original>
// kernel: tpu_custom_call.1
$region0: #{tpu_custom_call.1}
  #allocation0 [shape = 'u32[]', space=smem, size = 0x4, offset = 0x4, fixed_abs, tag = 'smem constant byte address 0x4 - core index']
  #allocation1 [shape = 'u32[144,128]{1,0:T(1,128)}', space=vmem, size = 0x12000, scoped, tag = 'internal scratch']
  #allocation2 [shape = 'f32[18,18,128]{2,1,0:T(8,128)}', space=vmem, size = 0x36000, scoped, tag = 'scratch operand']
  #allocation3 [shape = 'f32[256,128]{1,0:T(8,128)}', space=vmem, size = 0x20000, scoped, tag = 'scratch operand']
  %s0 = inlined_call_operand.vmem [shape: f32[2,16,16,4], index: 0, kind: input, shape index: {}]
  %s1 = inlined_call_operand.vmem [shape: bf16[1152,128], index: 1, kind: input, shape index: {}]
  %s2 = inlined_call_operand.vmem [shape: f32[1,128], index: 2, kind: input, shape index: {}]
  %s3 = inlined_call_operand.vmem [shape: f32[1,128], index: 3, kind: input, shape index: {}]
  %s4 = inlined_call_operand.vmem [shape: f32[1,128], index: 4, kind: input, shape index: {}]
  %s5 = inlined_call_operand.hbm [shape: bf16[1152,128], index: 5, kind: input, shape index: {}]
  %s6 = inlined_call_operand.vmem [shape: f32[1,128], index: 6, kind: input, shape index: {}]
  %s7 = inlined_call_operand.vmem [shape: f32[1,128], index: 7, kind: input, shape index: {}]
  %s8 = inlined_call_operand.vmem [shape: f32[1,128], index: 8, kind: input, shape index: {}]
  %s9 = inlined_call_operand.hbm [shape: f32[2,256,128], index: 9, kind: output, shape index: {}]
  %s10 = sld [smem:[#allocation0]]
  $region73: #{tpu_custom_call.1} parent=0
    _
  %s12 = ssub.s32 1, %s10
  %s13 = scalar_select 0, %s12, %s10
  $region1: #{tpu_custom_call.1} parent=0
    #allocation4 [shape = 'u8[294912]{0}', space=vmem, size = 0x48000, scoped, tag = 'input window, operand 5, single buffered']
    #allocation5 [shape = 's32[2]{0}', space=sflag, size = 0x8, scoped, tag = 'scoped memory for tpu_custom_call.1']
    #allocation6 [shape = 's32[2]{0}', space=sflag, size = 0x8, scoped, tag = 'scoped memory for tpu_custom_call.1']
    #allocation7 [shape = 'u8[262144]{0}', space=vmem, size = 0x40000, scoped, tag = 'output window, operand 0']
    %14 = vsyncpa [#allocation5], 0
    %15 = vsyncpa [#allocation6], 0
    %s16 = scalar_lea.sflag [#allocation6], 1
    %17 = vsyncpa %s16, 0
    loop: start=0, step=1, limit=4
    $region2: #{tpu_custom_call.1} parent=1 // loop_pre_header
      _
    $region3: #{tpu_custom_call.1} parent=1 // loop_header
      %s19 = sphi 0, %s23
      %p20 = scmp.ge.s32.totalorder %s19, 4
      %s29 = sphi 0, %s31
      %s32 = sphi 0, %s29
      %s33 = sphi 0, %s32
      %s49 = sphi 0, %s33
      %s53 = sphi 0, %s53
      %s55 = sphi 0, %s53
      %s56 = sphi 0, %s55
      %s70 = sphi 0, %s56
      %s74 = sphi 0, %s74
      %s76 = sphi 0, %s74
      %s77 = sphi 0, %s76
      %s91 = sphi 0, %s77
      %s95 = sphi 0, %s95
      %s97 = sphi 0, %s95
      %s98 = sphi 0, %s97
      %s112 = sphi 0, %s98
      %s116 = sphi 0, %s116
      %s118 = sphi 0, %s116
      %s119 = sphi 0, %s118
      %s133 = sphi 0, %s119
      %s137 = sphi 0, %s137
      %s139 = sphi 0, %s137
      %s140 = sphi 0, %s139
      %s154 = sphi 0, %s140
      %s158 = sphi 0, %s158
      %s160 = sphi 0, %s158
      %s161 = sphi 0, %s160
      %s175 = sphi 0, %s161
      %s179 = sphi 0, %s179
      %s181 = sphi 0, %s179
      %s182 = sphi 0, %s181
      %s196 = sphi 0, %s182
      %s200 = sphi 0, %s200
      %s202 = sphi 0, %s200
      %s203 = sphi 0, %s202
      %s217 = sphi 0, %s203
      %s223 = sphi 0, %s225
      %s226 = sphi 0, %s223
      %s227 = sphi 0, %s226
      %s243 = sphi 0, %s227
    $region4: #{tpu_custom_call.1} parent=1 // loop_header_branch
      %22 = sbr.rel (%p20) target = $region8
    $region5: #{tpu_custom_call.1} parent=1 // loop_body
      %s24 = ssub.s32 %s19, 1
      %s25 = ssub.s32 %s19, 2
      %s26 = sadd.s32 %s19, 1
      %s27 = ssub.s32 %s19, %s26
      %p28 = scmp.eq.s32.totalorder %s27, 0
      %s30 = sadd.s32 %s29, 1
      %s31 = scalar_select %p28, %s29, %s30
      %p34 = pneg %p28
      %p35 = scmp.eq.s32.totalorder %s19, 1
      %p36 = por %p34, %p35
      %p37 = scmp.ne.s32.totalorder %s29, %s32
      %p38 = scmp.eq.s32.totalorder %s19, 0
      %p39 = por %p37, %p38
      %p40 = scmp.ne.s32.totalorder %s29, %s32
      %p41 = scmp.eq.s32.totalorder %s24, 1
      %p42 = por %p40, %p41
      %p43 = scmp.ne.s32.totalorder %s32, %s33
      %p44 = scmp.eq.s32.totalorder %s24, 0
      %p45 = por %p43, %p44
      %p46 = scmp.ne.s32.totalorder %s32, %s33
      %p47 = scmp.eq.s32.totalorder %s25, 1
      %p48 = por %p46, %p47
      %p50 = scmp.ne.s32.totalorder %s33, %s49
      %p51 = scmp.eq.s32.totalorder %s25, 0
      %p52 = por %p50, %p51
      %s54 = sadd.s32 %s53, 1
      %p57 = scmp.eq.s32.totalorder %s19, 1
      %p58 = scmp.ne.s32.totalorder %s53, %s55
      %p59 = scmp.eq.s32.totalorder %s19, 0
      %p60 = por %p58, %p59
      %p61 = scmp.ne.s32.totalorder %s53, %s55
      %p62 = scmp.eq.s32.totalorder %s24, 1
      %p63 = por %p61, %p62
      %p64 = scmp.ne.s32.totalorder %s55, %s56
      %p65 = scmp.eq.s32.totalorder %s24, 0
      %p66 = por %p64, %p65
      %p67 = scmp.ne.s32.totalorder %s55, %s56
      %p68 = scmp.eq.s32.totalorder %s25, 1
      %p69 = por %p67, %p68
      %p71 = scmp.ne.s32.totalorder %s56, %s70
      %p72 = scmp.eq.s32.totalorder %s25, 0
      %p73 = por %p71, %p72
      %s75 = sadd.s32 %s74, 1
      %p78 = scmp.eq.s32.totalorder %s19, 1
      %p79 = scmp.ne.s32.totalorder %s74, %s76
      %p80 = scmp.eq.s32.totalorder %s19, 0
      %p81 = por %p79, %p80
      %p82 = scmp.ne.s32.totalorder %s74, %s76
      %p83 = scmp.eq.s32.totalorder %s24, 1
      %p84 = por %p82, %p83
      %p85 = scmp.ne.s32.totalorder %s76, %s77
      %p86 = scmp.eq.s32.totalorder %s24, 0
      %p87 = por %p85, %p86
      %p88 = scmp.ne.s32.totalorder %s76, %s77
      %p89 = scmp.eq.s32.totalorder %s25, 1
      %p90 = por %p88, %p89
      %p92 = scmp.ne.s32.totalorder %s77, %s91
      %p93 = scmp.eq.s32.totalorder %s25, 0
      %p94 = por %p92, %p93
      %s96 = sadd.s32 %s95, 1
      %p99 = scmp.eq.s32.totalorder %s19, 1
      %p100 = scmp.ne.s32.totalorder %s95, %s97
      %p101 = scmp.eq.s32.totalorder %s19, 0
      %p102 = por %p100, %p101
      %p103 = scmp.ne.s32.totalorder %s95, %s97
      %p104 = scmp.eq.s32.totalorder %s24, 1
      %p105 = por %p103, %p104
      %p106 = scmp.ne.s32.totalorder %s97, %s98
      %p107 = scmp.eq.s32.totalorder %s24, 0
      %p108 = por %p106, %p107
      %p109 = scmp.ne.s32.totalorder %s97, %s98
      %p110 = scmp.eq.s32.totalorder %s25, 1
      %p111 = por %p109, %p110
      %p113 = scmp.ne.s32.totalorder %s98, %s112
      %p114 = scmp.eq.s32.totalorder %s25, 0
      %p115 = por %p113, %p114
      %s117 = sadd.s32 %s116, 1
      %p120 = scmp.eq.s32.totalorder %s19, 1
      %p121 = scmp.ne.s32.totalorder %s116, %s118
      %p122 = scmp.eq.s32.totalorder %s19, 0
      %p123 = por %p121, %p122
      %p124 = scmp.ne.s32.totalorder %s116, %s118
      %p125 = scmp.eq.s32.totalorder %s24, 1
      %p126 = por %p124, %p125
      %p127 = scmp.ne.s32.totalorder %s118, %s119
      %p128 = scmp.eq.s32.totalorder %s24, 0
      %p129 = por %p127, %p128
      %p130 = scmp.ne.s32.totalorder %s118, %s119
      %p131 = scmp.eq.s32.totalorder %s25, 1
      %p132 = por %p130, %p131
      %p134 = scmp.ne.s32.totalorder %s119, %s133
      %p135 = scmp.eq.s32.totalorder %s25, 0
      %p136 = por %p134, %p135
      %s138 = sadd.s32 %s137, 1
      %p141 = scmp.eq.s32.totalorder %s19, 1
      %p142 = scmp.ne.s32.totalorder %s137, %s139
      %p143 = scmp.eq.s32.totalorder %s19, 0
      %p144 = por %p142, %p143
      %p145 = scmp.ne.s32.totalorder %s137, %s139
      %p146 = scmp.eq.s32.totalorder %s24, 1
      %p147 = por %p145, %p146
      %p148 = scmp.ne.s32.totalorder %s139, %s140
      %p149 = scmp.eq.s32.totalorder %s24, 0
      %p150 = por %p148, %p149
      %p151 = scmp.ne.s32.totalorder %s139, %s140
      %p152 = scmp.eq.s32.totalorder %s25, 1
      %p153 = por %p151, %p152
      %p155 = scmp.ne.s32.totalorder %s140, %s154
      %p156 = scmp.eq.s32.totalorder %s25, 0
      %p157 = por %p155, %p156
      %s159 = sadd.s32 %s158, 1
      %p162 = scmp.eq.s32.totalorder %s19, 1
      %p163 = scmp.ne.s32.totalorder %s158, %s160
      %p164 = scmp.eq.s32.totalorder %s19, 0
      %p165 = por %p163, %p164
      %p166 = scmp.ne.s32.totalorder %s158, %s160
      %p167 = scmp.eq.s32.totalorder %s24, 1
      %p168 = por %p166, %p167
      %p169 = scmp.ne.s32.totalorder %s160, %s161
      %p170 = scmp.eq.s32.totalorder %s24, 0
      %p171 = por %p169, %p170
      %p172 = scmp.ne.s32.totalorder %s160, %s161
      %p173 = scmp.eq.s32.totalorder %s25, 1
      %p174 = por %p172, %p173
      %p176 = scmp.ne.s32.totalorder %s161, %s175
      %p177 = scmp.eq.s32.totalorder %s25, 0
      %p178 = por %p176, %p177
      %s180 = sadd.s32 %s179, 1
      %p183 = scmp.eq.s32.totalorder %s19, 1
      %p184 = scmp.ne.s32.totalorder %s179, %s181
      %p185 = scmp.eq.s32.totalorder %s19, 0
      %p186 = por %p184, %p185
      %p187 = scmp.ne.s32.totalorder %s179, %s181
      %p188 = scmp.eq.s32.totalorder %s24, 1
      %p189 = por %p187, %p188
      %p190 = scmp.ne.s32.totalorder %s181, %s182
      %p191 = scmp.eq.s32.totalorder %s24, 0
      %p192 = por %p190, %p191
      %p193 = scmp.ne.s32.totalorder %s181, %s182
      %p194 = scmp.eq.s32.totalorder %s25, 1
      %p195 = por %p193, %p194
      %p197 = scmp.ne.s32.totalorder %s182, %s196
      %p198 = scmp.eq.s32.totalorder %s25, 0
      %p199 = por %p197, %p198
      %s201 = sadd.s32 %s200, 1
      %p204 = scmp.eq.s32.totalorder %s19, 1
      %p205 = scmp.ne.s32.totalorder %s200, %s202
      %p206 = scmp.eq.s32.totalorder %s19, 0
      %p207 = por %p205, %p206
      %p208 = scmp.ne.s32.totalorder %s200, %s202
      %p209 = scmp.eq.s32.totalorder %s24, 1
      %p210 = por %p208, %p209
      %p211 = scmp.ne.s32.totalorder %s202, %s203
      %p212 = scmp.eq.s32.totalorder %s24, 0
      %p213 = por %p211, %p212
      %p214 = scmp.ne.s32.totalorder %s202, %s203
      %p215 = scmp.eq.s32.totalorder %s25, 1
      %p216 = por %p214, %p215
      %p218 = scmp.ne.s32.totalorder %s203, %s217
      %p219 = scmp.eq.s32.totalorder %s25, 0
      %p220 = por %p218, %p219
      %s221 = ssub.s32 %s19, %s26
      %p222 = scmp.eq.s32.totalorder %s221, 0
      %s224 = sadd.s32 %s223, 1
      %s225 = scalar_select %p222, %s223, %s224
      %p228 = pneg %p222
      %p229 = scmp.eq.s32.totalorder %s19, 1
      %p230 = por %p228, %p229
      %p231 = scmp.ne.s32.totalorder %s223, %s226
      %p232 = scmp.eq.s32.totalorder %s19, 0
      %p233 = por %p231, %p232
      %p234 = scmp.ne.s32.totalorder %s223, %s226
      %p235 = scmp.eq.s32.totalorder %s24, 1
      %p236 = por %p234, %p235
      %p237 = scmp.ne.s32.totalorder %s226, %s227
      %p238 = scmp.eq.s32.totalorder %s24, 0
      %p239 = por %p237, %p238
      %p240 = scmp.ne.s32.totalorder %s226, %s227
      %p241 = scmp.eq.s32.totalorder %s25, 1
      %p242 = por %p240, %p241
      %p244 = scmp.ne.s32.totalorder %s227, %s243
      %p245 = scmp.eq.s32.totalorder %s25, 0
      %p246 = por %p244, %p245
      %p247 = scmp.le.s32.totalorder 1, %s19
      %p248 = scmp.lt.s32.totalorder %s19, 3
      %p249 = pnand %p247, %p248
      %p250 = pneg %p249
      // Predicated region
      $region9: #{tpu_custom_call.1} parent=5 // pred_check
        _
      $region10: #{tpu_custom_call.1} parent=5 // pred_check_branch
        %252 = sbr.rel (%p249) target = $region12
      $region11: #{tpu_custom_call.1} parent=5 // pred_region
        %s253 = ssub.s32 %s19, 1
        // Predicated region
        $region13: #{tpu_custom_call.1} parent=11 // pred_check
          %p254 = pneg %p66
        $region14: #{tpu_custom_call.1} parent=11 // pred_check_branch
          %256 = sbr.rel (%p254) target = $region16
        $region15: #{tpu_custom_call.1} parent=11 // pred_region
          _
        $region16: #{tpu_custom_call.1} parent=11 // pred_fallthru
          _
        // Predicated region
        $region17: #{tpu_custom_call.1} parent=11 // pred_check
          %p257 = pneg %p87
        $region18: #{tpu_custom_call.1} parent=11 // pred_check_branch
          %259 = sbr.rel (%p257) target = $region20
        $region19: #{tpu_custom_call.1} parent=11 // pred_region
          _
        $region20: #{tpu_custom_call.1} parent=11 // pred_fallthru
          _
        // Predicated region
        $region21: #{tpu_custom_call.1} parent=11 // pred_check
          %p260 = pneg %p108
        $region22: #{tpu_custom_call.1} parent=11 // pred_check_branch
          %262 = sbr.rel (%p260) target = $region24
        $region23: #{tpu_custom_call.1} parent=11 // pred_region
          _
        $region24: #{tpu_custom_call.1} parent=11 // pred_fallthru
          _
        // Predicated region
        $region25: #{tpu_custom_call.1} parent=11 // pred_check
          %p263 = pneg %p129
        $region26: #{tpu_custom_call.1} parent=11 // pred_check_branch
          %265 = sbr.rel (%p263) target = $region28
        $region27: #{tpu_custom_call.1} parent=11 // pred_region
          _
        $region28: #{tpu_custom_call.1} parent=11 // pred_fallthru
          _
        // Predicated region
        $region29: #{tpu_custom_call.1} parent=11 // pred_check
          %p266 = pneg %p150
        $region30: #{tpu_custom_call.1} parent=11 // pred_check_branch
          %268 = sbr.rel (%p266) target = $region32
        $region31: #{tpu_custom_call.1} parent=11 // pred_region
          %s270 = ssub.s32 9216, 9216
          %271 = vsyncadd [#allocation5], %s270
          %s272 = sshll.u32 [#allocation4], 4
          %s273 = int_to_ptr.vmem [resolvable:$true] %s272
          %278 = dma.hbm_to_vmem [thread:$0]  %s5, 9216, %s273, [#allocation5], 64, 64, 4
        $region32: #{tpu_custom_call.1} parent=11 // pred_fallthru
          _
        // Predicated region
        $region33: #{tpu_custom_call.1} parent=11 // pred_check
          %p279 = pneg %p171
        $region34: #{tpu_custom_call.1} parent=11 // pred_check_branch
          %281 = sbr.rel (%p279) target = $region36
        $region35: #{tpu_custom_call.1} parent=11 // pred_region
          _
        $region36: #{tpu_custom_call.1} parent=11 // pred_fallthru
          _
        // Predicated region
        $region37: #{tpu_custom_call.1} parent=11 // pred_check
          %p282 = pneg %p192
        $region38: #{tpu_custom_call.1} parent=11 // pred_check_branch
          %284 = sbr.rel (%p282) target = $region40
        $region39: #{tpu_custom_call.1} parent=11 // pred_region
          _
        $region40: #{tpu_custom_call.1} parent=11 // pred_fallthru
          _
        // Predicated region
        $region41: #{tpu_custom_call.1} parent=11 // pred_check
          %p285 = pneg %p213
        $region42: #{tpu_custom_call.1} parent=11 // pred_check_branch
          %287 = sbr.rel (%p285) target = $region44
        $region43: #{tpu_custom_call.1} parent=11 // pred_region
          _
        $region44: #{tpu_custom_call.1} parent=11 // pred_fallthru
          _
      $region12: #{tpu_custom_call.1} parent=5 // pred_fallthru
        _
      %p288 = scmp.lt.s32.totalorder %s19, 2
      // Predicated region
      $region45: #{tpu_custom_call.1} parent=5 // pred_check
        %p289 = pneg %p288
      $region46: #{tpu_custom_call.1} parent=5 // pred_check_branch
        %291 = sbr.rel (%p289) target = $region48
      $region47: #{tpu_custom_call.1} parent=5 // pred_region
        // Predicated region
        $region49: #{tpu_custom_call.1} parent=47 // pred_check
          %p292 = pneg %p39
        $region50: #{tpu_custom_call.1} parent=47 // pred_check_branch
          %294 = sbr.rel (%p292) target = $region52
        $region51: #{tpu_custom_call.1} parent=47 // pred_region
          %p295 = scmp.lt.s32.totalorder %s19, 1
          %s296 = scalar_select %p295, %s19, 1
          %s297 = smul.addr %s296, 32
          %s298 = smul.addr %s297, 8
          %s299 = scalar_lea.vmem %s0, %s298
        $region52: #{tpu_custom_call.1} parent=47 // pred_fallthru
          _
      $region48: #{tpu_custom_call.1} parent=5 // pred_fallthru
        _
      %p300 = scmp.le.s32.totalorder 1, %s19
      %p301 = scmp.lt.s32.totalorder %s19, 3
      %p302 = pnand %p300, %p301
      %p303 = pneg %p302
      // Predicated region
      $region53: #{tpu_custom_call.1} parent=5 // pred_check
        _
      $region54: #{tpu_custom_call.1} parent=5 // pred_check_branch
        %305 = sbr.rel (%p302) target = $region56
      $region55: #{tpu_custom_call.1} parent=5 // pred_region
        %s306 = ssub.s32 %s19, 1
        // Predicated region
        $region57: #{tpu_custom_call.1} parent=55 // pred_check
          %p307 = pneg %p150
        $region58: #{tpu_custom_call.1} parent=55 // pred_check_branch
          %309 = sbr.rel (%p307) target = $region60
        $region59: #{tpu_custom_call.1} parent=55 // pred_region
          %310 = dma.done [#allocation5], 9216
        $region60: #{tpu_custom_call.1} parent=55 // pred_fallthru
          _
        %p311 = scmp.lt.s32.totalorder %s24, 1
        %s312 = scalar_select %p311, %s24, 1
        %s313 = smul.addr %s312, 32
        %s314 = smul.addr %s313, 8
        %s315 = scalar_lea.vmem %s0, %s314
        %p316 = pneg %p45
        %p317 = pneg %p42
        %p318 = pneg %p66
        %p319 = pneg %p63
        %p320 = pneg %p87
        %p321 = pneg %p84
        %p322 = pneg %p108
        %p323 = pneg %p105
        %p324 = pneg %p129
        %p325 = pneg %p126
        %p326 = pneg %p150
        %p327 = pneg %p147
        %p328 = pneg %p171
        %p329 = pneg %p168
        %p330 = pneg %p192
        %p331 = pneg %p189
        %p332 = pneg %p213
        %p333 = pneg %p210
        %p334 = pneg %p239
        %p335 = pneg %p236
        %s336 = sand.u32 %s226, 1
        %s337 = scalar_lea.sflag [#allocation6], %s336
        %s338 = sand.u32 %s226, 1
        %s339 = smul.addr %s338, 256
        %s340 = scalar_lea.vmem [#allocation7], %s339
        %p341 = scmp.lt.s32.totalorder %s24, 1
        %s342 = scalar_select %p341, %s24, 1
        %s343 = smul.addr %s342, 32
        %s344 = smul.addr %s343, 8
        %s345 = scalar_lea.vmem %s0, %s344
        %v347 = vld [vmem:[%s345] sm:$0xff]
        %v348 = vld [vmem:[%s345 + $0x8] sm:$0xff]
        %v349 = vld [vmem:[%s345 + $0x10] sm:$0xff]
        %v350 = vld [vmem:[%s345 + $0x18] sm:$0xff]
        %v351 = vld [vmem:[%s345 + $0x20] sm:$0xff]
        %v352 = vld [vmem:[%s345 + $0x28] sm:$0xff]
        %v353 = vld [vmem:[%s345 + $0x30] sm:$0xff]
        %v354 = vld [vmem:[%s345 + $0x38] sm:$0xff]
        %v355 = vld [vmem:[%s345 + $0x40] sm:$0xff]
        %v356 = vld [vmem:[%s345 + $0x48] sm:$0xff]
        %v357 = vld [vmem:[%s345 + $0x50] sm:$0xff]
        %v358 = vld [vmem:[%s345 + $0x58] sm:$0xff]
        %v359 = vld [vmem:[%s345 + $0x60] sm:$0xff]
        %v360 = vld [vmem:[%s345 + $0x68] sm:$0xff]
        %v361 = vld [vmem:[%s345 + $0x70] sm:$0xff]
        %v362 = vld [vmem:[%s345 + $0x78] sm:$0xff]
        %v363 = vld [vmem:[%s345 + $0x80] sm:$0xff]
        %v364 = vld [vmem:[%s345 + $0x88] sm:$0xff]
        %v365 = vld [vmem:[%s345 + $0x90] sm:$0xff]
        %v366 = vld [vmem:[%s345 + $0x98] sm:$0xff]
        %v367 = vld [vmem:[%s345 + $0xa0] sm:$0xff]
        %v368 = vld [vmem:[%s345 + $0xa8] sm:$0xff]
        %v369 = vld [vmem:[%s345 + $0xb0] sm:$0xff]
        %v370 = vld [vmem:[%s345 + $0xb8] sm:$0xff]
        %v371 = vld [vmem:[%s345 + $0xc0] sm:$0xff]
        %v372 = vld [vmem:[%s345 + $0xc8] sm:$0xff]
        %v373 = vld [vmem:[%s345 + $0xd0] sm:$0xff]
        %v374 = vld [vmem:[%s345 + $0xd8] sm:$0xff]
        %v375 = vld [vmem:[%s345 + $0xe0] sm:$0xff]
        %v376 = vld [vmem:[%s345 + $0xe8] sm:$0xff]
        %v377 = vld [vmem:[%s345 + $0xf0] sm:$0xff]
        %v378 = vld [vmem:[%s345 + $0xf8] sm:$0xff]
        %379 = vst [vmem:[#allocation2] sm:$0xff] 0.0
        %380 = vst [vmem:[#allocation2 + $0x8] sm:$0xff] 0.0
        %381 = vst [vmem:[#allocation2 + $0x10] sm:$0x3] 0.0
        %382 = vst [vmem:[#allocation2 + $0x18] sm:$0xff] 0.0
        %383 = vst [vmem:[#allocation2 + $0x20] sm:$0xff] 0.0
        %384 = vst [vmem:[#allocation2 + $0x28] sm:$0x3] 0.0
        %385 = vst [vmem:[#allocation2 + $0x30] sm:$0xff] 0.0
        %386 = vst [vmem:[#allocation2 + $0x38] sm:$0xff] 0.0
        %387 = vst [vmem:[#allocation2 + $0x40] sm:$0x3] 0.0
        %388 = vst [vmem:[#allocation2 + $0x48] sm:$0xff] 0.0
        %389 = vst [vmem:[#allocation2 + $0x50] sm:$0xff] 0.0
        %390 = vst [vmem:[#allocation2 + $0x58] sm:$0x3] 0.0
        %391 = vst [vmem:[#allocation2 + $0x60] sm:$0xff] 0.0
        %392 = vst [vmem:[#allocation2 + $0x68] sm:$0xff] 0.0
        %393 = vst [vmem:[#allocation2 + $0x70] sm:$0x3] 0.0
        %394 = vst [vmem:[#allocation2 + $0x78] sm:$0xff] 0.0
        %395 = vst [vmem:[#allocation2 + $0x80] sm:$0xff] 0.0
        %396 = vst [vmem:[#allocation2 + $0x88] sm:$0x3] 0.0
        %397 = vst [vmem:[#allocation2 + $0x90] sm:$0xff] 0.0
        %398 = vst [vmem:[#allocation2 + $0x98] sm:$0xff] 0.0
        %399 = vst [vmem:[#allocation2 + $0xa0] sm:$0x3] 0.0
        %400 = vst [vmem:[#allocation2 + $0xa8] sm:$0xff] 0.0
        %401 = vst [vmem:[#allocation2 + $0xb0] sm:$0xff] 0.0
        %402 = vst [vmem:[#allocation2 + $0xb8] sm:$0x3] 0.0
        %403 = vst [vmem:[#allocation2 + $0xc0] sm:$0xff] 0.0
        %404 = vst [vmem:[#allocation2 + $0xc8] sm:$0xff] 0.0
        %405 = vst [vmem:[#allocation2 + $0xd0] sm:$0x3] 0.0
        %406 = vst [vmem:[#allocation2 + $0xd8] sm:$0xff] 0.0
        %407 = vst [vmem:[#allocation2 + $0xe0] sm:$0xff] 0.0
        %408 = vst [vmem:[#allocation2 + $0xe8] sm:$0x3] 0.0
        %409 = vst [vmem:[#allocation2 + $0xf0] sm:$0xff] 0.0
        %410 = vst [vmem:[#allocation2 + $0xf8] sm:$0xff] 0.0
        %411 = vst [vmem:[#allocation2 + $0x100] sm:$0x3] 0.0
        %412 = vst [vmem:[#allocation2 + $0x108] sm:$0xff] 0.0
        %413 = vst [vmem:[#allocation2 + $0x110] sm:$0xff] 0.0
        %414 = vst [vmem:[#allocation2 + $0x118] sm:$0x3] 0.0
        %415 = vst [vmem:[#allocation2 + $0x120] sm:$0xff] 0.0
        %416 = vst [vmem:[#allocation2 + $0x128] sm:$0xff] 0.0
        %417 = vst [vmem:[#allocation2 + $0x130] sm:$0x3] 0.0
        %418 = vst [vmem:[#allocation2 + $0x138] sm:$0xff] 0.0
        %419 = vst [vmem:[#allocation2 + $0x140] sm:$0xff] 0.0
        %420 = vst [vmem:[#allocation2 + $0x148] sm:$0x3] 0.0
        %421 = vst [vmem:[#allocation2 + $0x150] sm:$0xff] 0.0
        %422 = vst [vmem:[#allocation2 + $0x158] sm:$0xff] 0.0
        %423 = vst [vmem:[#allocation2 + $0x160] sm:$0x3] 0.0
        %424 = vst [vmem:[#allocation2 + $0x168] sm:$0xff] 0.0
        %425 = vst [vmem:[#allocation2 + $0x170] sm:$0xff] 0.0
        %426 = vst [vmem:[#allocation2 + $0x178] sm:$0x3] 0.0
        %427 = vst [vmem:[#allocation2 + $0x180] sm:$0xff] 0.0
        %428 = vst [vmem:[#allocation2 + $0x188] sm:$0xff] 0.0
        %429 = vst [vmem:[#allocation2 + $0x190] sm:$0x3] 0.0
        %430 = vst [vmem:[#allocation2 + $0x198] sm:$0xff] 0.0
        %431 = vst [vmem:[#allocation2 + $0x1a0] sm:$0xff] 0.0
        %432 = vst [vmem:[#allocation2 + $0x1a8] sm:$0x3] 0.0
        %433 = vst [vmem:[#allocation3] sm:$0xff] 0.0
        %434 = vst [vmem:[#allocation3 + $0x8] sm:$0xff] 0.0
        %435 = vst [vmem:[#allocation3 + $0x10] sm:$0xff] 0.0
        %436 = vst [vmem:[#allocation3 + $0x18] sm:$0xff] 0.0
        %437 = vst [vmem:[#allocation3 + $0x20] sm:$0xff] 0.0
        %438 = vst [vmem:[#allocation3 + $0x28] sm:$0xff] 0.0
        %439 = vst [vmem:[#allocation3 + $0x30] sm:$0xff] 0.0
        %440 = vst [vmem:[#allocation3 + $0x38] sm:$0xff] 0.0
        %441 = vst [vmem:[#allocation3 + $0x40] sm:$0xff] 0.0
        %442 = vst [vmem:[#allocation3 + $0x48] sm:$0xff] 0.0
        %443 = vst [vmem:[#allocation3 + $0x50] sm:$0xff] 0.0
        %444 = vst [vmem:[#allocation3 + $0x58] sm:$0xff] 0.0
        %445 = vst [vmem:[#allocation3 + $0x60] sm:$0xff] 0.0
        %446 = vst [vmem:[#allocation3 + $0x68] sm:$0xff] 0.0
        %447 = vst [vmem:[#allocation3 + $0x70] sm:$0xff] 0.0
        %448 = vst [vmem:[#allocation3 + $0x78] sm:$0xff] 0.0
        %449 = vst [vmem:[#allocation3 + $0x80] sm:$0xff] 0.0
        %450 = vst [vmem:[#allocation3 + $0x88] sm:$0xff] 0.0
        %451 = vst [vmem:[#allocation3 + $0x90] sm:$0xff] 0.0
        %452 = vst [vmem:[#allocation3 + $0x98] sm:$0xff] 0.0
        %453 = vst [vmem:[#allocation3 + $0xa0] sm:$0xff] 0.0
        %454 = vst [vmem:[#allocation3 + $0xa8] sm:$0xff] 0.0
        %455 = vst [vmem:[#allocation3 + $0xb0] sm:$0xff] 0.0
        %456 = vst [vmem:[#allocation3 + $0xb8] sm:$0xff] 0.0
        %457 = vst [vmem:[#allocation3 + $0xc0] sm:$0xff] 0.0
        %458 = vst [vmem:[#allocation3 + $0xc8] sm:$0xff] 0.0
        %459 = vst [vmem:[#allocation3 + $0xd0] sm:$0xff] 0.0
        %460 = vst [vmem:[#allocation3 + $0xd8] sm:$0xff] 0.0
        %461 = vst [vmem:[#allocation3 + $0xe0] sm:$0xff] 0.0
        %462 = vst [vmem:[#allocation3 + $0xe8] sm:$0xff] 0.0
        %463 = vst [vmem:[#allocation3 + $0xf0] sm:$0xff] 0.0
        %464 = vst [vmem:[#allocation3 + $0xf8] sm:$0xff] 0.0
        %vm465 = vcmask 31744
        %466 = vst.msk [vmem:[#allocation3] sm:$0xff] %vm465, %v347
        %467 = vst.msk [vmem:[#allocation3 + $0x8] sm:$0xff] %vm465, %v348
        %468 = vst.msk [vmem:[#allocation3 + $0x10] sm:$0xff] %vm465, %v349
        %469 = vst.msk [vmem:[#allocation3 + $0x18] sm:$0xff] %vm465, %v350
        %470 = vst.msk [vmem:[#allocation3 + $0x20] sm:$0xff] %vm465, %v351
        %471 = vst.msk [vmem:[#allocation3 + $0x28] sm:$0xff] %vm465, %v352
        %472 = vst.msk [vmem:[#allocation3 + $0x30] sm:$0xff] %vm465, %v353
        %473 = vst.msk [vmem:[#allocation3 + $0x38] sm:$0xff] %vm465, %v354
        %474 = vst.msk [vmem:[#allocation3 + $0x40] sm:$0xff] %vm465, %v355
        %475 = vst.msk [vmem:[#allocation3 + $0x48] sm:$0xff] %vm465, %v356
        %476 = vst.msk [vmem:[#allocation3 + $0x50] sm:$0xff] %vm465, %v357
        %477 = vst.msk [vmem:[#allocation3 + $0x58] sm:$0xff] %vm465, %v358
        %478 = vst.msk [vmem:[#allocation3 + $0x60] sm:$0xff] %vm465, %v359
        %479 = vst.msk [vmem:[#allocation3 + $0x68] sm:$0xff] %vm465, %v360
        %480 = vst.msk [vmem:[#allocation3 + $0x70] sm:$0xff] %vm465, %v361
        %481 = vst.msk [vmem:[#allocation3 + $0x78] sm:$0xff] %vm465, %v362
        %482 = vst.msk [vmem:[#allocation3 + $0x80] sm:$0xff] %vm465, %v363
        %483 = vst.msk [vmem:[#allocation3 + $0x88] sm:$0xff] %vm465, %v364
        %484 = vst.msk [vmem:[#allocation3 + $0x90] sm:$0xff] %vm465, %v365
        %485 = vst.msk [vmem:[#allocation3 + $0x98] sm:$0xff] %vm465, %v366
        %486 = vst.msk [vmem:[#allocation3 + $0xa0] sm:$0xff] %vm465, %v367
        %487 = vst.msk [vmem:[#allocation3 + $0xa8] sm:$0xff] %vm465, %v368
        %488 = vst.msk [vmem:[#allocation3 + $0xb0] sm:$0xff] %vm465, %v369
        %489 = vst.msk [vmem:[#allocation3 + $0xb8] sm:$0xff] %vm465, %v370
        %490 = vst.msk [vmem:[#allocation3 + $0xc0] sm:$0xff] %vm465, %v371
        %491 = vst.msk [vmem:[#allocation3 + $0xc8] sm:$0xff] %vm465, %v372
        %492 = vst.msk [vmem:[#allocation3 + $0xd0] sm:$0xff] %vm465, %v373
        %493 = vst.msk [vmem:[#allocation3 + $0xd8] sm:$0xff] %vm465, %v374
        %494 = vst.msk [vmem:[#allocation3 + $0xe0] sm:$0xff] %vm465, %v375
        %495 = vst.msk [vmem:[#allocation3 + $0xe8] sm:$0xff] %vm465, %v376
        %496 = vst.msk [vmem:[#allocation3 + $0xf0] sm:$0xff] %vm465, %v377
        %497 = vst.msk [vmem:[#allocation3 + $0xf8] sm:$0xff] %vm465, %v378
        %v498 = vld [vmem:[%s2] sm:$0x1]
        %v499 = vld [vmem:[%s3] sm:$0x1]
        %v500 = vld [vmem:[%s4] sm:$0x1]
        %s501 = scalar_lea.vmem [#allocation2], 24
        %502 = vst.msk [vmem:[%s501 + $0x1] sm:$0xff] %vm465, %v347
        %503 = vst.msk [vmem:[%s501 + $0x9] sm:$0xff] %vm465, %v348
        %504 = vst.msk [vmem:[%s501 + $0x19] sm:$0xff] %vm465, %v349
        %505 = vst.msk [vmem:[%s501 + $0x21] sm:$0xff] %vm465, %v350
        %506 = vst.msk [vmem:[%s501 + $0x31] sm:$0xff] %vm465, %v351
        %507 = vst.msk [vmem:[%s501 + $0x39] sm:$0xff] %vm465, %v352
        %508 = vst.msk [vmem:[%s501 + $0x49] sm:$0xff] %vm465, %v353
        %509 = vst.msk [vmem:[%s501 + $0x51] sm:$0xff] %vm465, %v354
        %510 = vst.msk [vmem:[%s501 + $0x61] sm:$0xff] %vm465, %v355
        %511 = vst.msk [vmem:[%s501 + $0x69] sm:$0xff] %vm465, %v356
        %512 = vst.msk [vmem:[%s501 + $0x79] sm:$0xff] %vm465, %v357
        %513 = vst.msk [vmem:[%s501 + $0x81] sm:$0xff] %vm465, %v358
        %514 = vst.msk [vmem:[%s501 + $0x91] sm:$0xff] %vm465, %v359
        %515 = vst.msk [vmem:[%s501 + $0x99] sm:$0xff] %vm465, %v360
        %516 = vst.msk [vmem:[%s501 + $0xa9] sm:$0xff] %vm465, %v361
        %517 = vst.msk [vmem:[%s501 + $0xb1] sm:$0xff] %vm465, %v362
        %518 = vst.msk [vmem:[%s501 + $0xc1] sm:$0xff] %vm465, %v363
        %519 = vst.msk [vmem:[%s501 + $0xc9] sm:$0xff] %vm465, %v364
        %520 = vst.msk [vmem:[%s501 + $0xd9] sm:$0xff] %vm465, %v365
        %521 = vst.msk [vmem:[%s501 + $0xe1] sm:$0xff] %vm465, %v366
        %522 = vst.msk [vmem:[%s501 + $0xf1] sm:$0xff] %vm465, %v367
        %523 = vst.msk [vmem:[%s501 + $0xf9] sm:$0xff] %vm465, %v368
        %524 = vst.msk [vmem:[%s501 + $0x109] sm:$0xff] %vm465, %v369
        %525 = vst.msk [vmem:[%s501 + $0x111] sm:$0xff] %vm465, %v370
        %526 = vst.msk [vmem:[%s501 + $0x121] sm:$0xff] %vm465, %v371
        %527 = vst.msk [vmem:[%s501 + $0x129] sm:$0xff] %vm465, %v372
        %528 = vst.msk [vmem:[%s501 + $0x139] sm:$0xff] %vm465, %v373
        %529 = vst.msk [vmem:[%s501 + $0x141] sm:$0xff] %vm465, %v374
        %530 = vst.msk [vmem:[%s501 + $0x151] sm:$0xff] %vm465, %v375
        %531 = vst.msk [vmem:[%s501 + $0x159] sm:$0xff] %vm465, %v376
        %532 = vst.msk [vmem:[%s501 + $0x169] sm:$0xff] %vm465, %v377
        %533 = vst.msk [vmem:[%s501 + $0x171] sm:$0xff] %vm465, %v378
        %534 = vst.msk [vmem:[#allocation2 + $0x1] sm:$0xff] %vm465, %v349
        %535 = vst.msk [vmem:[#allocation2 + $0x9] sm:$0xff] %vm465, %v350
        %s536 = scalar_lea.vmem [#allocation2], 408
        %537 = vst.msk [vmem:[%s536 + $0x1] sm:$0xff] %vm465, %v375
        %538 = vst.msk [vmem:[%s536 + $0x9] sm:$0xff] %vm465, %v376
        %v539 = vld [vmem:[#allocation2 + $0x2] sm:$0x1]
        %v540 = vld [vmem:[#allocation2 + $0x1a] sm:$0x1]
        %v541 = vld [vmem:[#allocation2 + $0x32] sm:$0x1]
        %v542 = vld [vmem:[#allocation2 + $0x4a] sm:$0x1]
        %v543 = vld [vmem:[#allocation2 + $0x62] sm:$0x1]
        %v544 = vld [vmem:[#allocation2 + $0x7a] sm:$0x1]
        %v545 = vld [vmem:[#allocation2 + $0x92] sm:$0x1]
        %v546 = vld [vmem:[#allocation2 + $0xaa] sm:$0x1]
        %v547 = vld [vmem:[#allocation2 + $0xc2] sm:$0x1]
        %v548 = vld [vmem:[#allocation2 + $0xda] sm:$0x1]
        %v549 = vld [vmem:[#allocation2 + $0xf2] sm:$0x1]
        %v550 = vld [vmem:[#allocation2 + $0x10a] sm:$0x1]
        %v551 = vld [vmem:[#allocation2 + $0x122] sm:$0x1]
        %v552 = vld [vmem:[#allocation2 + $0x13a] sm:$0x1]
        %v553 = vld [vmem:[#allocation2 + $0x152] sm:$0x1]
        %v554 = vld [vmem:[#allocation2 + $0x16a] sm:$0x1]
        %v555 = vld [vmem:[#allocation2 + $0x182] sm:$0x1]
        %v556 = vld [vmem:[#allocation2 + $0x19a] sm:$0x1]
        %557 = vst [vmem:[#allocation2] sm:$0x1] %v539
        %558 = vst [vmem:[#allocation2 + $0x18] sm:$0x1] %v540
        %559 = vst [vmem:[#allocation2 + $0x30] sm:$0x1] %v541
        %560 = vst [vmem:[#allocation2 + $0x48] sm:$0x1] %v542
        %561 = vst [vmem:[#allocation2 + $0x60] sm:$0x1] %v543
        %562 = vst [vmem:[#allocation2 + $0x78] sm:$0x1] %v544
        %563 = vst [vmem:[#allocation2 + $0x90] sm:$0x1] %v545
        %564 = vst [vmem:[#allocation2 + $0xa8] sm:$0x1] %v546
        %565 = vst [vmem:[#allocation2 + $0xc0] sm:$0x1] %v547
        %566 = vst [vmem:[#allocation2 + $0xd8] sm:$0x1] %v548
        %567 = vst [vmem:[#allocation2 + $0xf0] sm:$0x1] %v549
        %568 = vst [vmem:[#allocation2 + $0x108] sm:$0x1] %v550
        %569 = vst [vmem:[#allocation2 + $0x120] sm:$0x1] %v551
        %570 = vst [vmem:[#allocation2 + $0x138] sm:$0x1] %v552
        %571 = vst [vmem:[#allocation2 + $0x150] sm:$0x1] %v553
        %572 = vst [vmem:[#allocation2 + $0x168] sm:$0x1] %v554
        %573 = vst [vmem:[#allocation2 + $0x180] sm:$0x1] %v555
        %574 = vst [vmem:[#allocation2 + $0x198] sm:$0x1] %v556
        %v575 = vld [vmem:[#allocation2 + $0xf] sm:$0x1]
        %v576 = vld [vmem:[#allocation2 + $0x27] sm:$0x1]
        %v577 = vld [vmem:[#allocation2 + $0x3f] sm:$0x1]
        %v578 = vld [vmem:[#allocation2 + $0x57] sm:$0x1]
        %v579 = vld [vmem:[#allocation2 + $0x6f] sm:$0x1]
        %v580 = vld [vmem:[#allocation2 + $0x87] sm:$0x1]
        %v581 = vld [vmem:[#allocation2 + $0x9f] sm:$0x1]
        %v582 = vld [vmem:[#allocation2 + $0xb7] sm:$0x1]
        %v583 = vld [vmem:[#allocation2 + $0xcf] sm:$0x1]
        %v584 = vld [vmem:[#allocation2 + $0xe7] sm:$0x1]
        %v585 = vld [vmem:[#allocation2 + $0xff] sm:$0x1]
        %v586 = vld [vmem:[#allocation2 + $0x117] sm:$0x1]
        %v587 = vld [vmem:[#allocation2 + $0x12f] sm:$0x1]
        %v588 = vld [vmem:[#allocation2 + $0x147] sm:$0x1]
        %v589 = vld [vmem:[#allocation2 + $0x15f] sm:$0x1]
        %v590 = vld [vmem:[#allocation2 + $0x177] sm:$0x1]
        %v591 = vld [vmem:[#allocation2 + $0x18f] sm:$0x1]
        %v592 = vld [vmem:[#allocation2 + $0x1a7] sm:$0x1]
        %593 = vst [vmem:[#allocation2 + $0x11] sm:$0x1] %v575
        %594 = vst [vmem:[#allocation2 + $0x29] sm:$0x1] %v576
        %595 = vst [vmem:[#allocation2 + $0x41] sm:$0x1] %v577
        %596 = vst [vmem:[#allocation2 + $0x59] sm:$0x1] %v578
        %597 = vst [vmem:[#allocation2 + $0x71] sm:$0x1] %v579
        %598 = vst [vmem:[#allocation2 + $0x89] sm:$0x1] %v580
        %599 = vst [vmem:[#allocation2 + $0xa1] sm:$0x1] %v581
        %600 = vst [vmem:[#allocation2 + $0xb9] sm:$0x1] %v582
        %601 = vst [vmem:[#allocation2 + $0xd1] sm:$0x1] %v583
        %602 = vst [vmem:[#allocation2 + $0xe9] sm:$0x1] %v584
        %603 = vst [vmem:[#allocation2 + $0x101] sm:$0x1] %v585
        %604 = vst [vmem:[#allocation2 + $0x119] sm:$0x1] %v586
        %605 = vst [vmem:[#allocation2 + $0x131] sm:$0x1] %v587
        %606 = vst [vmem:[#allocation2 + $0x149] sm:$0x1] %v588
        %607 = vst [vmem:[#allocation2 + $0x161] sm:$0x1] %v589
        %608 = vst [vmem:[#allocation2 + $0x179] sm:$0x1] %v590
        %609 = vst [vmem:[#allocation2 + $0x191] sm:$0x1] %v591
        %610 = vst [vmem:[#allocation2 + $0x1a9] sm:$0x1] %v592
        %v611 = vld [vmem:[#allocation2] sm:$0xff]
        %v612 = vld [vmem:[#allocation2 + $0x8] sm:$0xff]
        %v613 = vld [vmem:[#allocation2 + $0x18] sm:$0xff]
        %v614 = vld [vmem:[#allocation2 + $0x20] sm:$0xff]
        %v615 = vld [vmem:[#allocation2 + $0x30] sm:$0xff]
        %v616 = vld [vmem:[#allocation2 + $0x38] sm:$0xff]
        %v617 = vld [vmem:[#allocation2 + $0x48] sm:$0xff]
        %v618 = vld [vmem:[#allocation2 + $0x50] sm:$0xff]
        %v619 = vld [vmem:[#allocation2 + $0x60] sm:$0xff]
        %v620 = vld [vmem:[#allocation2 + $0x68] sm:$0xff]
        %v621 = vld [vmem:[#allocation2 + $0x78] sm:$0xff]
        %v622 = vld [vmem:[#allocation2 + $0x80] sm:$0xff]
        %v623 = vld [vmem:[#allocation2 + $0x90] sm:$0xff]
        %v624 = vld [vmem:[#allocation2 + $0x98] sm:$0xff]
        %v625 = vld [vmem:[#allocation2 + $0xa8] sm:$0xff]
        %v626 = vld [vmem:[#allocation2 + $0xb0] sm:$0xff]
        %v627 = vld [vmem:[#allocation2 + $0xc0] sm:$0xff]
        %v628 = vld [vmem:[#allocation2 + $0xc8] sm:$0xff]
        %v629 = vld [vmem:[#allocation2 + $0xd8] sm:$0xff]
        %v630 = vld [vmem:[#allocation2 + $0xe0] sm:$0xff]
        %v631 = vld [vmem:[#allocation2 + $0xf0] sm:$0xff]
        %v632 = vld [vmem:[#allocation2 + $0xf8] sm:$0xff]
        %v633 = vld [vmem:[#allocation2 + $0x108] sm:$0xff]
        %v634 = vld [vmem:[#allocation2 + $0x110] sm:$0xff]
        %v635 = vld [vmem:[#allocation2 + $0x120] sm:$0xff]
        %v636 = vld [vmem:[#allocation2 + $0x128] sm:$0xff]
        %v637 = vld [vmem:[#allocation2 + $0x138] sm:$0xff]
        %v638 = vld [vmem:[#allocation2 + $0x140] sm:$0xff]
        %v639 = vld [vmem:[#allocation2 + $0x150] sm:$0xff]
        %v640 = vld [vmem:[#allocation2 + $0x158] sm:$0xff]
        %v641 = vld [vmem:[#allocation2 + $0x168] sm:$0xff]
        %v642 = vld [vmem:[#allocation2 + $0x170] sm:$0xff]
        %v643 = vpack.c.bf16 %v612, %v611
        %v644 = vpack.c.bf16 %v614, %v613
        %v645 = vpack.c.bf16 %v616, %v615
        %v646 = vpack.c.bf16 %v618, %v617
        %v647 = vpack.c.bf16 %v620, %v619
        %v648 = vpack.c.bf16 %v622, %v621
        %v649 = vpack.c.bf16 %v624, %v623
        %v650 = vpack.c.bf16 %v626, %v625
        %v651 = vpack.c.bf16 %v628, %v627
        %v652 = vpack.c.bf16 %v630, %v629
        %v653 = vpack.c.bf16 %v632, %v631
        %v654 = vpack.c.bf16 %v634, %v633
        %v655 = vpack.c.bf16 %v636, %v635
        %v656 = vpack.c.bf16 %v638, %v637
        %v657 = vpack.c.bf16 %v640, %v639
        %v658 = vpack.c.bf16 %v642, %v641
        %v659 = vld [vmem:[#allocation2 + $0x1] sm:$0xff]
        %v660 = vld [vmem:[#allocation2 + $0x9] sm:$0xff]
        %v661 = vld [vmem:[#allocation2 + $0x19] sm:$0xff]
        %v662 = vld [vmem:[#allocation2 + $0x21] sm:$0xff]
        %v663 = vld [vmem:[#allocation2 + $0x31] sm:$0xff]
        %v664 = vld [vmem:[#allocation2 + $0x39] sm:$0xff]
        %v665 = vld [vmem:[#allocation2 + $0x49] sm:$0xff]
        %v666 = vld [vmem:[#allocation2 + $0x51] sm:$0xff]
        %v667 = vld [vmem:[#allocation2 + $0x61] sm:$0xff]
        %v668 = vld [vmem:[#allocation2 + $0x69] sm:$0xff]
        %v669 = vld [vmem:[#allocation2 + $0x79] sm:$0xff]
        %v670 = vld [vmem:[#allocation2 + $0x81] sm:$0xff]
        %v671 = vld [vmem:[#allocation2 + $0x91] sm:$0xff]
        %v672 = vld [vmem:[#allocation2 + $0x99] sm:$0xff]
        %v673 = vld [vmem:[#allocation2 + $0xa9] sm:$0xff]
        %v674 = vld [vmem:[#allocation2 + $0xb1] sm:$0xff]
        %v675 = vld [vmem:[#allocation2 + $0xc1] sm:$0xff]
        %v676 = vld [vmem:[#allocation2 + $0xc9] sm:$0xff]
        %v677 = vld [vmem:[#allocation2 + $0xd9] sm:$0xff]
        %v678 = vld [vmem:[#allocation2 + $0xe1] sm:$0xff]
        %v679 = vld [vmem:[#allocation2 + $0xf1] sm:$0xff]
        %v680 = vld [vmem:[#allocation2 + $0xf9] sm:$0xff]
        %v681 = vld [vmem:[#allocation2 + $0x109] sm:$0xff]
        %v682 = vld [vmem:[#allocation2 + $0x111] sm:$0xff]
        %v683 = vld [vmem:[#allocation2 + $0x121] sm:$0xff]
        %v684 = vld [vmem:[#allocation2 + $0x129] sm:$0xff]
        %v685 = vld [vmem:[#allocation2 + $0x139] sm:$0xff]
        %v686 = vld [vmem:[#allocation2 + $0x141] sm:$0xff]
        %v687 = vld [vmem:[#allocation2 + $0x151] sm:$0xff]
        %v688 = vld [vmem:[#allocation2 + $0x159] sm:$0xff]
        %v689 = vld [vmem:[#allocation2 + $0x169] sm:$0xff]
        %v690 = vld [vmem:[#allocation2 + $0x171] sm:$0xff]
        %v691 = vpack.c.bf16 %v660, %v659
        %v692 = vpack.c.bf16 %v662, %v661
        %v693 = vpack.c.bf16 %v664, %v663
        %v694 = vpack.c.bf16 %v666, %v665
        %v695 = vpack.c.bf16 %v668, %v667
        %v696 = vpack.c.bf16 %v670, %v669
        %v697 = vpack.c.bf16 %v672, %v671
        %v698 = vpack.c.bf16 %v674, %v673
        %v699 = vpack.c.bf16 %v676, %v675
        %v700 = vpack.c.bf16 %v678, %v677
        %v701 = vpack.c.bf16 %v680, %v679
        %v702 = vpack.c.bf16 %v682, %v681
        %v703 = vpack.c.bf16 %v684, %v683
        %v704 = vpack.c.bf16 %v686, %v685
        %v705 = vpack.c.bf16 %v688, %v687
        %v706 = vpack.c.bf16 %v690, %v689
        %v707 = vld [vmem:[#allocation2 + $0x2] sm:$0xff]
        %v708 = vld [vmem:[#allocation2 + $0xa] sm:$0xff]
        %v709 = vld [vmem:[#allocation2 + $0x1a] sm:$0xff]
        %v710 = vld [vmem:[#allocation2 + $0x22] sm:$0xff]
        %v711 = vld [vmem:[#allocation2 + $0x32] sm:$0xff]
        %v712 = vld [vmem:[#allocation2 + $0x3a] sm:$0xff]
        %v713 = vld [vmem:[#allocation2 + $0x4a] sm:$0xff]
        %v714 = vld [vmem:[#allocation2 + $0x52] sm:$0xff]
        %v715 = vld [vmem:[#allocation2 + $0x62] sm:$0xff]
        %v716 = vld [vmem:[#allocation2 + $0x6a] sm:$0xff]
        %v717 = vld [vmem:[#allocation2 + $0x7a] sm:$0xff]
        %v718 = vld [vmem:[#allocation2 + $0x82] sm:$0xff]
        %v719 = vld [vmem:[#allocation2 + $0x92] sm:$0xff]
        %v720 = vld [vmem:[#allocation2 + $0x9a] sm:$0xff]
        %v721 = vld [vmem:[#allocation2 + $0xaa] sm:$0xff]
        %v722 = vld [vmem:[#allocation2 + $0xb2] sm:$0xff]
        %v723 = vld [vmem:[#allocation2 + $0xc2] sm:$0xff]
        %v724 = vld [vmem:[#allocation2 + $0xca] sm:$0xff]
        %v725 = vld [vmem:[#allocation2 + $0xda] sm:$0xff]
        %v726 = vld [vmem:[#allocation2 + $0xe2] sm:$0xff]
        %v727 = vld [vmem:[#allocation2 + $0xf2] sm:$0xff]
        %v728 = vld [vmem:[#allocation2 + $0xfa] sm:$0xff]
        %v729 = vld [vmem:[#allocation2 + $0x10a] sm:$0xff]
        %v730 = vld [vmem:[#allocation2 + $0x112] sm:$0xff]
        %v731 = vld [vmem:[#allocation2 + $0x122] sm:$0xff]
        %v732 = vld [vmem:[#allocation2 + $0x12a] sm:$0xff]
        %v733 = vld [vmem:[#allocation2 + $0x13a] sm:$0xff]
        %v734 = vld [vmem:[#allocation2 + $0x142] sm:$0xff]
        %v735 = vld [vmem:[#allocation2 + $0x152] sm:$0xff]
        %v736 = vld [vmem:[#allocation2 + $0x15a] sm:$0xff]
        %v737 = vld [vmem:[#allocation2 + $0x16a] sm:$0xff]
        %v738 = vld [vmem:[#allocation2 + $0x172] sm:$0xff]
        %v739 = vpack.c.bf16 %v708, %v707
        %v740 = vpack.c.bf16 %v710, %v709
        %v741 = vpack.c.bf16 %v712, %v711
        %v742 = vpack.c.bf16 %v714, %v713
        %v743 = vpack.c.bf16 %v716, %v715
        %v744 = vpack.c.bf16 %v718, %v717
        %v745 = vpack.c.bf16 %v720, %v719
        %v746 = vpack.c.bf16 %v722, %v721
        %v747 = vpack.c.bf16 %v724, %v723
        %v748 = vpack.c.bf16 %v726, %v725
        %v749 = vpack.c.bf16 %v728, %v727
        %v750 = vpack.c.bf16 %v730, %v729
        %v751 = vpack.c.bf16 %v732, %v731
        %v752 = vpack.c.bf16 %v734, %v733
        %v753 = vpack.c.bf16 %v736, %v735
        %v754 = vpack.c.bf16 %v738, %v737
        %v755 = vld [vmem:[%s501] sm:$0xff]
        %v756 = vld [vmem:[%s501 + $0x8] sm:$0xff]
        %v757 = vld [vmem:[%s501 + $0x18] sm:$0xff]
        %v758 = vld [vmem:[%s501 + $0x20] sm:$0xff]
        %v759 = vld [vmem:[%s501 + $0x30] sm:$0xff]
        %v760 = vld [vmem:[%s501 + $0x38] sm:$0xff]
        %v761 = vld [vmem:[%s501 + $0x48] sm:$0xff]
        %v762 = vld [vmem:[%s501 + $0x50] sm:$0xff]
        %v763 = vld [vmem:[%s501 + $0x60] sm:$0xff]
        %v764 = vld [vmem:[%s501 + $0x68] sm:$0xff]
        %v765 = vld [vmem:[%s501 + $0x78] sm:$0xff]
        %v766 = vld [vmem:[%s501 + $0x80] sm:$0xff]
        %v767 = vld [vmem:[%s501 + $0x90] sm:$0xff]
        %v768 = vld [vmem:[%s501 + $0x98] sm:$0xff]
        %v769 = vld [vmem:[%s501 + $0xa8] sm:$0xff]
        %v770 = vld [vmem:[%s501 + $0xb0] sm:$0xff]
        %v771 = vld [vmem:[%s501 + $0xc0] sm:$0xff]
        %v772 = vld [vmem:[%s501 + $0xc8] sm:$0xff]
        %v773 = vld [vmem:[%s501 + $0xd8] sm:$0xff]
        %v774 = vld [vmem:[%s501 + $0xe0] sm:$0xff]
        %v775 = vld [vmem:[%s501 + $0xf0] sm:$0xff]
        %v776 = vld [vmem:[%s501 + $0xf8] sm:$0xff]
        %v777 = vld [vmem:[%s501 + $0x108] sm:$0xff]
        %v778 = vld [vmem:[%s501 + $0x110] sm:$0xff]
        %v779 = vld [vmem:[%s501 + $0x120] sm:$0xff]
        %v780 = vld [vmem:[%s501 + $0x128] sm:$0xff]
        %v781 = vld [vmem:[%s501 + $0x138] sm:$0xff]
        %v782 = vld [vmem:[%s501 + $0x140] sm:$0xff]
        %v783 = vld [vmem:[%s501 + $0x150] sm:$0xff]
        %v784 = vld [vmem:[%s501 + $0x158] sm:$0xff]
        %v785 = vld [vmem:[%s501 + $0x168] sm:$0xff]
        %v786 = vld [vmem:[%s501 + $0x170] sm:$0xff]
        %v787 = vpack.c.bf16 %v756, %v755
        %v788 = vpack.c.bf16 %v758, %v757
        %v789 = vpack.c.bf16 %v760, %v759
        %v790 = vpack.c.bf16 %v762, %v761
        %v791 = vpack.c.bf16 %v764, %v763
        %v792 = vpack.c.bf16 %v766, %v765
        %v793 = vpack.c.bf16 %v768, %v767
        %v794 = vpack.c.bf16 %v770, %v769
        %v795 = vpack.c.bf16 %v772, %v771
        %v796 = vpack.c.bf16 %v774, %v773
        %v797 = vpack.c.bf16 %v776, %v775
        %v798 = vpack.c.bf16 %v778, %v777
        %v799 = vpack.c.bf16 %v780, %v779
        %v800 = vpack.c.bf16 %v782, %v781
        %v801 = vpack.c.bf16 %v784, %v783
        %v802 = vpack.c.bf16 %v786, %v785
        %v803 = vld [vmem:[%s501 + $0x1] sm:$0xff]
        %v804 = vld [vmem:[%s501 + $0x9] sm:$0xff]
        %v805 = vld [vmem:[%s501 + $0x19] sm:$0xff]
        %v806 = vld [vmem:[%s501 + $0x21] sm:$0xff]
        %v807 = vld [vmem:[%s501 + $0x31] sm:$0xff]
        %v808 = vld [vmem:[%s501 + $0x39] sm:$0xff]
        %v809 = vld [vmem:[%s501 + $0x49] sm:$0xff]
        %v810 = vld [vmem:[%s501 + $0x51] sm:$0xff]
        %v811 = vld [vmem:[%s501 + $0x61] sm:$0xff]
        %v812 = vld [vmem:[%s501 + $0x69] sm:$0xff]
        %v813 = vld [vmem:[%s501 + $0x79] sm:$0xff]
        %v814 = vld [vmem:[%s501 + $0x81] sm:$0xff]
        %v815 = vld [vmem:[%s501 + $0x91] sm:$0xff]
        %v816 = vld [vmem:[%s501 + $0x99] sm:$0xff]
        %v817 = vld [vmem:[%s501 + $0xa9] sm:$0xff]
        %v818 = vld [vmem:[%s501 + $0xb1] sm:$0xff]
        %v819 = vld [vmem:[%s501 + $0xc1] sm:$0xff]
        %v820 = vld [vmem:[%s501 + $0xc9] sm:$0xff]
        %v821 = vld [vmem:[%s501 + $0xd9] sm:$0xff]
        %v822 = vld [vmem:[%s501 + $0xe1] sm:$0xff]
        %v823 = vld [vmem:[%s501 + $0xf1] sm:$0xff]
        %v824 = vld [vmem:[%s501 + $0xf9] sm:$0xff]
        %v825 = vld [vmem:[%s501 + $0x109] sm:$0xff]
        %v826 = vld [vmem:[%s501 + $0x111] sm:$0xff]
        %v827 = vld [vmem:[%s501 + $0x121] sm:$0xff]
        %v828 = vld [vmem:[%s501 + $0x129] sm:$0xff]
        %v829 = vld [vmem:[%s501 + $0x139] sm:$0xff]
        %v830 = vld [vmem:[%s501 + $0x141] sm:$0xff]
        %v831 = vld [vmem:[%s501 + $0x151] sm:$0xff]
        %v832 = vld [vmem:[%s501 + $0x159] sm:$0xff]
        %v833 = vld [vmem:[%s501 + $0x169] sm:$0xff]
        %v834 = vld [vmem:[%s501 + $0x171] sm:$0xff]
        %v835 = vpack.c.bf16 %v804, %v803
        %v836 = vpack.c.bf16 %v806, %v805
        %v837 = vpack.c.bf16 %v808, %v807
        %v838 = vpack.c.bf16 %v810, %v809
        %v839 = vpack.c.bf16 %v812, %v811
        %v840 = vpack.c.bf16 %v814, %v813
        %v841 = vpack.c.bf16 %v816, %v815
        %v842 = vpack.c.bf16 %v818, %v817
        %v843 = vpack.c.bf16 %v820, %v819
        %v844 = vpack.c.bf16 %v822, %v821
        %v845 = vpack.c.bf16 %v824, %v823
        %v846 = vpack.c.bf16 %v826, %v825
        %v847 = vpack.c.bf16 %v828, %v827
        %v848 = vpack.c.bf16 %v830, %v829
        %v849 = vpack.c.bf16 %v832, %v831
        %v850 = vpack.c.bf16 %v834, %v833
        %v851 = vld [vmem:[%s501 + $0x2] sm:$0xff]
        %v852 = vld [vmem:[%s501 + $0xa] sm:$0xff]
        %v853 = vld [vmem:[%s501 + $0x1a] sm:$0xff]
        %v854 = vld [vmem:[%s501 + $0x22] sm:$0xff]
        %v855 = vld [vmem:[%s501 + $0x32] sm:$0xff]
        %v856 = vld [vmem:[%s501 + $0x3a] sm:$0xff]
        %v857 = vld [vmem:[%s501 + $0x4a] sm:$0xff]
        %v858 = vld [vmem:[%s501 + $0x52] sm:$0xff]
        %v859 = vld [vmem:[%s501 + $0x62] sm:$0xff]
        %v860 = vld [vmem:[%s501 + $0x6a] sm:$0xff]
        %v861 = vld [vmem:[%s501 + $0x7a] sm:$0xff]
        %v862 = vld [vmem:[%s501 + $0x82] sm:$0xff]
        %v863 = vld [vmem:[%s501 + $0x92] sm:$0xff]
        %v864 = vld [vmem:[%s501 + $0x9a] sm:$0xff]
        %v865 = vld [vmem:[%s501 + $0xaa] sm:$0xff]
        %v866 = vld [vmem:[%s501 + $0xb2] sm:$0xff]
        %v867 = vld [vmem:[%s501 + $0xc2] sm:$0xff]
        %v868 = vld [vmem:[%s501 + $0xca] sm:$0xff]
        %v869 = vld [vmem:[%s501 + $0xda] sm:$0xff]
        %v870 = vld [vmem:[%s501 + $0xe2] sm:$0xff]
        %v871 = vld [vmem:[%s501 + $0xf2] sm:$0xff]
        %v872 = vld [vmem:[%s501 + $0xfa] sm:$0xff]
        %v873 = vld [vmem:[%s501 + $0x10a] sm:$0xff]
        %v874 = vld [vmem:[%s501 + $0x112] sm:$0xff]
        %v875 = vld [vmem:[%s501 + $0x122] sm:$0xff]
        %v876 = vld [vmem:[%s501 + $0x12a] sm:$0xff]
        %v877 = vld [vmem:[%s501 + $0x13a] sm:$0xff]
        %v878 = vld [vmem:[%s501 + $0x142] sm:$0xff]
        %v879 = vld [vmem:[%s501 + $0x152] sm:$0xff]
        %v880 = vld [vmem:[%s501 + $0x15a] sm:$0xff]
        %v881 = vld [vmem:[%s501 + $0x16a] sm:$0xff]
        %v882 = vld [vmem:[%s501 + $0x172] sm:$0xff]
        %v883 = vpack.c.bf16 %v852, %v851
        %v884 = vpack.c.bf16 %v854, %v853
        %v885 = vpack.c.bf16 %v856, %v855
        %v886 = vpack.c.bf16 %v858, %v857
        %v887 = vpack.c.bf16 %v860, %v859
        %v888 = vpack.c.bf16 %v862, %v861
        %v889 = vpack.c.bf16 %v864, %v863
        %v890 = vpack.c.bf16 %v866, %v865
        %v891 = vpack.c.bf16 %v868, %v867
        %v892 = vpack.c.bf16 %v870, %v869
        %v893 = vpack.c.bf16 %v872, %v871
        %v894 = vpack.c.bf16 %v874, %v873
        %v895 = vpack.c.bf16 %v876, %v875
        %v896 = vpack.c.bf16 %v878, %v877
        %v897 = vpack.c.bf16 %v880, %v879
        %v898 = vpack.c.bf16 %v882, %v881
        %s899 = scalar_lea.vmem [#allocation2], 48
        %v900 = vld [vmem:[%s899] sm:$0xff]
        %v901 = vld [vmem:[%s899 + $0x8] sm:$0xff]
        %v902 = vld [vmem:[%s899 + $0x18] sm:$0xff]
        %v903 = vld [vmem:[%s899 + $0x20] sm:$0xff]
        %v904 = vld [vmem:[%s899 + $0x30] sm:$0xff]
        %v905 = vld [vmem:[%s899 + $0x38] sm:$0xff]
        %v906 = vld [vmem:[%s899 + $0x48] sm:$0xff]
        %v907 = vld [vmem:[%s899 + $0x50] sm:$0xff]
        %v908 = vld [vmem:[%s899 + $0x60] sm:$0xff]
        %v909 = vld [vmem:[%s899 + $0x68] sm:$0xff]
        %v910 = vld [vmem:[%s899 + $0x78] sm:$0xff]
        %v911 = vld [vmem:[%s899 + $0x80] sm:$0xff]
        %v912 = vld [vmem:[%s899 + $0x90] sm:$0xff]
        %v913 = vld [vmem:[%s899 + $0x98] sm:$0xff]
        %v914 = vld [vmem:[%s899 + $0xa8] sm:$0xff]
        %v915 = vld [vmem:[%s899 + $0xb0] sm:$0xff]
        %v916 = vld [vmem:[%s899 + $0xc0] sm:$0xff]
        %v917 = vld [vmem:[%s899 + $0xc8] sm:$0xff]
        %v918 = vld [vmem:[%s899 + $0xd8] sm:$0xff]
        %v919 = vld [vmem:[%s899 + $0xe0] sm:$0xff]
        %v920 = vld [vmem:[%s899 + $0xf0] sm:$0xff]
        %v921 = vld [vmem:[%s899 + $0xf8] sm:$0xff]
        %v922 = vld [vmem:[%s899 + $0x108] sm:$0xff]
        %v923 = vld [vmem:[%s899 + $0x110] sm:$0xff]
        %v924 = vld [vmem:[%s899 + $0x120] sm:$0xff]
        %v925 = vld [vmem:[%s899 + $0x128] sm:$0xff]
        %v926 = vld [vmem:[%s899 + $0x138] sm:$0xff]
        %v927 = vld [vmem:[%s899 + $0x140] sm:$0xff]
        %v928 = vld [vmem:[%s899 + $0x150] sm:$0xff]
        %v929 = vld [vmem:[%s899 + $0x158] sm:$0xff]
        %v930 = vld [vmem:[%s899 + $0x168] sm:$0xff]
        %v931 = vld [vmem:[%s899 + $0x170] sm:$0xff]
        %v932 = vpack.c.bf16 %v901, %v900
        %v933 = vpack.c.bf16 %v903, %v902
        %v934 = vpack.c.bf16 %v905, %v904
        %v935 = vpack.c.bf16 %v907, %v906
        %v936 = vpack.c.bf16 %v909, %v908
        %v937 = vpack.c.bf16 %v911, %v910
        %v938 = vpack.c.bf16 %v913, %v912
        %v939 = vpack.c.bf16 %v915, %v914
        %v940 = vpack.c.bf16 %v917, %v916
        %v941 = vpack.c.bf16 %v919, %v918
        %v942 = vpack.c.bf16 %v921, %v920
        %v943 = vpack.c.bf16 %v923, %v922
        %v944 = vpack.c.bf16 %v925, %v924
        %v945 = vpack.c.bf16 %v927, %v926
        %v946 = vpack.c.bf16 %v929, %v928
        %v947 = vpack.c.bf16 %v931, %v930
        %v948 = vld [vmem:[%s899 + $0x1] sm:$0xff]
        %v949 = vld [vmem:[%s899 + $0x9] sm:$0xff]
        %v950 = vld [vmem:[%s899 + $0x19] sm:$0xff]
        %v951 = vld [vmem:[%s899 + $0x21] sm:$0xff]
        %v952 = vld [vmem:[%s899 + $0x31] sm:$0xff]
        %v953 = vld [vmem:[%s899 + $0x39] sm:$0xff]
        %v954 = vld [vmem:[%s899 + $0x49] sm:$0xff]
        %v955 = vld [vmem:[%s899 + $0x51] sm:$0xff]
        %v956 = vld [vmem:[%s899 + $0x61] sm:$0xff]
        %v957 = vld [vmem:[%s899 + $0x69] sm:$0xff]
        %v958 = vld [vmem:[%s899 + $0x79] sm:$0xff]
        %v959 = vld [vmem:[%s899 + $0x81] sm:$0xff]
        %v960 = vld [vmem:[%s899 + $0x91] sm:$0xff]
        %v961 = vld [vmem:[%s899 + $0x99] sm:$0xff]
        %v962 = vld [vmem:[%s899 + $0xa9] sm:$0xff]
        %v963 = vld [vmem:[%s899 + $0xb1] sm:$0xff]
        %v964 = vld [vmem:[%s899 + $0xc1] sm:$0xff]
        %v965 = vld [vmem:[%s899 + $0xc9] sm:$0xff]
        %v966 = vld [vmem:[%s899 + $0xd9] sm:$0xff]
        %v967 = vld [vmem:[%s899 + $0xe1] sm:$0xff]
        %v968 = vld [vmem:[%s899 + $0xf1] sm:$0xff]
        %v969 = vld [vmem:[%s899 + $0xf9] sm:$0xff]
        %v970 = vld [vmem:[%s899 + $0x109] sm:$0xff]
        %v971 = vld [vmem:[%s899 + $0x111] sm:$0xff]
        %v972 = vld [vmem:[%s899 + $0x121] sm:$0xff]
        %v973 = vld [vmem:[%s899 + $0x129] sm:$0xff]
        %v974 = vld [vmem:[%s899 + $0x139] sm:$0xff]
        %v975 = vld [vmem:[%s899 + $0x141] sm:$0xff]
        %v976 = vld [vmem:[%s899 + $0x151] sm:$0xff]
        %v977 = vld [vmem:[%s899 + $0x159] sm:$0xff]
        %v978 = vld [vmem:[%s899 + $0x169] sm:$0xff]
        %v979 = vld [vmem:[%s899 + $0x171] sm:$0xff]
        %v980 = vpack.c.bf16 %v949, %v948
        %v981 = vpack.c.bf16 %v951, %v950
        %v982 = vpack.c.bf16 %v953, %v952
        %v983 = vpack.c.bf16 %v955, %v954
        %v984 = vpack.c.bf16 %v957, %v956
        %v985 = vpack.c.bf16 %v959, %v958
        %v986 = vpack.c.bf16 %v961, %v960
        %v987 = vpack.c.bf16 %v963, %v962
        %v988 = vpack.c.bf16 %v965, %v964
        %v989 = vpack.c.bf16 %v967, %v966
        %v990 = vpack.c.bf16 %v969, %v968
        %v991 = vpack.c.bf16 %v971, %v970
        %v992 = vpack.c.bf16 %v973, %v972
        %v993 = vpack.c.bf16 %v975, %v974
        %v994 = vpack.c.bf16 %v977, %v976
        %v995 = vpack.c.bf16 %v979, %v978
        %v996 = vld [vmem:[%s899 + $0x2] sm:$0xff]
        %v997 = vld [vmem:[%s899 + $0xa] sm:$0xff]
        %v998 = vld [vmem:[%s899 + $0x1a] sm:$0xff]
        %v999 = vld [vmem:[%s899 + $0x22] sm:$0xff]
        %v1000 = vld [vmem:[%s899 + $0x32] sm:$0xff]
        %v1001 = vld [vmem:[%s899 + $0x3a] sm:$0xff]
        %v1002 = vld [vmem:[%s899 + $0x4a] sm:$0xff]
        %v1003 = vld [vmem:[%s899 + $0x52] sm:$0xff]
        %v1004 = vld [vmem:[%s899 + $0x62] sm:$0xff]
        %v1005 = vld [vmem:[%s899 + $0x6a] sm:$0xff]
        %v1006 = vld [vmem:[%s899 + $0x7a] sm:$0xff]
        %v1007 = vld [vmem:[%s899 + $0x82] sm:$0xff]
        %v1008 = vld [vmem:[%s899 + $0x92] sm:$0xff]
        %v1009 = vld [vmem:[%s899 + $0x9a] sm:$0xff]
        %v1010 = vld [vmem:[%s899 + $0xaa] sm:$0xff]
        %v1011 = vld [vmem:[%s899 + $0xb2] sm:$0xff]
        %v1012 = vld [vmem:[%s899 + $0xc2] sm:$0xff]
        %v1013 = vld [vmem:[%s899 + $0xca] sm:$0xff]
        %v1014 = vld [vmem:[%s899 + $0xda] sm:$0xff]
        %v1015 = vld [vmem:[%s899 + $0xe2] sm:$0xff]
        %v1016 = vld [vmem:[%s899 + $0xf2] sm:$0xff]
        %v1017 = vld [vmem:[%s899 + $0xfa] sm:$0xff]
        %v1018 = vld [vmem:[%s899 + $0x10a] sm:$0xff]
        %v1019 = vld [vmem:[%s899 + $0x112] sm:$0xff]
        %v1020 = vld [vmem:[%s899 + $0x122] sm:$0xff]
        %v1021 = vld [vmem:[%s899 + $0x12a] sm:$0xff]
        %v1022 = vld [vmem:[%s899 + $0x13a] sm:$0xff]
        %v1023 = vld [vmem:[%s899 + $0x142] sm:$0xff]
        %v1024 = vld [vmem:[%s899 + $0x152] sm:$0xff]
        %v1025 = vld [vmem:[%s899 + $0x15a] sm:$0xff]
        %v1026 = vld [vmem:[%s899 + $0x16a] sm:$0xff]
        %v1027 = vld [vmem:[%s899 + $0x172] sm:$0xff]
        %v1028 = vpack.c.bf16 %v997, %v996
        %v1029 = vpack.c.bf16 %v999, %v998
        %v1030 = vpack.c.bf16 %v1001, %v1000
        %v1031 = vpack.c.bf16 %v1003, %v1002
        %v1032 = vpack.c.bf16 %v1005, %v1004
        %v1033 = vpack.c.bf16 %v1007, %v1006
        %v1034 = vpack.c.bf16 %v1009, %v1008
        %v1035 = vpack.c.bf16 %v1011, %v1010
        %v1036 = vpack.c.bf16 %v1013, %v1012
        %v1037 = vpack.c.bf16 %v1015, %v1014
        %v1038 = vpack.c.bf16 %v1017, %v1016
        %v1039 = vpack.c.bf16 %v1019, %v1018
        %v1040 = vpack.c.bf16 %v1021, %v1020
        %v1041 = vpack.c.bf16 %v1023, %v1022
        %v1042 = vpack.c.bf16 %v1025, %v1024
        %v1043 = vpack.c.bf16 %v1027, %v1026
        %v1044 = vld [vmem:[%s1] sm:$0xf]
        %v1045 = vld [vmem:[%s1 + $0x4] sm:$0xf]
        %v1046 = vld [vmem:[%s1 + $0x8] sm:$0xf]
        %v1047 = vld [vmem:[%s1 + $0xc] sm:$0xf]
        %v1048 = vld [vmem:[%s1 + $0x10] sm:$0xf]
        %v1049 = vld [vmem:[%s1 + $0x14] sm:$0xf]
        %v1050 = vld [vmem:[%s1 + $0x18] sm:$0xf]
        %v1051 = vld [vmem:[%s1 + $0x1c] sm:$0xf]
        %v1052 = vld [vmem:[%s1 + $0x20] sm:$0xf]
        %v1053 = vld [vmem:[%s1 + $0x24] sm:$0xf]
        %v1054 = vld [vmem:[%s1 + $0x28] sm:$0xf]
        %v1055 = vld [vmem:[%s1 + $0x2c] sm:$0xf]
        %v1056 = vld [vmem:[%s1 + $0x30] sm:$0xf]
        %v1057 = vld [vmem:[%s1 + $0x34] sm:$0xf]
        %v1058 = vld [vmem:[%s1 + $0x38] sm:$0xf]
        %v1059 = vld [vmem:[%s1 + $0x3c] sm:$0xf]
        %v1060 = vld [vmem:[%s1 + $0x40] sm:$0xf]
        %v1061 = vld [vmem:[%s1 + $0x44] sm:$0xf]
        %v1062 = vld [vmem:[%s1 + $0x48] sm:$0xf]
        %v1063 = vld [vmem:[%s1 + $0x4c] sm:$0xf]
        %v1064 = vld [vmem:[%s1 + $0x50] sm:$0xf]
        %v1065 = vld [vmem:[%s1 + $0x54] sm:$0xf]
        %v1066 = vld [vmem:[%s1 + $0x58] sm:$0xf]
        %v1067 = vld [vmem:[%s1 + $0x5c] sm:$0xf]
        %v1068 = vld [vmem:[%s1 + $0x60] sm:$0xf]
        %v1069 = vld [vmem:[%s1 + $0x64] sm:$0xf]
        %v1070 = vld [vmem:[%s1 + $0x68] sm:$0xf]
        %v1071 = vld [vmem:[%s1 + $0x6c] sm:$0xf]
        %v1072 = vld [vmem:[%s1 + $0x70] sm:$0xf]
        %v1073 = vld [vmem:[%s1 + $0x74] sm:$0xf]
        %v1074 = vld [vmem:[%s1 + $0x78] sm:$0xf]
        %v1075 = vld [vmem:[%s1 + $0x7c] sm:$0xf]
        %v1076 = vld [vmem:[%s1 + $0x80] sm:$0xf]
        %v1077 = vld [vmem:[%s1 + $0x84] sm:$0xf]
        %v1078 = vld [vmem:[%s1 + $0x88] sm:$0xf]
        %v1079 = vld [vmem:[%s1 + $0x8c] sm:$0xf]
        %v1080 = vld [vmem:[%s1 + $0x90] sm:$0xf]
        %v1081 = vld [vmem:[%s1 + $0x94] sm:$0xf]
        %v1082 = vld [vmem:[%s1 + $0x98] sm:$0xf]
        %v1083 = vld [vmem:[%s1 + $0x9c] sm:$0xf]
        %v1084 = vld [vmem:[%s1 + $0xa0] sm:$0xf]
        %v1085 = vld [vmem:[%s1 + $0xa4] sm:$0xf]
        %v1086 = vld [vmem:[%s1 + $0xa8] sm:$0xf]
        %v1087 = vld [vmem:[%s1 + $0xac] sm:$0xf]
        %v1088 = vld [vmem:[%s1 + $0xb0] sm:$0xf]
        %v1089 = vld [vmem:[%s1 + $0xb4] sm:$0xf]
        %v1090 = vld [vmem:[%s1 + $0xb8] sm:$0xf]
        %v1091 = vld [vmem:[%s1 + $0xbc] sm:$0xf]
        %v1092 = vld [vmem:[%s1 + $0xc0] sm:$0xf]
        %v1093 = vld [vmem:[%s1 + $0xc4] sm:$0xf]
        %v1094 = vld [vmem:[%s1 + $0xc8] sm:$0xf]
        %v1095 = vld [vmem:[%s1 + $0xcc] sm:$0xf]
        %v1096 = vld [vmem:[%s1 + $0xd0] sm:$0xf]
        %v1097 = vld [vmem:[%s1 + $0xd4] sm:$0xf]
        %v1098 = vld [vmem:[%s1 + $0xd8] sm:$0xf]
        %v1099 = vld [vmem:[%s1 + $0xdc] sm:$0xf]
        %v1100 = vld [vmem:[%s1 + $0xe0] sm:$0xf]
        %v1101 = vld [vmem:[%s1 + $0xe4] sm:$0xf]
        %v1102 = vld [vmem:[%s1 + $0xe8] sm:$0xf]
        %v1103 = vld [vmem:[%s1 + $0xec] sm:$0xf]
        %v1104 = vld [vmem:[%s1 + $0xf0] sm:$0xf]
        %v1105 = vld [vmem:[%s1 + $0xf4] sm:$0xf]
        %v1106 = vld [vmem:[%s1 + $0xf8] sm:$0xf]
        %v1107 = vld [vmem:[%s1 + $0xfc] sm:$0xf]
        %v1108 = vld [vmem:[%s1 + $0x100] sm:$0xf]
        %v1109 = vld [vmem:[%s1 + $0x104] sm:$0xf]
        %v1110 = vld [vmem:[%s1 + $0x108] sm:$0xf]
        %v1111 = vld [vmem:[%s1 + $0x10c] sm:$0xf]
        %v1112 = vld [vmem:[%s1 + $0x110] sm:$0xf]
        %v1113 = vld [vmem:[%s1 + $0x114] sm:$0xf]
        %v1114 = vld [vmem:[%s1 + $0x118] sm:$0xf]
        %v1115 = vld [vmem:[%s1 + $0x11c] sm:$0xf]
        %v1116 = vld [vmem:[%s1 + $0x120] sm:$0xf]
        %v1117 = vld [vmem:[%s1 + $0x124] sm:$0xf]
        %v1118 = vld [vmem:[%s1 + $0x128] sm:$0xf]
        %v1119 = vld [vmem:[%s1 + $0x12c] sm:$0xf]
        %v1120 = vld [vmem:[%s1 + $0x130] sm:$0xf]
        %v1121 = vld [vmem:[%s1 + $0x134] sm:$0xf]
        %v1122 = vld [vmem:[%s1 + $0x138] sm:$0xf]
        %v1123 = vld [vmem:[%s1 + $0x13c] sm:$0xf]
        %v1124 = vld [vmem:[%s1 + $0x140] sm:$0xf]
        %v1125 = vld [vmem:[%s1 + $0x144] sm:$0xf]
        %v1126 = vld [vmem:[%s1 + $0x148] sm:$0xf]
        %v1127 = vld [vmem:[%s1 + $0x14c] sm:$0xf]
        %v1128 = vld [vmem:[%s1 + $0x150] sm:$0xf]
        %v1129 = vld [vmem:[%s1 + $0x154] sm:$0xf]
        %v1130 = vld [vmem:[%s1 + $0x158] sm:$0xf]
        %v1131 = vld [vmem:[%s1 + $0x15c] sm:$0xf]
        %v1132 = vld [vmem:[%s1 + $0x160] sm:$0xf]
        %v1133 = vld [vmem:[%s1 + $0x164] sm:$0xf]
        %v1134 = vld [vmem:[%s1 + $0x168] sm:$0xf]
        %v1135 = vld [vmem:[%s1 + $0x16c] sm:$0xf]
        %v1136 = vld [vmem:[%s1 + $0x170] sm:$0xf]
        %v1137 = vld [vmem:[%s1 + $0x174] sm:$0xf]
        %v1138 = vld [vmem:[%s1 + $0x178] sm:$0xf]
        %v1139 = vld [vmem:[%s1 + $0x17c] sm:$0xf]
        %v1140 = vld [vmem:[%s1 + $0x180] sm:$0xf]
        %v1141 = vld [vmem:[%s1 + $0x184] sm:$0xf]
        %v1142 = vld [vmem:[%s1 + $0x188] sm:$0xf]
        %v1143 = vld [vmem:[%s1 + $0x18c] sm:$0xf]
        %v1144 = vld [vmem:[%s1 + $0x190] sm:$0xf]
        %v1145 = vld [vmem:[%s1 + $0x194] sm:$0xf]
        %v1146 = vld [vmem:[%s1 + $0x198] sm:$0xf]
        %v1147 = vld [vmem:[%s1 + $0x19c] sm:$0xf]
        %v1148 = vld [vmem:[%s1 + $0x1a0] sm:$0xf]
        %v1149 = vld [vmem:[%s1 + $0x1a4] sm:$0xf]
        %v1150 = vld [vmem:[%s1 + $0x1a8] sm:$0xf]
        %v1151 = vld [vmem:[%s1 + $0x1ac] sm:$0xf]
        %v1152 = vld [vmem:[%s1 + $0x1b0] sm:$0xf]
        %v1153 = vld [vmem:[%s1 + $0x1b4] sm:$0xf]
        %v1154 = vld [vmem:[%s1 + $0x1b8] sm:$0xf]
        %v1155 = vld [vmem:[%s1 + $0x1bc] sm:$0xf]
        %v1156 = vld [vmem:[%s1 + $0x1c0] sm:$0xf]
        %v1157 = vld [vmem:[%s1 + $0x1c4] sm:$0xf]
        %v1158 = vld [vmem:[%s1 + $0x1c8] sm:$0xf]
        %v1159 = vld [vmem:[%s1 + $0x1cc] sm:$0xf]
        %v1160 = vld [vmem:[%s1 + $0x1d0] sm:$0xf]
        %v1161 = vld [vmem:[%s1 + $0x1d4] sm:$0xf]
        %v1162 = vld [vmem:[%s1 + $0x1d8] sm:$0xf]
        %v1163 = vld [vmem:[%s1 + $0x1dc] sm:$0xf]
        %v1164 = vld [vmem:[%s1 + $0x1e0] sm:$0xf]
        %v1165 = vld [vmem:[%s1 + $0x1e4] sm:$0xf]
        %v1166 = vld [vmem:[%s1 + $0x1e8] sm:$0xf]
        %v1167 = vld [vmem:[%s1 + $0x1ec] sm:$0xf]
        %v1168 = vld [vmem:[%s1 + $0x1f0] sm:$0xf]
        %v1169 = vld [vmem:[%s1 + $0x1f4] sm:$0xf]
        %v1170 = vld [vmem:[%s1 + $0x1f8] sm:$0xf]
        %v1171 = vld [vmem:[%s1 + $0x1fc] sm:$0xf]
        %v1172 = vld [vmem:[%s1 + $0x200] sm:$0xf]
        %v1173 = vld [vmem:[%s1 + $0x204] sm:$0xf]
        %v1174 = vld [vmem:[%s1 + $0x208] sm:$0xf]
        %v1175 = vld [vmem:[%s1 + $0x20c] sm:$0xf]
        %v1176 = vld [vmem:[%s1 + $0x210] sm:$0xf]
        %v1177 = vld [vmem:[%s1 + $0x214] sm:$0xf]
        %v1178 = vld [vmem:[%s1 + $0x218] sm:$0xf]
        %v1179 = vld [vmem:[%s1 + $0x21c] sm:$0xf]
        %v1180 = vld [vmem:[%s1 + $0x220] sm:$0xf]
        %v1181 = vld [vmem:[%s1 + $0x224] sm:$0xf]
        %v1182 = vld [vmem:[%s1 + $0x228] sm:$0xf]
        %v1183 = vld [vmem:[%s1 + $0x22c] sm:$0xf]
        %v1184 = vld [vmem:[%s1 + $0x230] sm:$0xf]
        %v1185 = vld [vmem:[%s1 + $0x234] sm:$0xf]
        %v1186 = vld [vmem:[%s1 + $0x238] sm:$0xf]
        %v1187 = vld [vmem:[%s1 + $0x23c] sm:$0xf]
        %v1189 = vlaneseq
        %v1190 = vshrl.u32 %v1189, 7
        %v1191 = vsub.s32 0, %v1190
        %v1192 = vrot.slane %v498, %v1191
        %v1338 = vunpack.c.l.b16 %v1044
        %v1339 = vunpack.c.l.b16 %v1045
        %v1340 = vunpack.c.l.b16 %v1046
        %v1341 = vunpack.c.l.b16 %v1047
        %v1342 = vunpack.c.l.b16 %v1048
        %v1343 = vunpack.c.l.b16 %v1049
        %v1344 = vunpack.c.l.b16 %v1050
        %v1345 = vunpack.c.l.b16 %v1051
        %v1346 = vunpack.c.l.b16 %v1052
        %v1347 = vunpack.c.l.b16 %v1053
        %v1348 = vunpack.c.l.b16 %v1054
        %v1349 = vunpack.c.l.b16 %v1055
        %v1350 = vunpack.c.l.b16 %v1056
        %v1351 = vunpack.c.l.b16 %v1057
        %v1352 = vunpack.c.l.b16 %v1058
        %v1353 = vunpack.c.l.b16 %v1059
        %v1354 = vunpack.c.l.b16 %v1060
        %v1355 = vunpack.c.l.b16 %v1061
        %v1356 = vunpack.c.l.b16 %v1062
        %v1357 = vunpack.c.l.b16 %v1063
        %v1358 = vunpack.c.l.b16 %v1064
        %v1359 = vunpack.c.l.b16 %v1065
        %v1360 = vunpack.c.l.b16 %v1066
        %v1361 = vunpack.c.l.b16 %v1067
        %v1362 = vunpack.c.l.b16 %v1068
        %v1363 = vunpack.c.l.b16 %v1069
        %v1364 = vunpack.c.l.b16 %v1070
        %v1365 = vunpack.c.l.b16 %v1071
        %v1366 = vunpack.c.l.b16 %v1072
        %v1367 = vunpack.c.l.b16 %v1073
        %v1368 = vunpack.c.l.b16 %v1074
        %v1369 = vunpack.c.l.b16 %v1075
        %v1370 = vunpack.c.l.b16 %v1076
        %v1371 = vunpack.c.l.b16 %v1077
        %v1372 = vunpack.c.l.b16 %v1078
        %v1373 = vunpack.c.l.b16 %v1079
        %v1374 = vunpack.c.l.b16 %v1080
        %v1375 = vunpack.c.l.b16 %v1081
        %v1376 = vunpack.c.l.b16 %v1082
        %v1377 = vunpack.c.l.b16 %v1083
        %v1378 = vunpack.c.l.b16 %v1084
        %v1379 = vunpack.c.l.b16 %v1085
        %v1380 = vunpack.c.l.b16 %v1086
        %v1381 = vunpack.c.l.b16 %v1087
        %v1382 = vunpack.c.l.b16 %v1088
        %v1383 = vunpack.c.l.b16 %v1089
        %v1384 = vunpack.c.l.b16 %v1090
        %v1385 = vunpack.c.l.b16 %v1091
        %v1386 = vunpack.c.l.b16 %v1092
        %v1387 = vunpack.c.l.b16 %v1093
        %v1388 = vunpack.c.l.b16 %v1094
        %v1389 = vunpack.c.l.b16 %v1095
        %v1390 = vunpack.c.l.b16 %v1096
        %v1391 = vunpack.c.l.b16 %v1097
        %v1392 = vunpack.c.l.b16 %v1098
        %v1393 = vunpack.c.l.b16 %v1099
        %v1394 = vunpack.c.l.b16 %v1100
        %v1395 = vunpack.c.l.b16 %v1101
        %v1396 = vunpack.c.l.b16 %v1102
        %v1397 = vunpack.c.l.b16 %v1103
        %v1398 = vunpack.c.l.b16 %v1104
        %v1399 = vunpack.c.l.b16 %v1105
        %v1400 = vunpack.c.l.b16 %v1106
        %v1401 = vunpack.c.l.b16 %v1107
        %v1402 = vunpack.c.l.b16 %v1108
        %v1403 = vunpack.c.l.b16 %v1109
        %v1404 = vunpack.c.l.b16 %v1110
        %v1405 = vunpack.c.l.b16 %v1111
        %v1406 = vunpack.c.l.b16 %v1112
        %v1407 = vunpack.c.l.b16 %v1113
        %v1408 = vunpack.c.l.b16 %v1114
        %v1409 = vunpack.c.l.b16 %v1115
        %v1410 = vunpack.c.l.b16 %v1116
        %v1411 = vunpack.c.l.b16 %v1117
        %v1412 = vunpack.c.l.b16 %v1118
        %v1413 = vunpack.c.l.b16 %v1119
        %v1414 = vunpack.c.l.b16 %v1120
        %v1415 = vunpack.c.l.b16 %v1121
        %v1416 = vunpack.c.l.b16 %v1122
        %v1417 = vunpack.c.l.b16 %v1123
        %v1418 = vunpack.c.l.b16 %v1124
        %v1419 = vunpack.c.l.b16 %v1125
        %v1420 = vunpack.c.l.b16 %v1126
        %v1421 = vunpack.c.l.b16 %v1127
        %v1422 = vunpack.c.l.b16 %v1128
        %v1423 = vunpack.c.l.b16 %v1129
        %v1424 = vunpack.c.l.b16 %v1130
        %v1425 = vunpack.c.l.b16 %v1131
        %v1426 = vunpack.c.l.b16 %v1132
        %v1427 = vunpack.c.l.b16 %v1133
        %v1428 = vunpack.c.l.b16 %v1134
        %v1429 = vunpack.c.l.b16 %v1135
        %v1430 = vunpack.c.l.b16 %v1136
        %v1431 = vunpack.c.l.b16 %v1137
        %v1432 = vunpack.c.l.b16 %v1138
        %v1433 = vunpack.c.l.b16 %v1139
        %v1434 = vunpack.c.l.b16 %v1140
        %v1435 = vunpack.c.l.b16 %v1141
        %v1436 = vunpack.c.l.b16 %v1142
        %v1437 = vunpack.c.l.b16 %v1143
        %v1438 = vunpack.c.l.b16 %v1144
        %v1439 = vunpack.c.l.b16 %v1145
        %v1440 = vunpack.c.l.b16 %v1146
        %v1441 = vunpack.c.l.b16 %v1147
        %v1442 = vunpack.c.l.b16 %v1148
        %v1443 = vunpack.c.l.b16 %v1149
        %v1444 = vunpack.c.l.b16 %v1150
        %v1445 = vunpack.c.l.b16 %v1151
        %v1446 = vunpack.c.l.b16 %v1152
        %v1447 = vunpack.c.l.b16 %v1153
        %v1448 = vunpack.c.l.b16 %v1154
        %v1449 = vunpack.c.l.b16 %v1155
        %v1450 = vunpack.c.l.b16 %v1156
        %v1451 = vunpack.c.l.b16 %v1157
        %v1452 = vunpack.c.l.b16 %v1158
        %v1453 = vunpack.c.l.b16 %v1159
        %v1454 = vunpack.c.l.b16 %v1160
        %v1455 = vunpack.c.l.b16 %v1161
        %v1456 = vunpack.c.l.b16 %v1162
        %v1457 = vunpack.c.l.b16 %v1163
        %v1458 = vunpack.c.l.b16 %v1164
        %v1459 = vunpack.c.l.b16 %v1165
        %v1460 = vunpack.c.l.b16 %v1166
        %v1461 = vunpack.c.l.b16 %v1167
        %v1462 = vunpack.c.l.b16 %v1168
        %v1463 = vunpack.c.l.b16 %v1169
        %v1464 = vunpack.c.l.b16 %v1170
        %v1465 = vunpack.c.l.b16 %v1171
        %v1466 = vunpack.c.l.b16 %v1172
        %v1467 = vunpack.c.l.b16 %v1173
        %v1468 = vunpack.c.l.b16 %v1174
        %v1469 = vunpack.c.l.b16 %v1175
        %v1470 = vunpack.c.l.b16 %v1176
        %v1471 = vunpack.c.l.b16 %v1177
        %v1472 = vunpack.c.l.b16 %v1178
        %v1473 = vunpack.c.l.b16 %v1179
        %v1474 = vunpack.c.l.b16 %v1180
        %v1475 = vunpack.c.l.b16 %v1181
        %v1476 = vunpack.c.l.b16 %v1182
        %v1477 = vunpack.c.l.b16 %v1183
        %v1478 = vunpack.c.l.b16 %v1184
        %v1479 = vunpack.c.l.b16 %v1185
        %v1480 = vunpack.c.l.b16 %v1186
        %v1481 = vunpack.c.l.b16 %v1187
        %v1482 = vpack.c.b16 %v1339, %v1338
        %v1483 = vpack.c.b16 %v1341, %v1340
        %v1484 = vpack.c.b16 %v1343, %v1342
        %v1485 = vpack.c.b16 %v1345, %v1344
        %v1486 = vpack.c.b16 %v1347, %v1346
        %v1487 = vpack.c.b16 %v1349, %v1348
        %v1488 = vpack.c.b16 %v1351, %v1350
        %v1489 = vpack.c.b16 %v1353, %v1352
        %v1490 = vpack.c.b16 %v1355, %v1354
        %v1491 = vpack.c.b16 %v1357, %v1356
        %v1492 = vpack.c.b16 %v1359, %v1358
        %v1493 = vpack.c.b16 %v1361, %v1360
        %v1494 = vpack.c.b16 %v1363, %v1362
        %v1495 = vpack.c.b16 %v1365, %v1364
        %v1496 = vpack.c.b16 %v1367, %v1366
        %v1497 = vpack.c.b16 %v1369, %v1368
        %v1498 = vpack.c.b16 %v1371, %v1370
        %v1499 = vpack.c.b16 %v1373, %v1372
        %v1500 = vpack.c.b16 %v1375, %v1374
        %v1501 = vpack.c.b16 %v1377, %v1376
        %v1502 = vpack.c.b16 %v1379, %v1378
        %v1503 = vpack.c.b16 %v1381, %v1380
        %v1504 = vpack.c.b16 %v1383, %v1382
        %v1505 = vpack.c.b16 %v1385, %v1384
        %v1506 = vpack.c.b16 %v1387, %v1386
        %v1507 = vpack.c.b16 %v1389, %v1388
        %v1508 = vpack.c.b16 %v1391, %v1390
        %v1509 = vpack.c.b16 %v1393, %v1392
        %v1510 = vpack.c.b16 %v1395, %v1394
        %v1511 = vpack.c.b16 %v1397, %v1396
        %v1512 = vpack.c.b16 %v1399, %v1398
        %v1513 = vpack.c.b16 %v1401, %v1400
        %v1514 = vpack.c.b16 %v1403, %v1402
        %v1515 = vpack.c.b16 %v1405, %v1404
        %v1516 = vpack.c.b16 %v1407, %v1406
        %v1517 = vpack.c.b16 %v1409, %v1408
        %v1518 = vpack.c.b16 %v1411, %v1410
        %v1519 = vpack.c.b16 %v1413, %v1412
        %v1520 = vpack.c.b16 %v1415, %v1414
        %v1521 = vpack.c.b16 %v1417, %v1416
        %v1522 = vpack.c.b16 %v1419, %v1418
        %v1523 = vpack.c.b16 %v1421, %v1420
        %v1524 = vpack.c.b16 %v1423, %v1422
        %v1525 = vpack.c.b16 %v1425, %v1424
        %v1526 = vpack.c.b16 %v1427, %v1426
        %v1527 = vpack.c.b16 %v1429, %v1428
        %v1528 = vpack.c.b16 %v1431, %v1430
        %v1529 = vpack.c.b16 %v1433, %v1432
        %v1530 = vpack.c.b16 %v1435, %v1434
        %v1531 = vpack.c.b16 %v1437, %v1436
        %v1532 = vpack.c.b16 %v1439, %v1438
        %v1533 = vpack.c.b16 %v1441, %v1440
        %v1534 = vpack.c.b16 %v1443, %v1442
        %v1535 = vpack.c.b16 %v1445, %v1444
        %v1536 = vpack.c.b16 %v1447, %v1446
        %v1537 = vpack.c.b16 %v1449, %v1448
        %v1538 = vpack.c.b16 %v1451, %v1450
        %v1539 = vpack.c.b16 %v1453, %v1452
        %v1540 = vpack.c.b16 %v1455, %v1454
        %v1541 = vpack.c.b16 %v1457, %v1456
        %v1542 = vpack.c.b16 %v1459, %v1458
        %v1543 = vpack.c.b16 %v1461, %v1460
        %v1544 = vpack.c.b16 %v1463, %v1462
        %v1545 = vpack.c.b16 %v1465, %v1464
        %v1546 = vpack.c.b16 %v1467, %v1466
        %v1547 = vpack.c.b16 %v1469, %v1468
        %v1548 = vpack.c.b16 %v1471, %v1470
        %v1549 = vpack.c.b16 %v1473, %v1472
        %v1550 = vpack.c.b16 %v1475, %v1474
        %v1551 = vpack.c.b16 %v1477, %v1476
        %v1552 = vpack.c.b16 %v1479, %v1478
        %v1553 = vpack.c.b16 %v1481, %v1480
        %1626 = vmatprep.subr.bf16.mxu0 0
        %1627 = vmatpush1.bf16.msra.mxu0 %v1489
        %1628 = vmatprep.subr.bf16.mxu0 0
        %1629 = vmatpush1.bf16.msra.mxu0 %v1488
        %1630 = vmatprep.subr.bf16.mxu0 0
        %1631 = vmatpush1.bf16.msra.mxu0 %v1487
        %1632 = vmatprep.subr.bf16.mxu0 0
        %1633 = vmatpush1.bf16.msra.mxu0 %v1486
        %1634 = vmatprep.subr.bf16.mxu0 0
        %1635 = vmatpush1.bf16.msra.mxu0 %v1485
        %1636 = vmatprep.subr.bf16.mxu0 0
        %1637 = vmatpush1.bf16.msra.mxu0 %v1484
        %1638 = vmatprep.subr.bf16.mxu0 0
        %1639 = vmatpush1.bf16.msra.mxu0 %v1483
        %1640 = vmatprep.subr.bf16.mxu0 0
        %1641 = vmatpush1.bf16.msra.mxu0 %v1482
        %1642 = vmatprep.subr.bf16.mxu0 0
        %1643 = vmatpush2.bf16.msra.mxu0 %v1497
        %1644 = vmatprep.subr.bf16.mxu0 0
        %1645 = vmatpush2.bf16.msra.mxu0 %v1496
        %1646 = vmatprep.subr.bf16.mxu0 0
        %1647 = vmatpush2.bf16.msra.mxu0 %v1495
        %1648 = vmatprep.subr.bf16.mxu0 0
        %1649 = vmatpush2.bf16.msra.mxu0 %v1494
        %1650 = vmatprep.subr.bf16.mxu0 0
        %1651 = vmatpush2.bf16.msra.mxu0 %v1493
        %1652 = vmatprep.subr.bf16.mxu0 0
        %1653 = vmatpush2.bf16.msra.mxu0 %v1492
        %1654 = vmatprep.subr.bf16.mxu0 0
        %1655 = vmatpush2.bf16.msra.mxu0 %v1491
        %1656 = vmatprep.subr.bf16.mxu0 0
        %1657 = vmatpush2.bf16.msra.mxu0 %v1490
        %1658 = vmatprep.mubr.bf16.mxu0 %v691
        %1659 = vmatmul.mubr.bf16.gmra.mxu0 %v643
        %v1660 = vpop.f32.mrf.mxu0
        %v1661 = vadd.f32 %v1192, %v1660
        %v1662 = vpop.f32.mrf.mxu0
        %v1663 = vpop.f32.mrf.mxu0
        %v1664 = vadd.f32 %v1192, %v1663
        %v1665 = vpop.f32.mrf.mxu0
        %1666 = vmatprep.mubr.bf16.mxu0 %v692
        %1667 = vmatmul.mubr.bf16.gmra.mxu0 %v644
        %v1668 = vpop.f32.mrf.mxu0
        %v1669 = vadd.f32 %v1192, %v1668
        %v1670 = vpop.f32.mrf.mxu0
        %v1671 = vpop.f32.mrf.mxu0
        %v1672 = vadd.f32 %v1192, %v1671
        %v1673 = vpop.f32.mrf.mxu0
        %1674 = vmatprep.mubr.bf16.mxu0 %v693
        %1675 = vmatmul.mubr.bf16.gmra.mxu0 %v645
        %v1676 = vpop.f32.mrf.mxu0
        %v1677 = vadd.f32 %v1192, %v1676
        %v1678 = vpop.f32.mrf.mxu0
        %v1679 = vpop.f32.mrf.mxu0
        %v1680 = vadd.f32 %v1192, %v1679
        %v1681 = vpop.f32.mrf.mxu0
        %1682 = vmatprep.mubr.bf16.mxu0 %v694
        %1683 = vmatmul.mubr.bf16.gmra.mxu0 %v646
        %v1684 = vpop.f32.mrf.mxu0
        %v1685 = vadd.f32 %v1192, %v1684
        %v1686 = vpop.f32.mrf.mxu0
        %v1687 = vpop.f32.mrf.mxu0
        %v1688 = vadd.f32 %v1192, %v1687
        %v1689 = vpop.f32.mrf.mxu0
        %1690 = vmatprep.mubr.bf16.mxu0 %v695
        %1691 = vmatmul.mubr.bf16.gmra.mxu0 %v647
        %v1692 = vpop.f32.mrf.mxu0
        %v1693 = vadd.f32 %v1192, %v1692
        %v1694 = vpop.f32.mrf.mxu0
        %v1695 = vpop.f32.mrf.mxu0
        %v1696 = vadd.f32 %v1192, %v1695
        %v1697 = vpop.f32.mrf.mxu0
        %1698 = vmatprep.mubr.bf16.mxu0 %v696
        %1699 = vmatmul.mubr.bf16.gmra.mxu0 %v648
        %v1700 = vpop.f32.mrf.mxu0
        %v1701 = vadd.f32 %v1192, %v1700
        %v1702 = vpop.f32.mrf.mxu0
        %v1703 = vpop.f32.mrf.mxu0
        %v1704 = vadd.f32 %v1192, %v1703
        %v1705 = vpop.f32.mrf.mxu0
        %1706 = vmatprep.mubr.bf16.mxu0 %v697
        %1707 = vmatmul.mubr.bf16.gmra.mxu0 %v649
        %v1708 = vpop.f32.mrf.mxu0
        %v1709 = vadd.f32 %v1192, %v1708
        %v1710 = vpop.f32.mrf.mxu0
        %v1711 = vpop.f32.mrf.mxu0
        %v1712 = vadd.f32 %v1192, %v1711
        %v1713 = vpop.f32.mrf.mxu0
        %1714 = vmatprep.mubr.bf16.mxu0 %v698
        %1715 = vmatmul.mubr.bf16.gmra.mxu0 %v650
        %v1716 = vpop.f32.mrf.mxu0
        %v1717 = vadd.f32 %v1192, %v1716
        %v1718 = vpop.f32.mrf.mxu0
        %v1719 = vpop.f32.mrf.mxu0
        %v1720 = vadd.f32 %v1192, %v1719
        %v1721 = vpop.f32.mrf.mxu0
        %1722 = vmatprep.mubr.bf16.mxu0 %v699
        %1723 = vmatmul.mubr.bf16.gmra.mxu0 %v651
        %v1724 = vpop.f32.mrf.mxu0
        %v1725 = vadd.f32 %v1192, %v1724
        %v1726 = vpop.f32.mrf.mxu0
        %v1727 = vpop.f32.mrf.mxu0
        %v1728 = vadd.f32 %v1192, %v1727
        %v1729 = vpop.f32.mrf.mxu0
        %1730 = vmatprep.mubr.bf16.mxu0 %v700
        %1731 = vmatmul.mubr.bf16.gmra.mxu0 %v652
        %v1732 = vpop.f32.mrf.mxu0
        %v1733 = vadd.f32 %v1192, %v1732
        %v1734 = vpop.f32.mrf.mxu0
        %v1735 = vpop.f32.mrf.mxu0
        %v1736 = vadd.f32 %v1192, %v1735
        %v1737 = vpop.f32.mrf.mxu0
        %1738 = vmatprep.mubr.bf16.mxu0 %v701
        %1739 = vmatmul.mubr.bf16.gmra.mxu0 %v653
        %v1740 = vpop.f32.mrf.mxu0
        %v1741 = vadd.f32 %v1192, %v1740
        %v1742 = vpop.f32.mrf.mxu0
        %v1743 = vpop.f32.mrf.mxu0
        %v1744 = vadd.f32 %v1192, %v1743
        %v1745 = vpop.f32.mrf.mxu0
        %1746 = vmatprep.mubr.bf16.mxu0 %v702
        %1747 = vmatmul.mubr.bf16.gmra.mxu0 %v654
        %v1748 = vpop.f32.mrf.mxu0
        %v1749 = vadd.f32 %v1192, %v1748
        %v1750 = vpop.f32.mrf.mxu0
        %v1751 = vpop.f32.mrf.mxu0
        %v1752 = vadd.f32 %v1192, %v1751
        %v1753 = vpop.f32.mrf.mxu0
        %1754 = vmatprep.mubr.bf16.mxu0 %v703
        %1755 = vmatmul.mubr.bf16.gmra.mxu0 %v655
        %v1756 = vpop.f32.mrf.mxu0
        %v1757 = vadd.f32 %v1192, %v1756
        %v1758 = vpop.f32.mrf.mxu0
        %v1759 = vpop.f32.mrf.mxu0
        %v1760 = vadd.f32 %v1192, %v1759
        %v1761 = vpop.f32.mrf.mxu0
        %1762 = vmatprep.mubr.bf16.mxu0 %v704
        %1763 = vmatmul.mubr.bf16.gmra.mxu0 %v656
        %v1764 = vpop.f32.mrf.mxu0
        %v1765 = vadd.f32 %v1192, %v1764
        %v1766 = vpop.f32.mrf.mxu0
        %v1767 = vpop.f32.mrf.mxu0
        %v1768 = vadd.f32 %v1192, %v1767
        %v1769 = vpop.f32.mrf.mxu0
        %1770 = vmatprep.mubr.bf16.mxu0 %v705
        %1771 = vmatmul.mubr.bf16.gmra.mxu0 %v657
        %v1772 = vpop.f32.mrf.mxu0
        %v1773 = vadd.f32 %v1192, %v1772
        %v1774 = vpop.f32.mrf.mxu0
        %v1775 = vpop.f32.mrf.mxu0
        %v1776 = vadd.f32 %v1192, %v1775
        %v1777 = vpop.f32.mrf.mxu0
        %1778 = vmatprep.mubr.bf16.mxu0 %v706
        %1779 = vmatmul.mubr.bf16.gmra.mxu0 %v658
        %v1780 = vpop.f32.mrf.mxu0
        %v1781 = vadd.f32 %v1192, %v1780
        %v1782 = vpop.f32.mrf.mxu0
        %v1783 = vpop.f32.mrf.mxu0
        %v1784 = vadd.f32 %v1192, %v1783
        %v1785 = vpop.f32.mrf.mxu0
        %1786 = vdwg.mxu0
        %1787 = vmatprep.subr.bf16.mxu0 0
        %1788 = vmatpush1.bf16.msra.mxu0 %v1505
        %1789 = vmatprep.subr.bf16.mxu0 0
        %1790 = vmatpush1.bf16.msra.mxu0 %v1504
        %1791 = vmatprep.subr.bf16.mxu0 0
        %1792 = vmatpush1.bf16.msra.mxu0 %v1503
        %1793 = vmatprep.subr.bf16.mxu0 0
        %1794 = vmatpush1.bf16.msra.mxu0 %v1502
        %1795 = vmatprep.subr.bf16.mxu0 0
        %1796 = vmatpush1.bf16.msra.mxu0 %v1501
        %1797 = vmatprep.subr.bf16.mxu0 0
        %1798 = vmatpush1.bf16.msra.mxu0 %v1500
        %1799 = vmatprep.subr.bf16.mxu0 0
        %1800 = vmatpush1.bf16.msra.mxu0 %v1499
        %1801 = vmatprep.subr.bf16.mxu0 0
        %1802 = vmatpush1.bf16.msra.mxu0 %v1498
        %1803 = vmatprep.subr.bf16.mxu0 0
        %1804 = vmatpush2.bf16.msra.mxu0 %v1513
        %1805 = vmatprep.subr.bf16.mxu0 0
        %1806 = vmatpush2.bf16.msra.mxu0 %v1512
        %1807 = vmatprep.subr.bf16.mxu0 0
        %1808 = vmatpush2.bf16.msra.mxu0 %v1511
        %1809 = vmatprep.subr.bf16.mxu0 0
        %1810 = vmatpush2.bf16.msra.mxu0 %v1510
        %1811 = vmatprep.subr.bf16.mxu0 0
        %1812 = vmatpush2.bf16.msra.mxu0 %v1509
        %1813 = vmatprep.subr.bf16.mxu0 0
        %1814 = vmatpush2.bf16.msra.mxu0 %v1508
        %1815 = vmatprep.subr.bf16.mxu0 0
        %1816 = vmatpush2.bf16.msra.mxu0 %v1507
        %1817 = vmatprep.subr.bf16.mxu0 0
        %1818 = vmatpush2.bf16.msra.mxu0 %v1506
        %1819 = vmatprep.mubr.bf16.mxu0 %v787
        %1820 = vmatmul.mubr.bf16.gmra.mxu0 %v739
        %v1821 = vpop.f32.mrf.mxu0
        %v1822 = vadd.f32 %v1661, %v1821
        %v1823 = vpop.f32.mrf.mxu0
        %v1824 = vpop.f32.mrf.mxu0
        %v1825 = vadd.f32 %v1664, %v1824
        %v1826 = vpop.f32.mrf.mxu0
        %1827 = vmatprep.mubr.bf16.mxu0 %v788
        %1828 = vmatmul.mubr.bf16.gmra.mxu0 %v740
        %v1829 = vpop.f32.mrf.mxu0
        %v1830 = vadd.f32 %v1669, %v1829
        %v1831 = vpop.f32.mrf.mxu0
        %v1832 = vpop.f32.mrf.mxu0
        %v1833 = vadd.f32 %v1672, %v1832
        %v1834 = vpop.f32.mrf.mxu0
        %1835 = vmatprep.mubr.bf16.mxu0 %v789
        %1836 = vmatmul.mubr.bf16.gmra.mxu0 %v741
        %v1837 = vpop.f32.mrf.mxu0
        %v1838 = vadd.f32 %v1677, %v1837
        %v1839 = vpop.f32.mrf.mxu0
        %v1840 = vpop.f32.mrf.mxu0
        %v1841 = vadd.f32 %v1680, %v1840
        %v1842 = vpop.f32.mrf.mxu0
        %1843 = vmatprep.mubr.bf16.mxu0 %v790
        %1844 = vmatmul.mubr.bf16.gmra.mxu0 %v742
        %v1845 = vpop.f32.mrf.mxu0
        %v1846 = vadd.f32 %v1685, %v1845
        %v1847 = vpop.f32.mrf.mxu0
        %v1848 = vpop.f32.mrf.mxu0
        %v1849 = vadd.f32 %v1688, %v1848
        %v1850 = vpop.f32.mrf.mxu0
        %1851 = vmatprep.mubr.bf16.mxu0 %v791
        %1852 = vmatmul.mubr.bf16.gmra.mxu0 %v743
        %v1853 = vpop.f32.mrf.mxu0
        %v1854 = vadd.f32 %v1693, %v1853
        %v1855 = vpop.f32.mrf.mxu0
        %v1856 = vpop.f32.mrf.mxu0
        %v1857 = vadd.f32 %v1696, %v1856
        %v1858 = vpop.f32.mrf.mxu0
        %1859 = vmatprep.mubr.bf16.mxu0 %v792
        %1860 = vmatmul.mubr.bf16.gmra.mxu0 %v744
        %v1861 = vpop.f32.mrf.mxu0
        %v1862 = vadd.f32 %v1701, %v1861
        %v1863 = vpop.f32.mrf.mxu0
        %v1864 = vpop.f32.mrf.mxu0
        %v1865 = vadd.f32 %v1704, %v1864
        %v1866 = vpop.f32.mrf.mxu0
        %1867 = vmatprep.mubr.bf16.mxu0 %v793
        %1868 = vmatmul.mubr.bf16.gmra.mxu0 %v745
        %v1869 = vpop.f32.mrf.mxu0
        %v1870 = vadd.f32 %v1709, %v1869
        %v1871 = vpop.f32.mrf.mxu0
        %v1872 = vpop.f32.mrf.mxu0
        %v1873 = vadd.f32 %v1712, %v1872
        %v1874 = vpop.f32.mrf.mxu0
        %1875 = vmatprep.mubr.bf16.mxu0 %v794
        %1876 = vmatmul.mubr.bf16.gmra.mxu0 %v746
        %v1877 = vpop.f32.mrf.mxu0
        %v1878 = vadd.f32 %v1717, %v1877
        %v1879 = vpop.f32.mrf.mxu0
        %v1880 = vpop.f32.mrf.mxu0
        %v1881 = vadd.f32 %v1720, %v1880
        %v1882 = vpop.f32.mrf.mxu0
        %1883 = vmatprep.mubr.bf16.mxu0 %v795
        %1884 = vmatmul.mubr.bf16.gmra.mxu0 %v747
        %v1885 = vpop.f32.mrf.mxu0
        %v1886 = vadd.f32 %v1725, %v1885
        %v1887 = vpop.f32.mrf.mxu0
        %v1888 = vpop.f32.mrf.mxu0
        %v1889 = vadd.f32 %v1728, %v1888
        %v1890 = vpop.f32.mrf.mxu0
        %1891 = vmatprep.mubr.bf16.mxu0 %v796
        %1892 = vmatmul.mubr.bf16.gmra.mxu0 %v748
        %v1893 = vpop.f32.mrf.mxu0
        %v1894 = vadd.f32 %v1733, %v1893
        %v1895 = vpop.f32.mrf.mxu0
        %v1896 = vpop.f32.mrf.mxu0
        %v1897 = vadd.f32 %v1736, %v1896
        %v1898 = vpop.f32.mrf.mxu0
        %1899 = vmatprep.mubr.bf16.mxu0 %v797
        %1900 = vmatmul.mubr.bf16.gmra.mxu0 %v749
        %v1901 = vpop.f32.mrf.mxu0
        %v1902 = vadd.f32 %v1741, %v1901
        %v1903 = vpop.f32.mrf.mxu0
        %v1904 = vpop.f32.mrf.mxu0
        %v1905 = vadd.f32 %v1744, %v1904
        %v1906 = vpop.f32.mrf.mxu0
        %1907 = vmatprep.mubr.bf16.mxu0 %v798
        %1908 = vmatmul.mubr.bf16.gmra.mxu0 %v750
        %v1909 = vpop.f32.mrf.mxu0
        %v1910 = vadd.f32 %v1749, %v1909
        %v1911 = vpop.f32.mrf.mxu0
        %v1912 = vpop.f32.mrf.mxu0
        %v1913 = vadd.f32 %v1752, %v1912
        %v1914 = vpop.f32.mrf.mxu0
        %1915 = vmatprep.mubr.bf16.mxu0 %v799
        %1916 = vmatmul.mubr.bf16.gmra.mxu0 %v751
        %v1917 = vpop.f32.mrf.mxu0
        %v1918 = vadd.f32 %v1757, %v1917
        %v1919 = vpop.f32.mrf.mxu0
        %v1920 = vpop.f32.mrf.mxu0
        %v1921 = vadd.f32 %v1760, %v1920
        %v1922 = vpop.f32.mrf.mxu0
        %1923 = vmatprep.mubr.bf16.mxu0 %v800
        %1924 = vmatmul.mubr.bf16.gmra.mxu0 %v752
        %v1925 = vpop.f32.mrf.mxu0
        %v1926 = vadd.f32 %v1765, %v1925
        %v1927 = vpop.f32.mrf.mxu0
        %v1928 = vpop.f32.mrf.mxu0
        %v1929 = vadd.f32 %v1768, %v1928
        %v1930 = vpop.f32.mrf.mxu0
        %1931 = vmatprep.mubr.bf16.mxu0 %v801
        %1932 = vmatmul.mubr.bf16.gmra.mxu0 %v753
        %v1933 = vpop.f32.mrf.mxu0
        %v1934 = vadd.f32 %v1773, %v1933
        %v1935 = vpop.f32.mrf.mxu0
        %v1936 = vpop.f32.mrf.mxu0
        %v1937 = vadd.f32 %v1776, %v1936
        %v1938 = vpop.f32.mrf.mxu0
        %1939 = vmatprep.mubr.bf16.mxu0 %v802
        %1940 = vmatmul.mubr.bf16.gmra.mxu0 %v754
        %v1941 = vpop.f32.mrf.mxu0
        %v1942 = vadd.f32 %v1781, %v1941
        %v1943 = vpop.f32.mrf.mxu0
        %v1944 = vpop.f32.mrf.mxu0
        %v1945 = vadd.f32 %v1784, %v1944
        %v1946 = vpop.f32.mrf.mxu0
        %1947 = vdwg.mxu0
        %1948 = vmatprep.subr.bf16.mxu0 0
        %1949 = vmatpush1.bf16.msra.mxu0 %v1521
        %1950 = vmatprep.subr.bf16.mxu0 0
        %1951 = vmatpush1.bf16.msra.mxu0 %v1520
        %1952 = vmatprep.subr.bf16.mxu0 0
        %1953 = vmatpush1.bf16.msra.mxu0 %v1519
        %1954 = vmatprep.subr.bf16.mxu0 0
        %1955 = vmatpush1.bf16.msra.mxu0 %v1518
        %1956 = vmatprep.subr.bf16.mxu0 0
        %1957 = vmatpush1.bf16.msra.mxu0 %v1517
        %1958 = vmatprep.subr.bf16.mxu0 0
        %1959 = vmatpush1.bf16.msra.mxu0 %v1516
        %1960 = vmatprep.subr.bf16.mxu0 0
        %1961 = vmatpush1.bf16.msra.mxu0 %v1515
        %1962 = vmatprep.subr.bf16.mxu0 0
        %1963 = vmatpush1.bf16.msra.mxu0 %v1514
        %1964 = vmatprep.subr.bf16.mxu0 0
        %1965 = vmatpush2.bf16.msra.mxu0 %v1529
        %1966 = vmatprep.subr.bf16.mxu0 0
        %1967 = vmatpush2.bf16.msra.mxu0 %v1528
        %1968 = vmatprep.subr.bf16.mxu0 0
        %1969 = vmatpush2.bf16.msra.mxu0 %v1527
        %1970 = vmatprep.subr.bf16.mxu0 0
        %1971 = vmatpush2.bf16.msra.mxu0 %v1526
        %1972 = vmatprep.subr.bf16.mxu0 0
        %1973 = vmatpush2.bf16.msra.mxu0 %v1525
        %1974 = vmatprep.subr.bf16.mxu0 0
        %1975 = vmatpush2.bf16.msra.mxu0 %v1524
        %1976 = vmatprep.subr.bf16.mxu0 0
        %1977 = vmatpush2.bf16.msra.mxu0 %v1523
        %1978 = vmatprep.subr.bf16.mxu0 0
        %1979 = vmatpush2.bf16.msra.mxu0 %v1522
        %1980 = vmatprep.mubr.bf16.mxu0 %v883
        %1981 = vmatmul.mubr.bf16.gmra.mxu0 %v835
        %v1982 = vpop.f32.mrf.mxu0
        %v1983 = vadd.f32 %v1822, %v1982
        %v1984 = vpop.f32.mrf.mxu0
        %v1985 = vpop.f32.mrf.mxu0
        %v1986 = vadd.f32 %v1825, %v1985
        %v1987 = vpop.f32.mrf.mxu0
        %1988 = vmatprep.mubr.bf16.mxu0 %v884
        %1989 = vmatmul.mubr.bf16.gmra.mxu0 %v836
        %v1990 = vpop.f32.mrf.mxu0
        %v1991 = vadd.f32 %v1830, %v1990
        %v1992 = vpop.f32.mrf.mxu0
        %v1993 = vpop.f32.mrf.mxu0
        %v1994 = vadd.f32 %v1833, %v1993
        %v1995 = vpop.f32.mrf.mxu0
        %1996 = vmatprep.mubr.bf16.mxu0 %v885
        %1997 = vmatmul.mubr.bf16.gmra.mxu0 %v837
        %v1998 = vpop.f32.mrf.mxu0
        %v1999 = vadd.f32 %v1838, %v1998
        %v2000 = vpop.f32.mrf.mxu0
        %v2001 = vpop.f32.mrf.mxu0
        %v2002 = vadd.f32 %v1841, %v2001
        %v2003 = vpop.f32.mrf.mxu0
        %2004 = vmatprep.mubr.bf16.mxu0 %v886
        %2005 = vmatmul.mubr.bf16.gmra.mxu0 %v838
        %v2006 = vpop.f32.mrf.mxu0
        %v2007 = vadd.f32 %v1846, %v2006
        %v2008 = vpop.f32.mrf.mxu0
        %v2009 = vpop.f32.mrf.mxu0
        %v2010 = vadd.f32 %v1849, %v2009
        %v2011 = vpop.f32.mrf.mxu0
        %2012 = vmatprep.mubr.bf16.mxu0 %v887
        %2013 = vmatmul.mubr.bf16.gmra.mxu0 %v839
        %v2014 = vpop.f32.mrf.mxu0
        %v2015 = vadd.f32 %v1854, %v2014
        %v2016 = vpop.f32.mrf.mxu0
        %v2017 = vpop.f32.mrf.mxu0
        %v2018 = vadd.f32 %v1857, %v2017
        %v2019 = vpop.f32.mrf.mxu0
        %2020 = vmatprep.mubr.bf16.mxu0 %v888
        %2021 = vmatmul.mubr.bf16.gmra.mxu0 %v840
        %v2022 = vpop.f32.mrf.mxu0
        %v2023 = vadd.f32 %v1862, %v2022
        %v2024 = vpop.f32.mrf.mxu0
        %v2025 = vpop.f32.mrf.mxu0
        %v2026 = vadd.f32 %v1865, %v2025
        %v2027 = vpop.f32.mrf.mxu0
        %2028 = vmatprep.mubr.bf16.mxu0 %v889
        %2029 = vmatmul.mubr.bf16.gmra.mxu0 %v841
        %v2030 = vpop.f32.mrf.mxu0
        %v2031 = vadd.f32 %v1870, %v2030
        %v2032 = vpop.f32.mrf.mxu0
        %v2033 = vpop.f32.mrf.mxu0
        %v2034 = vadd.f32 %v1873, %v2033
        %v2035 = vpop.f32.mrf.mxu0
        %2036 = vmatprep.mubr.bf16.mxu0 %v890
        %2037 = vmatmul.mubr.bf16.gmra.mxu0 %v842
        %v2038 = vpop.f32.mrf.mxu0
        %v2039 = vadd.f32 %v1878, %v2038
        %v2040 = vpop.f32.mrf.mxu0
        %v2041 = vpop.f32.mrf.mxu0
        %v2042 = vadd.f32 %v1881, %v2041
        %v2043 = vpop.f32.mrf.mxu0
        %2044 = vmatprep.mubr.bf16.mxu0 %v891
        %2045 = vmatmul.mubr.bf16.gmra.mxu0 %v843
        %v2046 = vpop.f32.mrf.mxu0
        %v2047 = vadd.f32 %v1886, %v2046
        %v2048 = vpop.f32.mrf.mxu0
        %v2049 = vpop.f32.mrf.mxu0
        %v2050 = vadd.f32 %v1889, %v2049
        %v2051 = vpop.f32.mrf.mxu0
        %2052 = vmatprep.mubr.bf16.mxu0 %v892
        %2053 = vmatmul.mubr.bf16.gmra.mxu0 %v844
        %v2054 = vpop.f32.mrf.mxu0
        %v2055 = vadd.f32 %v1894, %v2054
        %v2056 = vpop.f32.mrf.mxu0
        %v2057 = vpop.f32.mrf.mxu0
        %v2058 = vadd.f32 %v1897, %v2057
        %v2059 = vpop.f32.mrf.mxu0
        %2060 = vmatprep.mubr.bf16.mxu0 %v893
        %2061 = vmatmul.mubr.bf16.gmra.mxu0 %v845
        %v2062 = vpop.f32.mrf.mxu0
        %v2063 = vadd.f32 %v1902, %v2062
        %v2064 = vpop.f32.mrf.mxu0
        %v2065 = vpop.f32.mrf.mxu0
        %v2066 = vadd.f32 %v1905, %v2065
        %v2067 = vpop.f32.mrf.mxu0
        %2068 = vmatprep.mubr.bf16.mxu0 %v894
        %2069 = vmatmul.mubr.bf16.gmra.mxu0 %v846
        %v2070 = vpop.f32.mrf.mxu0
        %v2071 = vadd.f32 %v1910, %v2070
        %v2072 = vpop.f32.mrf.mxu0
        %v2073 = vpop.f32.mrf.mxu0
        %v2074 = vadd.f32 %v1913, %v2073
        %v2075 = vpop.f32.mrf.mxu0
        %2076 = vmatprep.mubr.bf16.mxu0 %v895
        %2077 = vmatmul.mubr.bf16.gmra.mxu0 %v847
        %v2078 = vpop.f32.mrf.mxu0
        %v2079 = vadd.f32 %v1918, %v2078
        %v2080 = vpop.f32.mrf.mxu0
        %v2081 = vpop.f32.mrf.mxu0
        %v2082 = vadd.f32 %v1921, %v2081
        %v2083 = vpop.f32.mrf.mxu0
        %2084 = vmatprep.mubr.bf16.mxu0 %v896
        %2085 = vmatmul.mubr.bf16.gmra.mxu0 %v848
        %v2086 = vpop.f32.mrf.mxu0
        %v2087 = vadd.f32 %v1926, %v2086
        %v2088 = vpop.f32.mrf.mxu0
        %v2089 = vpop.f32.mrf.mxu0
        %v2090 = vadd.f32 %v1929, %v2089
        %v2091 = vpop.f32.mrf.mxu0
        %2092 = vmatprep.mubr.bf16.mxu0 %v897
        %2093 = vmatmul.mubr.bf16.gmra.mxu0 %v849
        %v2094 = vpop.f32.mrf.mxu0
        %v2095 = vadd.f32 %v1934, %v2094
        %v2096 = vpop.f32.mrf.mxu0
        %v2097 = vpop.f32.mrf.mxu0
        %v2098 = vadd.f32 %v1937, %v2097
        %v2099 = vpop.f32.mrf.mxu0
        %2100 = vmatprep.mubr.bf16.mxu0 %v898
        %2101 = vmatmul.mubr.bf16.gmra.mxu0 %v850
        %v2102 = vpop.f32.mrf.mxu0
        %v2103 = vadd.f32 %v1942, %v2102
        %v2104 = vpop.f32.mrf.mxu0
        %v2105 = vpop.f32.mrf.mxu0
        %v2106 = vadd.f32 %v1945, %v2105
        %v2107 = vpop.f32.mrf.mxu0
        %2108 = vdwg.mxu0
        %2109 = vmatprep.subr.bf16.mxu0 0
        %2110 = vmatpush1.bf16.msra.mxu0 %v1537
        %2111 = vmatprep.subr.bf16.mxu0 0
        %2112 = vmatpush1.bf16.msra.mxu0 %v1536
        %2113 = vmatprep.subr.bf16.mxu0 0
        %2114 = vmatpush1.bf16.msra.mxu0 %v1535
        %2115 = vmatprep.subr.bf16.mxu0 0
        %2116 = vmatpush1.bf16.msra.mxu0 %v1534
        %2117 = vmatprep.subr.bf16.mxu0 0
        %2118 = vmatpush1.bf16.msra.mxu0 %v1533
        %2119 = vmatprep.subr.bf16.mxu0 0
        %2120 = vmatpush1.bf16.msra.mxu0 %v1532
        %2121 = vmatprep.subr.bf16.mxu0 0
        %2122 = vmatpush1.bf16.msra.mxu0 %v1531
        %2123 = vmatprep.subr.bf16.mxu0 0
        %2124 = vmatpush1.bf16.msra.mxu0 %v1530
        %2125 = vmatprep.subr.bf16.mxu0 0
        %2126 = vmatpush2.bf16.msra.mxu0 %v1545
        %2127 = vmatprep.subr.bf16.mxu0 0
        %2128 = vmatpush2.bf16.msra.mxu0 %v1544
        %2129 = vmatprep.subr.bf16.mxu0 0
        %2130 = vmatpush2.bf16.msra.mxu0 %v1543
        %2131 = vmatprep.subr.bf16.mxu0 0
        %2132 = vmatpush2.bf16.msra.mxu0 %v1542
        %2133 = vmatprep.subr.bf16.mxu0 0
        %2134 = vmatpush2.bf16.msra.mxu0 %v1541
        %2135 = vmatprep.subr.bf16.mxu0 0
        %2136 = vmatpush2.bf16.msra.mxu0 %v1540
        %2137 = vmatprep.subr.bf16.mxu0 0
        %2138 = vmatpush2.bf16.msra.mxu0 %v1539
        %2139 = vmatprep.subr.bf16.mxu0 0
        %2140 = vmatpush2.bf16.msra.mxu0 %v1538
        %2141 = vmatprep.mubr.bf16.mxu0 %v980
        %2142 = vmatmul.mubr.bf16.gmra.mxu0 %v932
        %v2143 = vpop.f32.mrf.mxu0
        %v2144 = vadd.f32 %v1983, %v2143
        %v2145 = vpop.f32.mrf.mxu0
        %v2146 = vpop.f32.mrf.mxu0
        %v2147 = vadd.f32 %v1986, %v2146
        %v2148 = vpop.f32.mrf.mxu0
        %2149 = vmatprep.mubr.bf16.mxu0 %v981
        %2150 = vmatmul.mubr.bf16.gmra.mxu0 %v933
        %v2151 = vpop.f32.mrf.mxu0
        %v2152 = vadd.f32 %v1991, %v2151
        %v2153 = vpop.f32.mrf.mxu0
        %v2154 = vpop.f32.mrf.mxu0
        %v2155 = vadd.f32 %v1994, %v2154
        %v2156 = vpop.f32.mrf.mxu0
        %2157 = vmatprep.mubr.bf16.mxu0 %v982
        %2158 = vmatmul.mubr.bf16.gmra.mxu0 %v934
        %v2159 = vpop.f32.mrf.mxu0
        %v2160 = vadd.f32 %v1999, %v2159
        %v2161 = vpop.f32.mrf.mxu0
        %v2162 = vpop.f32.mrf.mxu0
        %v2163 = vadd.f32 %v2002, %v2162
        %v2164 = vpop.f32.mrf.mxu0
        %2165 = vmatprep.mubr.bf16.mxu0 %v983
        %2166 = vmatmul.mubr.bf16.gmra.mxu0 %v935
        %v2167 = vpop.f32.mrf.mxu0
        %v2168 = vadd.f32 %v2007, %v2167
        %v2169 = vpop.f32.mrf.mxu0
        %v2170 = vpop.f32.mrf.mxu0
        %v2171 = vadd.f32 %v2010, %v2170
        %v2172 = vpop.f32.mrf.mxu0
        %2173 = vmatprep.mubr.bf16.mxu0 %v984
        %2174 = vmatmul.mubr.bf16.gmra.mxu0 %v936
        %v2175 = vpop.f32.mrf.mxu0
        %v2176 = vadd.f32 %v2015, %v2175
        %v2177 = vpop.f32.mrf.mxu0
        %v2178 = vpop.f32.mrf.mxu0
        %v2179 = vadd.f32 %v2018, %v2178
        %v2180 = vpop.f32.mrf.mxu0
        %2181 = vmatprep.mubr.bf16.mxu0 %v985
        %2182 = vmatmul.mubr.bf16.gmra.mxu0 %v937
        %v2183 = vpop.f32.mrf.mxu0
        %v2184 = vadd.f32 %v2023, %v2183
        %v2185 = vpop.f32.mrf.mxu0
        %v2186 = vpop.f32.mrf.mxu0
        %v2187 = vadd.f32 %v2026, %v2186
        %v2188 = vpop.f32.mrf.mxu0
        %2189 = vmatprep.mubr.bf16.mxu0 %v986
        %2190 = vmatmul.mubr.bf16.gmra.mxu0 %v938
        %v2191 = vpop.f32.mrf.mxu0
        %v2192 = vadd.f32 %v2031, %v2191
        %v2193 = vpop.f32.mrf.mxu0
        %v2194 = vpop.f32.mrf.mxu0
        %v2195 = vadd.f32 %v2034, %v2194
        %v2196 = vpop.f32.mrf.mxu0
        %2197 = vmatprep.mubr.bf16.mxu0 %v987
        %2198 = vmatmul.mubr.bf16.gmra.mxu0 %v939
        %v2199 = vpop.f32.mrf.mxu0
        %v2200 = vadd.f32 %v2039, %v2199
        %v2201 = vpop.f32.mrf.mxu0
        %v2202 = vpop.f32.mrf.mxu0
        %v2203 = vadd.f32 %v2042, %v2202
        %v2204 = vpop.f32.mrf.mxu0
        %2205 = vmatprep.mubr.bf16.mxu0 %v988
        %2206 = vmatmul.mubr.bf16.gmra.mxu0 %v940
        %v2207 = vpop.f32.mrf.mxu0
        %v2208 = vadd.f32 %v2047, %v2207
        %v2209 = vpop.f32.mrf.mxu0
        %v2210 = vpop.f32.mrf.mxu0
        %v2211 = vadd.f32 %v2050, %v2210
        %v2212 = vpop.f32.mrf.mxu0
        %2213 = vmatprep.mubr.bf16.mxu0 %v989
        %2214 = vmatmul.mubr.bf16.gmra.mxu0 %v941
        %v2215 = vpop.f32.mrf.mxu0
        %v2216 = vadd.f32 %v2055, %v2215
        %v2217 = vpop.f32.mrf.mxu0
        %v2218 = vpop.f32.mrf.mxu0
        %v2219 = vadd.f32 %v2058, %v2218
        %v2220 = vpop.f32.mrf.mxu0
        %2221 = vmatprep.mubr.bf16.mxu0 %v990
        %2222 = vmatmul.mubr.bf16.gmra.mxu0 %v942
        %v2223 = vpop.f32.mrf.mxu0
        %v2224 = vadd.f32 %v2063, %v2223
        %v2225 = vpop.f32.mrf.mxu0
        %v2226 = vpop.f32.mrf.mxu0
        %v2227 = vadd.f32 %v2066, %v2226
        %v2228 = vpop.f32.mrf.mxu0
        %2229 = vmatprep.mubr.bf16.mxu0 %v991
        %2230 = vmatmul.mubr.bf16.gmra.mxu0 %v943
        %v2231 = vpop.f32.mrf.mxu0
        %v2232 = vadd.f32 %v2071, %v2231
        %v2233 = vpop.f32.mrf.mxu0
        %v2234 = vpop.f32.mrf.mxu0
        %v2235 = vadd.f32 %v2074, %v2234
        %v2236 = vpop.f32.mrf.mxu0
        %2237 = vmatprep.mubr.bf16.mxu0 %v992
        %2238 = vmatmul.mubr.bf16.gmra.mxu0 %v944
        %v2239 = vpop.f32.mrf.mxu0
        %v2240 = vadd.f32 %v2079, %v2239
        %v2241 = vpop.f32.mrf.mxu0
        %v2242 = vpop.f32.mrf.mxu0
        %v2243 = vadd.f32 %v2082, %v2242
        %v2244 = vpop.f32.mrf.mxu0
        %2245 = vmatprep.mubr.bf16.mxu0 %v993
        %2246 = vmatmul.mubr.bf16.gmra.mxu0 %v945
        %v2247 = vpop.f32.mrf.mxu0
        %v2248 = vadd.f32 %v2087, %v2247
        %v2249 = vpop.f32.mrf.mxu0
        %v2250 = vpop.f32.mrf.mxu0
        %v2251 = vadd.f32 %v2090, %v2250
        %v2252 = vpop.f32.mrf.mxu0
        %2253 = vmatprep.mubr.bf16.mxu0 %v994
        %2254 = vmatmul.mubr.bf16.gmra.mxu0 %v946
        %v2255 = vpop.f32.mrf.mxu0
        %v2256 = vadd.f32 %v2095, %v2255
        %v2257 = vpop.f32.mrf.mxu0
        %v2258 = vpop.f32.mrf.mxu0
        %v2259 = vadd.f32 %v2098, %v2258
        %v2260 = vpop.f32.mrf.mxu0
        %2261 = vmatprep.mubr.bf16.mxu0 %v995
        %2262 = vmatmul.mubr.bf16.gmra.mxu0 %v947
        %v2263 = vpop.f32.mrf.mxu0
        %v2264 = vadd.f32 %v2103, %v2263
        %v2265 = vpop.f32.mrf.mxu0
        %v2266 = vpop.f32.mrf.mxu0
        %v2267 = vadd.f32 %v2106, %v2266
        %v2268 = vpop.f32.mrf.mxu0
        %2269 = vdwg.mxu0
        %2270 = vmatprep.subr.bf16.mxu0 0
        %2271 = vmatpush1.bf16.msra.mxu0 %v1553
        %2272 = vmatprep.subr.bf16.mxu0 0
        %2273 = vmatpush1.bf16.msra.mxu0 %v1552
        %2274 = vmatprep.subr.bf16.mxu0 0
        %2275 = vmatpush1.bf16.msra.mxu0 %v1551
        %2276 = vmatprep.subr.bf16.mxu0 0
        %2277 = vmatpush1.bf16.msra.mxu0 %v1550
        %2278 = vmatprep.subr.bf16.mxu0 0
        %2279 = vmatpush1.bf16.msra.mxu0 %v1549
        %2280 = vmatprep.subr.bf16.mxu0 0
        %2281 = vmatpush1.bf16.msra.mxu0 %v1548
        %2282 = vmatprep.subr.bf16.mxu0 0
        %2283 = vmatpush1.bf16.msra.mxu0 %v1547
        %2284 = vmatprep.subr.bf16.mxu0 0
        %2285 = vmatpush1.bf16.msra.mxu0 %v1546
        %2286 = vmatprep.subr.bf16.mxu0 0
        %2287 = vmatpush2.bf16.msra.mxu0 0
        %2288 = vmatprep.subr.bf16.mxu0 0
        %2289 = vmatpush2.bf16.msra.mxu0 0
        %2290 = vmatprep.subr.bf16.mxu0 0
        %2291 = vmatpush2.bf16.msra.mxu0 0
        %2292 = vmatprep.subr.bf16.mxu0 0
        %2293 = vmatpush2.bf16.msra.mxu0 0
        %2294 = vmatprep.subr.bf16.mxu0 0
        %2295 = vmatpush2.bf16.msra.mxu0 0
        %2296 = vmatprep.subr.bf16.mxu0 0
        %2297 = vmatpush2.bf16.msra.mxu0 0
        %2298 = vmatprep.subr.bf16.mxu0 0
        %2299 = vmatpush2.bf16.msra.mxu0 0
        %2300 = vmatprep.subr.bf16.mxu0 0
        %2301 = vmatpush2.bf16.msra.mxu0 0
        %2302 = vmatprep.mubr.bf16.mxu0 0
        %2303 = vmatmul.mubr.bf16.gmra.mxu0 %v1028
        %v2304 = vpop.f32.mrf.mxu0
        %v2305 = vadd.f32 %v2144, %v2304
        %v2306 = vpop.f32.mrf.mxu0
        %v2307 = vpop.f32.mrf.mxu0
        %v2308 = vadd.f32 %v2147, %v2307
        %v2309 = vpop.f32.mrf.mxu0
        %2310 = vmatprep.mubr.bf16.mxu0 0
        %2311 = vmatmul.mubr.bf16.gmra.mxu0 %v1029
        %v2312 = vpop.f32.mrf.mxu0
        %v2313 = vadd.f32 %v2152, %v2312
        %v2314 = vpop.f32.mrf.mxu0
        %v2315 = vpop.f32.mrf.mxu0
        %v2316 = vadd.f32 %v2155, %v2315
        %v2317 = vpop.f32.mrf.mxu0
        %2318 = vmatprep.mubr.bf16.mxu0 0
        %2319 = vmatmul.mubr.bf16.gmra.mxu0 %v1030
        %v2320 = vpop.f32.mrf.mxu0
        %v2321 = vadd.f32 %v2160, %v2320
        %v2322 = vpop.f32.mrf.mxu0
        %v2323 = vpop.f32.mrf.mxu0
        %v2324 = vadd.f32 %v2163, %v2323
        %v2325 = vpop.f32.mrf.mxu0
        %2326 = vmatprep.mubr.bf16.mxu0 0
        %2327 = vmatmul.mubr.bf16.gmra.mxu0 %v1031
        %v2328 = vpop.f32.mrf.mxu0
        %v2329 = vadd.f32 %v2168, %v2328
        %v2330 = vpop.f32.mrf.mxu0
        %v2331 = vpop.f32.mrf.mxu0
        %v2332 = vadd.f32 %v2171, %v2331
        %v2333 = vpop.f32.mrf.mxu0
        %2334 = vmatprep.mubr.bf16.mxu0 0
        %2335 = vmatmul.mubr.bf16.gmra.mxu0 %v1032
        %v2336 = vpop.f32.mrf.mxu0
        %v2337 = vadd.f32 %v2176, %v2336
        %v2338 = vpop.f32.mrf.mxu0
        %v2339 = vpop.f32.mrf.mxu0
        %v2340 = vadd.f32 %v2179, %v2339
        %v2341 = vpop.f32.mrf.mxu0
        %2342 = vmatprep.mubr.bf16.mxu0 0
        %2343 = vmatmul.mubr.bf16.gmra.mxu0 %v1033
        %v2344 = vpop.f32.mrf.mxu0
        %v2345 = vadd.f32 %v2184, %v2344
        %v2346 = vpop.f32.mrf.mxu0
        %v2347 = vpop.f32.mrf.mxu0
        %v2348 = vadd.f32 %v2187, %v2347
        %v2349 = vpop.f32.mrf.mxu0
        %2350 = vmatprep.mubr.bf16.mxu0 0
        %2351 = vmatmul.mubr.bf16.gmra.mxu0 %v1034
        %v2352 = vpop.f32.mrf.mxu0
        %v2353 = vadd.f32 %v2192, %v2352
        %v2354 = vpop.f32.mrf.mxu0
        %v2355 = vpop.f32.mrf.mxu0
        %v2356 = vadd.f32 %v2195, %v2355
        %v2357 = vpop.f32.mrf.mxu0
        %2358 = vmatprep.mubr.bf16.mxu0 0
        %2359 = vmatmul.mubr.bf16.gmra.mxu0 %v1035
        %v2360 = vpop.f32.mrf.mxu0
        %v2361 = vadd.f32 %v2200, %v2360
        %v2362 = vpop.f32.mrf.mxu0
        %v2363 = vpop.f32.mrf.mxu0
        %v2364 = vadd.f32 %v2203, %v2363
        %v2365 = vpop.f32.mrf.mxu0
        %2366 = vmatprep.mubr.bf16.mxu0 0
        %2367 = vmatmul.mubr.bf16.gmra.mxu0 %v1036
        %v2368 = vpop.f32.mrf.mxu0
        %v2369 = vadd.f32 %v2208, %v2368
        %v2370 = vpop.f32.mrf.mxu0
        %v2371 = vpop.f32.mrf.mxu0
        %v2372 = vadd.f32 %v2211, %v2371
        %v2373 = vpop.f32.mrf.mxu0
        %2374 = vmatprep.mubr.bf16.mxu0 0
        %2375 = vmatmul.mubr.bf16.gmra.mxu0 %v1037
        %v2376 = vpop.f32.mrf.mxu0
        %v2377 = vadd.f32 %v2216, %v2376
        %v2378 = vpop.f32.mrf.mxu0
        %v2379 = vpop.f32.mrf.mxu0
        %v2380 = vadd.f32 %v2219, %v2379
        %v2381 = vpop.f32.mrf.mxu0
        %2382 = vmatprep.mubr.bf16.mxu0 0
        %2383 = vmatmul.mubr.bf16.gmra.mxu0 %v1038
        %v2384 = vpop.f32.mrf.mxu0
        %v2385 = vadd.f32 %v2224, %v2384
        %v2386 = vpop.f32.mrf.mxu0
        %v2387 = vpop.f32.mrf.mxu0
        %v2388 = vadd.f32 %v2227, %v2387
        %v2389 = vpop.f32.mrf.mxu0
        %2390 = vmatprep.mubr.bf16.mxu0 0
        %2391 = vmatmul.mubr.bf16.gmra.mxu0 %v1039
        %v2392 = vpop.f32.mrf.mxu0
        %v2393 = vadd.f32 %v2232, %v2392
        %v2394 = vpop.f32.mrf.mxu0
        %v2395 = vpop.f32.mrf.mxu0
        %v2396 = vadd.f32 %v2235, %v2395
        %v2397 = vpop.f32.mrf.mxu0
        %2398 = vmatprep.mubr.bf16.mxu0 0
        %2399 = vmatmul.mubr.bf16.gmra.mxu0 %v1040
        %v2400 = vpop.f32.mrf.mxu0
        %v2401 = vadd.f32 %v2240, %v2400
        %v2402 = vpop.f32.mrf.mxu0
        %v2403 = vpop.f32.mrf.mxu0
        %v2404 = vadd.f32 %v2243, %v2403
        %v2405 = vpop.f32.mrf.mxu0
        %2406 = vmatprep.mubr.bf16.mxu0 0
        %2407 = vmatmul.mubr.bf16.gmra.mxu0 %v1041
        %v2408 = vpop.f32.mrf.mxu0
        %v2409 = vadd.f32 %v2248, %v2408
        %v2410 = vpop.f32.mrf.mxu0
        %v2411 = vpop.f32.mrf.mxu0
        %v2412 = vadd.f32 %v2251, %v2411
        %v2413 = vpop.f32.mrf.mxu0
        %2414 = vmatprep.mubr.bf16.mxu0 0
        %2415 = vmatmul.mubr.bf16.gmra.mxu0 %v1042
        %v2416 = vpop.f32.mrf.mxu0
        %v2417 = vadd.f32 %v2256, %v2416
        %v2418 = vpop.f32.mrf.mxu0
        %v2419 = vpop.f32.mrf.mxu0
        %v2420 = vadd.f32 %v2259, %v2419
        %v2421 = vpop.f32.mrf.mxu0
        %2422 = vmatprep.mubr.bf16.mxu0 0
        %2423 = vmatmul.mubr.bf16.gmra.mxu0 %v1043
        %v2424 = vpop.f32.mrf.mxu0
        %v2425 = vadd.f32 %v2264, %v2424
        %v2426 = vpop.f32.mrf.mxu0
        %v2427 = vpop.f32.mrf.mxu0
        %v2428 = vadd.f32 %v2267, %v2427
        %v2429 = vpop.f32.mrf.mxu0
        %2430 = vdwg.mxu0
        %v2431 = vadd.f32 %v2305, %v2308
        %v2432 = vadd.f32 %v2431, %v2313
        %v2433 = vadd.f32 %v2432, %v2316
        %v2434 = vadd.f32 %v2433, %v2321
        %v2435 = vadd.f32 %v2434, %v2324
        %v2436 = vadd.f32 %v2435, %v2329
        %v2437 = vadd.f32 %v2436, %v2332
        %v2438 = vadd.f32 %v2437, %v2337
        %v2439 = vadd.f32 %v2438, %v2340
        %v2440 = vadd.f32 %v2439, %v2345
        %v2441 = vadd.f32 %v2440, %v2348
        %v2442 = vadd.f32 %v2441, %v2353
        %v2443 = vadd.f32 %v2442, %v2356
        %v2444 = vadd.f32 %v2443, %v2361
        %v2445 = vadd.f32 %v2444, %v2364
        %v2446 = vadd.f32 %v2445, %v2369
        %v2447 = vadd.f32 %v2446, %v2372
        %v2448 = vadd.f32 %v2447, %v2377
        %v2449 = vadd.f32 %v2448, %v2380
        %v2450 = vadd.f32 %v2449, %v2385
        %v2451 = vadd.f32 %v2450, %v2388
        %v2452 = vadd.f32 %v2451, %v2393
        %v2453 = vadd.f32 %v2452, %v2396
        %v2454 = vadd.f32 %v2453, %v2401
        %v2455 = vadd.f32 %v2454, %v2404
        %v2456 = vadd.f32 %v2455, %v2409
        %v2457 = vadd.f32 %v2456, %v2412
        %v2458 = vadd.f32 %v2457, %v2417
        %v2459 = vadd.f32 %v2458, %v2420
        %v2460 = vadd.f32 %v2459, %v2425
        %v2461 = vadd.f32 %v2460, %v2428
        %v2462 = vrot.slane %v2461, 4
        %v2463 = vadd.f32 %v2461, %v2462
        %v2464 = vrot.slane %v2463, 2
        %v2465 = vadd.f32 %v2463, %v2464
        %v2466 = vrot.slane %v2465, 1
        %v2467 = vadd.f32 %v2465, %v2466
        %v2468 = vmul.f32 %v2305, %v2305
        %v2469 = vmul.f32 %v2308, %v2308
        %v2470 = vmul.f32 %v2313, %v2313
        %v2471 = vmul.f32 %v2316, %v2316
        %v2472 = vmul.f32 %v2321, %v2321
        %v2473 = vmul.f32 %v2324, %v2324
        %v2474 = vmul.f32 %v2329, %v2329
        %v2475 = vmul.f32 %v2332, %v2332
        %v2476 = vmul.f32 %v2337, %v2337
        %v2477 = vmul.f32 %v2340, %v2340
        %v2478 = vmul.f32 %v2345, %v2345
        %v2479 = vmul.f32 %v2348, %v2348
        %v2480 = vmul.f32 %v2353, %v2353
        %v2481 = vmul.f32 %v2356, %v2356
        %v2482 = vmul.f32 %v2361, %v2361
        %v2483 = vmul.f32 %v2364, %v2364
        %v2484 = vmul.f32 %v2369, %v2369
        %v2485 = vmul.f32 %v2372, %v2372
        %v2486 = vmul.f32 %v2377, %v2377
        %v2487 = vmul.f32 %v2380, %v2380
        %v2488 = vmul.f32 %v2385, %v2385
        %v2489 = vmul.f32 %v2388, %v2388
        %v2490 = vmul.f32 %v2393, %v2393
        %v2491 = vmul.f32 %v2396, %v2396
        %v2492 = vmul.f32 %v2401, %v2401
        %v2493 = vmul.f32 %v2404, %v2404
        %v2494 = vmul.f32 %v2409, %v2409
        %v2495 = vmul.f32 %v2412, %v2412
        %v2496 = vmul.f32 %v2417, %v2417
        %v2497 = vmul.f32 %v2420, %v2420
        %v2498 = vmul.f32 %v2425, %v2425
        %v2499 = vmul.f32 %v2428, %v2428
        %v2500 = vadd.f32 %v2468, %v2469
        %v2501 = vadd.f32 %v2500, %v2470
        %v2502 = vadd.f32 %v2501, %v2471
        %v2503 = vadd.f32 %v2502, %v2472
        %v2504 = vadd.f32 %v2503, %v2473
        %v2505 = vadd.f32 %v2504, %v2474
        %v2506 = vadd.f32 %v2505, %v2475
        %v2507 = vadd.f32 %v2506, %v2476
        %v2508 = vadd.f32 %v2507, %v2477
        %v2509 = vadd.f32 %v2508, %v2478
        %v2510 = vadd.f32 %v2509, %v2479
        %v2511 = vadd.f32 %v2510, %v2480
        %v2512 = vadd.f32 %v2511, %v2481
        %v2513 = vadd.f32 %v2512, %v2482
        %v2514 = vadd.f32 %v2513, %v2483
        %v2515 = vadd.f32 %v2514, %v2484
        %v2516 = vadd.f32 %v2515, %v2485
        %v2517 = vadd.f32 %v2516, %v2486
        %v2518 = vadd.f32 %v2517, %v2487
        %v2519 = vadd.f32 %v2518, %v2488
        %v2520 = vadd.f32 %v2519, %v2489
        %v2521 = vadd.f32 %v2520, %v2490
        %v2522 = vadd.f32 %v2521, %v2491
        %v2523 = vadd.f32 %v2522, %v2492
        %v2524 = vadd.f32 %v2523, %v2493
        %v2525 = vadd.f32 %v2524, %v2494
        %v2526 = vadd.f32 %v2525, %v2495
        %v2527 = vadd.f32 %v2526, %v2496
        %v2528 = vadd.f32 %v2527, %v2497
        %v2529 = vadd.f32 %v2528, %v2498
        %v2530 = vadd.f32 %v2529, %v2499
        %v2531 = vrot.slane %v2530, 4
        %v2532 = vadd.f32 %v2530, %v2531
        %v2533 = vrot.slane %v2532, 2
        %v2534 = vadd.f32 %v2532, %v2533
        %v2535 = vrot.slane %v2534, 1
        %v2536 = vadd.f32 %v2534, %v2535
        %v2537 = vmul.f32 %v2467, 0.00390625
        %v2538 = vmul.f32 %v2536, 0.00390625
        %v2539 = vmul.f32 %v2537, %v2537
        %v2540 = vsub.f32 %v2538, %v2539
        %v2541 = vsub.f32 %v2305, %v2537
        %v2542 = vsub.f32 %v2308, %v2537
        %v2543 = vsub.f32 %v2313, %v2537
        %v2544 = vsub.f32 %v2316, %v2537
        %v2545 = vsub.f32 %v2321, %v2537
        %v2546 = vsub.f32 %v2324, %v2537
        %v2547 = vsub.f32 %v2329, %v2537
        %v2548 = vsub.f32 %v2332, %v2537
        %v2549 = vsub.f32 %v2337, %v2537
        %v2550 = vsub.f32 %v2340, %v2537
        %v2551 = vsub.f32 %v2345, %v2537
        %v2552 = vsub.f32 %v2348, %v2537
        %v2553 = vsub.f32 %v2353, %v2537
        %v2554 = vsub.f32 %v2356, %v2537
        %v2555 = vsub.f32 %v2361, %v2537
        %v2556 = vsub.f32 %v2364, %v2537
        %v2557 = vsub.f32 %v2369, %v2537
        %v2558 = vsub.f32 %v2372, %v2537
        %v2559 = vsub.f32 %v2377, %v2537
        %v2560 = vsub.f32 %v2380, %v2537
        %v2561 = vsub.f32 %v2385, %v2537
        %v2562 = vsub.f32 %v2388, %v2537
        %v2563 = vsub.f32 %v2393, %v2537
        %v2564 = vsub.f32 %v2396, %v2537
        %v2565 = vsub.f32 %v2401, %v2537
        %v2566 = vsub.f32 %v2404, %v2537
        %v2567 = vsub.f32 %v2409, %v2537
        %v2568 = vsub.f32 %v2412, %v2537
        %v2569 = vsub.f32 %v2417, %v2537
        %v2570 = vsub.f32 %v2420, %v2537
        %v2571 = vsub.f32 %v2425, %v2537
        %v2572 = vsub.f32 %v2428, %v2537
        %v2573 = vadd.f32 %v2540, 1e-05
        %v2574 = vrsqrt.pop %v2573
        %v2575 = vmul.f32 %v2541, %v2574
        %v2576 = vmul.f32 %v2542, %v2574
        %v2577 = vmul.f32 %v2543, %v2574
        %v2578 = vmul.f32 %v2544, %v2574
        %v2579 = vmul.f32 %v2545, %v2574
        %v2580 = vmul.f32 %v2546, %v2574
        %v2581 = vmul.f32 %v2547, %v2574
        %v2582 = vmul.f32 %v2548, %v2574
        %v2583 = vmul.f32 %v2549, %v2574
        %v2584 = vmul.f32 %v2550, %v2574
        %v2585 = vmul.f32 %v2551, %v2574
        %v2586 = vmul.f32 %v2552, %v2574
        %v2587 = vmul.f32 %v2553, %v2574
        %v2588 = vmul.f32 %v2554, %v2574
        %v2589 = vmul.f32 %v2555, %v2574
        %v2590 = vmul.f32 %v2556, %v2574
        %v2591 = vmul.f32 %v2557, %v2574
        %v2592 = vmul.f32 %v2558, %v2574
        %v2593 = vmul.f32 %v2559, %v2574
        %v2594 = vmul.f32 %v2560, %v2574
        %v2595 = vmul.f32 %v2561, %v2574
        %v2596 = vmul.f32 %v2562, %v2574
        %v2597 = vmul.f32 %v2563, %v2574
        %v2598 = vmul.f32 %v2564, %v2574
        %v2599 = vmul.f32 %v2565, %v2574
        %v2600 = vmul.f32 %v2566, %v2574
        %v2601 = vmul.f32 %v2567, %v2574
        %v2602 = vmul.f32 %v2568, %v2574
        %v2603 = vmul.f32 %v2569, %v2574
        %v2604 = vmul.f32 %v2570, %v2574
        %v2605 = vmul.f32 %v2571, %v2574
        %v2606 = vmul.f32 %v2572, %v2574
        %v2608 = vlaneseq
        %v2609 = vshrl.u32 %v2608, 7
        %v2610 = vsub.s32 0, %v2609
        %v2611 = vrot.slane %v499, %v2610
        %v2613 = vmul.f32 %v2575, %v2611
        %v2614 = vmul.f32 %v2576, %v2611
        %v2615 = vmul.f32 %v2577, %v2611
        %v2616 = vmul.f32 %v2578, %v2611
        %v2617 = vmul.f32 %v2579, %v2611
        %v2618 = vmul.f32 %v2580, %v2611
        %v2619 = vmul.f32 %v2581, %v2611
        %v2620 = vmul.f32 %v2582, %v2611
        %v2621 = vmul.f32 %v2583, %v2611
        %v2622 = vmul.f32 %v2584, %v2611
        %v2623 = vmul.f32 %v2585, %v2611
        %v2624 = vmul.f32 %v2586, %v2611
        %v2625 = vmul.f32 %v2587, %v2611
        %v2626 = vmul.f32 %v2588, %v2611
        %v2627 = vmul.f32 %v2589, %v2611
        %v2628 = vmul.f32 %v2590, %v2611
        %v2629 = vmul.f32 %v2591, %v2611
        %v2630 = vmul.f32 %v2592, %v2611
        %v2631 = vmul.f32 %v2593, %v2611
        %v2632 = vmul.f32 %v2594, %v2611
        %v2633 = vmul.f32 %v2595, %v2611
        %v2634 = vmul.f32 %v2596, %v2611
        %v2635 = vmul.f32 %v2597, %v2611
        %v2636 = vmul.f32 %v2598, %v2611
        %v2637 = vmul.f32 %v2599, %v2611
        %v2638 = vmul.f32 %v2600, %v2611
        %v2639 = vmul.f32 %v2601, %v2611
        %v2640 = vmul.f32 %v2602, %v2611
        %v2641 = vmul.f32 %v2603, %v2611
        %v2642 = vmul.f32 %v2604, %v2611
        %v2643 = vmul.f32 %v2605, %v2611
        %v2644 = vmul.f32 %v2606, %v2611
        %v2646 = vlaneseq
        %v2647 = vshrl.u32 %v2646, 7
        %v2648 = vsub.s32 0, %v2647
        %v2649 = vrot.slane %v500, %v2648
        %v2651 = vadd.f32 %v2613, %v2649
        %v2652 = vadd.f32 %v2614, %v2649
        %v2653 = vadd.f32 %v2615, %v2649
        %v2654 = vadd.f32 %v2616, %v2649
        %v2655 = vadd.f32 %v2617, %v2649
        %v2656 = vadd.f32 %v2618, %v2649
        %v2657 = vadd.f32 %v2619, %v2649
        %v2658 = vadd.f32 %v2620, %v2649
        %v2659 = vadd.f32 %v2621, %v2649
        %v2660 = vadd.f32 %v2622, %v2649
        %v2661 = vadd.f32 %v2623, %v2649
        %v2662 = vadd.f32 %v2624, %v2649
        %v2663 = vadd.f32 %v2625, %v2649
        %v2664 = vadd.f32 %v2626, %v2649
        %v2665 = vadd.f32 %v2627, %v2649
        %v2666 = vadd.f32 %v2628, %v2649
        %v2667 = vadd.f32 %v2629, %v2649
        %v2668 = vadd.f32 %v2630, %v2649
        %v2669 = vadd.f32 %v2631, %v2649
        %v2670 = vadd.f32 %v2632, %v2649
        %v2671 = vadd.f32 %v2633, %v2649
        %v2672 = vadd.f32 %v2634, %v2649
        %v2673 = vadd.f32 %v2635, %v2649
        %v2674 = vadd.f32 %v2636, %v2649
        %v2675 = vadd.f32 %v2637, %v2649
        %v2676 = vadd.f32 %v2638, %v2649
        %v2677 = vadd.f32 %v2639, %v2649
        %v2678 = vadd.f32 %v2640, %v2649
        %v2679 = vadd.f32 %v2641, %v2649
        %v2680 = vadd.f32 %v2642, %v2649
        %v2681 = vadd.f32 %v2643, %v2649
        %v2682 = vadd.f32 %v2644, %v2649
        %v2683 = vmax.f32 %v2651, 0.0
        %v2684 = vmax.f32 %v2652, 0.0
        %v2685 = vmax.f32 %v2653, 0.0
        %v2686 = vmax.f32 %v2654, 0.0
        %v2687 = vmax.f32 %v2655, 0.0
        %v2688 = vmax.f32 %v2656, 0.0
        %v2689 = vmax.f32 %v2657, 0.0
        %v2690 = vmax.f32 %v2658, 0.0
        %v2691 = vmax.f32 %v2659, 0.0
        %v2692 = vmax.f32 %v2660, 0.0
        %v2693 = vmax.f32 %v2661, 0.0
        %v2694 = vmax.f32 %v2662, 0.0
        %v2695 = vmax.f32 %v2663, 0.0
        %v2696 = vmax.f32 %v2664, 0.0
        %v2697 = vmax.f32 %v2665, 0.0
        %v2698 = vmax.f32 %v2666, 0.0
        %v2699 = vmax.f32 %v2667, 0.0
        %v2700 = vmax.f32 %v2668, 0.0
        %v2701 = vmax.f32 %v2669, 0.0
        %v2702 = vmax.f32 %v2670, 0.0
        %v2703 = vmax.f32 %v2671, 0.0
        %v2704 = vmax.f32 %v2672, 0.0
        %v2705 = vmax.f32 %v2673, 0.0
        %v2706 = vmax.f32 %v2674, 0.0
        %v2707 = vmax.f32 %v2675, 0.0
        %v2708 = vmax.f32 %v2676, 0.0
        %v2709 = vmax.f32 %v2677, 0.0
        %v2710 = vmax.f32 %v2678, 0.0
        %v2711 = vmax.f32 %v2679, 0.0
        %v2712 = vmax.f32 %v2680, 0.0
        %v2713 = vmax.f32 %v2681, 0.0
        %v2714 = vmax.f32 %v2682, 0.0
        %v2715 = vld [vmem:[%s6] sm:$0x1]
        %v2716 = vld [vmem:[%s7] sm:$0x1]
        %v2717 = vld [vmem:[%s8] sm:$0x1]
        %2718 = vst [vmem:[%s501 + $0x1] sm:$0xff] %v2683
        %2719 = vst [vmem:[%s501 + $0x9] sm:$0xff] %v2684
        %2720 = vst [vmem:[%s501 + $0x19] sm:$0xff] %v2685
        %2721 = vst [vmem:[%s501 + $0x21] sm:$0xff] %v2686
        %2722 = vst [vmem:[%s501 + $0x31] sm:$0xff] %v2687
        %2723 = vst [vmem:[%s501 + $0x39] sm:$0xff] %v2688
        %2724 = vst [vmem:[%s501 + $0x49] sm:$0xff] %v2689
        %2725 = vst [vmem:[%s501 + $0x51] sm:$0xff] %v2690
        %2726 = vst [vmem:[%s501 + $0x61] sm:$0xff] %v2691
        %2727 = vst [vmem:[%s501 + $0x69] sm:$0xff] %v2692
        %2728 = vst [vmem:[%s501 + $0x79] sm:$0xff] %v2693
        %2729 = vst [vmem:[%s501 + $0x81] sm:$0xff] %v2694
        %2730 = vst [vmem:[%s501 + $0x91] sm:$0xff] %v2695
        %2731 = vst [vmem:[%s501 + $0x99] sm:$0xff] %v2696
        %2732 = vst [vmem:[%s501 + $0xa9] sm:$0xff] %v2697
        %2733 = vst [vmem:[%s501 + $0xb1] sm:$0xff] %v2698
        %2734 = vst [vmem:[%s501 + $0xc1] sm:$0xff] %v2699
        %2735 = vst [vmem:[%s501 + $0xc9] sm:$0xff] %v2700
        %2736 = vst [vmem:[%s501 + $0xd9] sm:$0xff] %v2701
        %2737 = vst [vmem:[%s501 + $0xe1] sm:$0xff] %v2702
        %2738 = vst [vmem:[%s501 + $0xf1] sm:$0xff] %v2703
        %2739 = vst [vmem:[%s501 + $0xf9] sm:$0xff] %v2704
        %2740 = vst [vmem:[%s501 + $0x109] sm:$0xff] %v2705
        %2741 = vst [vmem:[%s501 + $0x111] sm:$0xff] %v2706
        %2742 = vst [vmem:[%s501 + $0x121] sm:$0xff] %v2707
        %2743 = vst [vmem:[%s501 + $0x129] sm:$0xff] %v2708
        %2744 = vst [vmem:[%s501 + $0x139] sm:$0xff] %v2709
        %2745 = vst [vmem:[%s501 + $0x141] sm:$0xff] %v2710
        %2746 = vst [vmem:[%s501 + $0x151] sm:$0xff] %v2711
        %2747 = vst [vmem:[%s501 + $0x159] sm:$0xff] %v2712
        %2748 = vst [vmem:[%s501 + $0x169] sm:$0xff] %v2713
        %2749 = vst [vmem:[%s501 + $0x171] sm:$0xff] %v2714
        %2750 = vst [vmem:[#allocation2 + $0x1] sm:$0xff] %v2685
        %2751 = vst [vmem:[#allocation2 + $0x9] sm:$0xff] %v2686
        %2752 = vst [vmem:[%s536 + $0x1] sm:$0xff] %v2711
        %2753 = vst [vmem:[%s536 + $0x9] sm:$0xff] %v2712
        %v2754 = vld [vmem:[#allocation2 + $0x2] sm:$0x1]
        %v2755 = vld [vmem:[#allocation2 + $0x1a] sm:$0x1]
        %v2756 = vld [vmem:[#allocation2 + $0x32] sm:$0x1]
        %v2757 = vld [vmem:[#allocation2 + $0x4a] sm:$0x1]
        %v2758 = vld [vmem:[#allocation2 + $0x62] sm:$0x1]
        %v2759 = vld [vmem:[#allocation2 + $0x7a] sm:$0x1]
        %v2760 = vld [vmem:[#allocation2 + $0x92] sm:$0x1]
        %v2761 = vld [vmem:[#allocation2 + $0xaa] sm:$0x1]
        %v2762 = vld [vmem:[#allocation2 + $0xc2] sm:$0x1]
        %v2763 = vld [vmem:[#allocation2 + $0xda] sm:$0x1]
        %v2764 = vld [vmem:[#allocation2 + $0xf2] sm:$0x1]
        %v2765 = vld [vmem:[#allocation2 + $0x10a] sm:$0x1]
        %v2766 = vld [vmem:[#allocation2 + $0x122] sm:$0x1]
        %v2767 = vld [vmem:[#allocation2 + $0x13a] sm:$0x1]
        %v2768 = vld [vmem:[#allocation2 + $0x152] sm:$0x1]
        %v2769 = vld [vmem:[#allocation2 + $0x16a] sm:$0x1]
        %v2770 = vld [vmem:[#allocation2 + $0x182] sm:$0x1]
        %v2771 = vld [vmem:[#allocation2 + $0x19a] sm:$0x1]
        %2772 = vst [vmem:[#allocation2] sm:$0x1] %v2754
        %2773 = vst [vmem:[#allocation2 + $0x18] sm:$0x1] %v2755
        %2774 = vst [vmem:[#allocation2 + $0x30] sm:$0x1] %v2756
        %2775 = vst [vmem:[#allocation2 + $0x48] sm:$0x1] %v2757
        %2776 = vst [vmem:[#allocation2 + $0x60] sm:$0x1] %v2758
        %2777 = vst [vmem:[#allocation2 + $0x78] sm:$0x1] %v2759
        %2778 = vst [vmem:[#allocation2 + $0x90] sm:$0x1] %v2760
        %2779 = vst [vmem:[#allocation2 + $0xa8] sm:$0x1] %v2761
        %2780 = vst [vmem:[#allocation2 + $0xc0] sm:$0x1] %v2762
        %2781 = vst [vmem:[#allocation2 + $0xd8] sm:$0x1] %v2763
        %2782 = vst [vmem:[#allocation2 + $0xf0] sm:$0x1] %v2764
        %2783 = vst [vmem:[#allocation2 + $0x108] sm:$0x1] %v2765
        %2784 = vst [vmem:[#allocation2 + $0x120] sm:$0x1] %v2766
        %2785 = vst [vmem:[#allocation2 + $0x138] sm:$0x1] %v2767
        %2786 = vst [vmem:[#allocation2 + $0x150] sm:$0x1] %v2768
        %2787 = vst [vmem:[#allocation2 + $0x168] sm:$0x1] %v2769
        %2788 = vst [vmem:[#allocation2 + $0x180] sm:$0x1] %v2770
        %2789 = vst [vmem:[#allocation2 + $0x198] sm:$0x1] %v2771
        %v2790 = vld [vmem:[#allocation2 + $0xf] sm:$0x1]
        %v2791 = vld [vmem:[#allocation2 + $0x27] sm:$0x1]
        %v2792 = vld [vmem:[#allocation2 + $0x3f] sm:$0x1]
        %v2793 = vld [vmem:[#allocation2 + $0x57] sm:$0x1]
        %v2794 = vld [vmem:[#allocation2 + $0x6f] sm:$0x1]
        %v2795 = vld [vmem:[#allocation2 + $0x87] sm:$0x1]
        %v2796 = vld [vmem:[#allocation2 + $0x9f] sm:$0x1]
        %v2797 = vld [vmem:[#allocation2 + $0xb7] sm:$0x1]
        %v2798 = vld [vmem:[#allocation2 + $0xcf] sm:$0x1]
        %v2799 = vld [vmem:[#allocation2 + $0xe7] sm:$0x1]
        %v2800 = vld [vmem:[#allocation2 + $0xff] sm:$0x1]
        %v2801 = vld [vmem:[#allocation2 + $0x117] sm:$0x1]
        %v2802 = vld [vmem:[#allocation2 + $0x12f] sm:$0x1]
        %v2803 = vld [vmem:[#allocation2 + $0x147] sm:$0x1]
        %v2804 = vld [vmem:[#allocation2 + $0x15f] sm:$0x1]
        %v2805 = vld [vmem:[#allocation2 + $0x177] sm:$0x1]
        %v2806 = vld [vmem:[#allocation2 + $0x18f] sm:$0x1]
        %v2807 = vld [vmem:[#allocation2 + $0x1a7] sm:$0x1]
        %2808 = vst [vmem:[#allocation2 + $0x11] sm:$0x1] %v2790
        %2809 = vst [vmem:[#allocation2 + $0x29] sm:$0x1] %v2791
        %2810 = vst [vmem:[#allocation2 + $0x41] sm:$0x1] %v2792
        %2811 = vst [vmem:[#allocation2 + $0x59] sm:$0x1] %v2793
        %2812 = vst [vmem:[#allocation2 + $0x71] sm:$0x1] %v2794
        %2813 = vst [vmem:[#allocation2 + $0x89] sm:$0x1] %v2795
        %2814 = vst [vmem:[#allocation2 + $0xa1] sm:$0x1] %v2796
        %2815 = vst [vmem:[#allocation2 + $0xb9] sm:$0x1] %v2797
        %2816 = vst [vmem:[#allocation2 + $0xd1] sm:$0x1] %v2798
        %2817 = vst [vmem:[#allocation2 + $0xe9] sm:$0x1] %v2799
        %2818 = vst [vmem:[#allocation2 + $0x101] sm:$0x1] %v2800
        %2819 = vst [vmem:[#allocation2 + $0x119] sm:$0x1] %v2801
        %2820 = vst [vmem:[#allocation2 + $0x131] sm:$0x1] %v2802
        %2821 = vst [vmem:[#allocation2 + $0x149] sm:$0x1] %v2803
        %2822 = vst [vmem:[#allocation2 + $0x161] sm:$0x1] %v2804
        %2823 = vst [vmem:[#allocation2 + $0x179] sm:$0x1] %v2805
        %2824 = vst [vmem:[#allocation2 + $0x191] sm:$0x1] %v2806
        %2825 = vst [vmem:[#allocation2 + $0x1a9] sm:$0x1] %v2807
        %v2826 = vld [vmem:[#allocation2] sm:$0xff]
        %v2827 = vld [vmem:[#allocation2 + $0x8] sm:$0xff]
        %v2828 = vld [vmem:[#allocation2 + $0x18] sm:$0xff]
        %v2829 = vld [vmem:[#allocation2 + $0x20] sm:$0xff]
        %v2830 = vld [vmem:[#allocation2 + $0x30] sm:$0xff]
        %v2831 = vld [vmem:[#allocation2 + $0x38] sm:$0xff]
        %v2832 = vld [vmem:[#allocation2 + $0x48] sm:$0xff]
        %v2833 = vld [vmem:[#allocation2 + $0x50] sm:$0xff]
        %v2834 = vld [vmem:[#allocation2 + $0x60] sm:$0xff]
        %v2835 = vld [vmem:[#allocation2 + $0x68] sm:$0xff]
        %v2836 = vld [vmem:[#allocation2 + $0x78] sm:$0xff]
        %v2837 = vld [vmem:[#allocation2 + $0x80] sm:$0xff]
        %v2838 = vld [vmem:[#allocation2 + $0x90] sm:$0xff]
        %v2839 = vld [vmem:[#allocation2 + $0x98] sm:$0xff]
        %v2840 = vld [vmem:[#allocation2 + $0xa8] sm:$0xff]
        %v2841 = vld [vmem:[#allocation2 + $0xb0] sm:$0xff]
        %v2842 = vld [vmem:[#allocation2 + $0xc0] sm:$0xff]
        %v2843 = vld [vmem:[#allocation2 + $0xc8] sm:$0xff]
        %v2844 = vld [vmem:[#allocation2 + $0xd8] sm:$0xff]
        %v2845 = vld [vmem:[#allocation2 + $0xe0] sm:$0xff]
        %v2846 = vld [vmem:[#allocation2 + $0xf0] sm:$0xff]
        %v2847 = vld [vmem:[#allocation2 + $0xf8] sm:$0xff]
        %v2848 = vld [vmem:[#allocation2 + $0x108] sm:$0xff]
        %v2849 = vld [vmem:[#allocation2 + $0x110] sm:$0xff]
        %v2850 = vld [vmem:[#allocation2 + $0x120] sm:$0xff]
        %v2851 = vld [vmem:[#allocation2 + $0x128] sm:$0xff]
        %v2852 = vld [vmem:[#allocation2 + $0x138] sm:$0xff]
        %v2853 = vld [vmem:[#allocation2 + $0x140] sm:$0xff]
        %v2854 = vld [vmem:[#allocation2 + $0x150] sm:$0xff]
        %v2855 = vld [vmem:[#allocation2 + $0x158] sm:$0xff]
        %v2856 = vld [vmem:[#allocation2 + $0x168] sm:$0xff]
        %v2857 = vld [vmem:[#allocation2 + $0x170] sm:$0xff]
        %v2858 = vpack.c.bf16 %v2827, %v2826
        %v2859 = vpack.c.bf16 %v2829, %v2828
        %v2860 = vpack.c.bf16 %v2831, %v2830
        %v2861 = vpack.c.bf16 %v2833, %v2832
        %v2862 = vpack.c.bf16 %v2835, %v2834
        %v2863 = vpack.c.bf16 %v2837, %v2836
        %v2864 = vpack.c.bf16 %v2839, %v2838
        %v2865 = vpack.c.bf16 %v2841, %v2840
        %v2866 = vpack.c.bf16 %v2843, %v2842
        %v2867 = vpack.c.bf16 %v2845, %v2844
        %v2868 = vpack.c.bf16 %v2847, %v2846
        %v2869 = vpack.c.bf16 %v2849, %v2848
        %v2870 = vpack.c.bf16 %v2851, %v2850
        %v2871 = vpack.c.bf16 %v2853, %v2852
        %v2872 = vpack.c.bf16 %v2855, %v2854
        %v2873 = vpack.c.bf16 %v2857, %v2856
        %v2874 = vld [vmem:[#allocation2 + $0x1] sm:$0xff]
        %v2875 = vld [vmem:[#allocation2 + $0x9] sm:$0xff]
        %v2876 = vld [vmem:[#allocation2 + $0x19] sm:$0xff]
        %v2877 = vld [vmem:[#allocation2 + $0x21] sm:$0xff]
        %v2878 = vld [vmem:[#allocation2 + $0x31] sm:$0xff]
        %v2879 = vld [vmem:[#allocation2 + $0x39] sm:$0xff]
        %v2880 = vld [vmem:[#allocation2 + $0x49] sm:$0xff]
        %v2881 = vld [vmem:[#allocation2 + $0x51] sm:$0xff]
        %v2882 = vld [vmem:[#allocation2 + $0x61] sm:$0xff]
        %v2883 = vld [vmem:[#allocation2 + $0x69] sm:$0xff]
        %v2884 = vld [vmem:[#allocation2 + $0x79] sm:$0xff]
        %v2885 = vld [vmem:[#allocation2 + $0x81] sm:$0xff]
        %v2886 = vld [vmem:[#allocation2 + $0x91] sm:$0xff]
        %v2887 = vld [vmem:[#allocation2 + $0x99] sm:$0xff]
        %v2888 = vld [vmem:[#allocation2 + $0xa9] sm:$0xff]
        %v2889 = vld [vmem:[#allocation2 + $0xb1] sm:$0xff]
        %v2890 = vld [vmem:[#allocation2 + $0xc1] sm:$0xff]
        %v2891 = vld [vmem:[#allocation2 + $0xc9] sm:$0xff]
        %v2892 = vld [vmem:[#allocation2 + $0xd9] sm:$0xff]
        %v2893 = vld [vmem:[#allocation2 + $0xe1] sm:$0xff]
        %v2894 = vld [vmem:[#allocation2 + $0xf1] sm:$0xff]
        %v2895 = vld [vmem:[#allocation2 + $0xf9] sm:$0xff]
        %v2896 = vld [vmem:[#allocation2 + $0x109] sm:$0xff]
        %v2897 = vld [vmem:[#allocation2 + $0x111] sm:$0xff]
        %v2898 = vld [vmem:[#allocation2 + $0x121] sm:$0xff]
        %v2899 = vld [vmem:[#allocation2 + $0x129] sm:$0xff]
        %v2900 = vld [vmem:[#allocation2 + $0x139] sm:$0xff]
        %v2901 = vld [vmem:[#allocation2 + $0x141] sm:$0xff]
        %v2902 = vld [vmem:[#allocation2 + $0x151] sm:$0xff]
        %v2903 = vld [vmem:[#allocation2 + $0x159] sm:$0xff]
        %v2904 = vld [vmem:[#allocation2 + $0x169] sm:$0xff]
        %v2905 = vld [vmem:[#allocation2 + $0x171] sm:$0xff]
        %v2906 = vpack.c.bf16 %v2875, %v2874
        %v2907 = vpack.c.bf16 %v2877, %v2876
        %v2908 = vpack.c.bf16 %v2879, %v2878
        %v2909 = vpack.c.bf16 %v2881, %v2880
        %v2910 = vpack.c.bf16 %v2883, %v2882
        %v2911 = vpack.c.bf16 %v2885, %v2884
        %v2912 = vpack.c.bf16 %v2887, %v2886
        %v2913 = vpack.c.bf16 %v2889, %v2888
        %v2914 = vpack.c.bf16 %v2891, %v2890
        %v2915 = vpack.c.bf16 %v2893, %v2892
        %v2916 = vpack.c.bf16 %v2895, %v2894
        %v2917 = vpack.c.bf16 %v2897, %v2896
        %v2918 = vpack.c.bf16 %v2899, %v2898
        %v2919 = vpack.c.bf16 %v2901, %v2900
        %v2920 = vpack.c.bf16 %v2903, %v2902
        %v2921 = vpack.c.bf16 %v2905, %v2904
        %v2922 = vld [vmem:[#allocation2 + $0x2] sm:$0xff]
        %v2923 = vld [vmem:[#allocation2 + $0xa] sm:$0xff]
        %v2924 = vld [vmem:[#allocation2 + $0x1a] sm:$0xff]
        %v2925 = vld [vmem:[#allocation2 + $0x22] sm:$0xff]
        %v2926 = vld [vmem:[#allocation2 + $0x32] sm:$0xff]
        %v2927 = vld [vmem:[#allocation2 + $0x3a] sm:$0xff]
        %v2928 = vld [vmem:[#allocation2 + $0x4a] sm:$0xff]
        %v2929 = vld [vmem:[#allocation2 + $0x52] sm:$0xff]
        %v2930 = vld [vmem:[#allocation2 + $0x62] sm:$0xff]
        %v2931 = vld [vmem:[#allocation2 + $0x6a] sm:$0xff]
        %v2932 = vld [vmem:[#allocation2 + $0x7a] sm:$0xff]
        %v2933 = vld [vmem:[#allocation2 + $0x82] sm:$0xff]
        %v2934 = vld [vmem:[#allocation2 + $0x92] sm:$0xff]
        %v2935 = vld [vmem:[#allocation2 + $0x9a] sm:$0xff]
        %v2936 = vld [vmem:[#allocation2 + $0xaa] sm:$0xff]
        %v2937 = vld [vmem:[#allocation2 + $0xb2] sm:$0xff]
        %v2938 = vld [vmem:[#allocation2 + $0xc2] sm:$0xff]
        %v2939 = vld [vmem:[#allocation2 + $0xca] sm:$0xff]
        %v2940 = vld [vmem:[#allocation2 + $0xda] sm:$0xff]
        %v2941 = vld [vmem:[#allocation2 + $0xe2] sm:$0xff]
        %v2942 = vld [vmem:[#allocation2 + $0xf2] sm:$0xff]
        %v2943 = vld [vmem:[#allocation2 + $0xfa] sm:$0xff]
        %v2944 = vld [vmem:[#allocation2 + $0x10a] sm:$0xff]
        %v2945 = vld [vmem:[#allocation2 + $0x112] sm:$0xff]
        %v2946 = vld [vmem:[#allocation2 + $0x122] sm:$0xff]
        %v2947 = vld [vmem:[#allocation2 + $0x12a] sm:$0xff]
        %v2948 = vld [vmem:[#allocation2 + $0x13a] sm:$0xff]
        %v2949 = vld [vmem:[#allocation2 + $0x142] sm:$0xff]
        %v2950 = vld [vmem:[#allocation2 + $0x152] sm:$0xff]
        %v2951 = vld [vmem:[#allocation2 + $0x15a] sm:$0xff]
        %v2952 = vld [vmem:[#allocation2 + $0x16a] sm:$0xff]
        %v2953 = vld [vmem:[#allocation2 + $0x172] sm:$0xff]
        %v2954 = vpack.c.bf16 %v2923, %v2922
        %v2955 = vpack.c.bf16 %v2925, %v2924
        %v2956 = vpack.c.bf16 %v2927, %v2926
        %v2957 = vpack.c.bf16 %v2929, %v2928
        %v2958 = vpack.c.bf16 %v2931, %v2930
        %v2959 = vpack.c.bf16 %v2933, %v2932
        %v2960 = vpack.c.bf16 %v2935, %v2934
        %v2961 = vpack.c.bf16 %v2937, %v2936
        %v2962 = vpack.c.bf16 %v2939, %v2938
        %v2963 = vpack.c.bf16 %v2941, %v2940
        %v2964 = vpack.c.bf16 %v2943, %v2942
        %v2965 = vpack.c.bf16 %v2945, %v2944
        %v2966 = vpack.c.bf16 %v2947, %v2946
        %v2967 = vpack.c.bf16 %v2949, %v2948
        %v2968 = vpack.c.bf16 %v2951, %v2950
        %v2969 = vpack.c.bf16 %v2953, %v2952
        %v2970 = vld [vmem:[%s501] sm:$0xff]
        %v2971 = vld [vmem:[%s501 + $0x8] sm:$0xff]
        %v2972 = vld [vmem:[%s501 + $0x18] sm:$0xff]
        %v2973 = vld [vmem:[%s501 + $0x20] sm:$0xff]
        %v2974 = vld [vmem:[%s501 + $0x30] sm:$0xff]
        %v2975 = vld [vmem:[%s501 + $0x38] sm:$0xff]
        %v2976 = vld [vmem:[%s501 + $0x48] sm:$0xff]
        %v2977 = vld [vmem:[%s501 + $0x50] sm:$0xff]
        %v2978 = vld [vmem:[%s501 + $0x60] sm:$0xff]
        %v2979 = vld [vmem:[%s501 + $0x68] sm:$0xff]
        %v2980 = vld [vmem:[%s501 + $0x78] sm:$0xff]
        %v2981 = vld [vmem:[%s501 + $0x80] sm:$0xff]
        %v2982 = vld [vmem:[%s501 + $0x90] sm:$0xff]
        %v2983 = vld [vmem:[%s501 + $0x98] sm:$0xff]
        %v2984 = vld [vmem:[%s501 + $0xa8] sm:$0xff]
        %v2985 = vld [vmem:[%s501 + $0xb0] sm:$0xff]
        %v2986 = vld [vmem:[%s501 + $0xc0] sm:$0xff]
        %v2987 = vld [vmem:[%s501 + $0xc8] sm:$0xff]
        %v2988 = vld [vmem:[%s501 + $0xd8] sm:$0xff]
        %v2989 = vld [vmem:[%s501 + $0xe0] sm:$0xff]
        %v2990 = vld [vmem:[%s501 + $0xf0] sm:$0xff]
        %v2991 = vld [vmem:[%s501 + $0xf8] sm:$0xff]
        %v2992 = vld [vmem:[%s501 + $0x108] sm:$0xff]
        %v2993 = vld [vmem:[%s501 + $0x110] sm:$0xff]
        %v2994 = vld [vmem:[%s501 + $0x120] sm:$0xff]
        %v2995 = vld [vmem:[%s501 + $0x128] sm:$0xff]
        %v2996 = vld [vmem:[%s501 + $0x138] sm:$0xff]
        %v2997 = vld [vmem:[%s501 + $0x140] sm:$0xff]
        %v2998 = vld [vmem:[%s501 + $0x150] sm:$0xff]
        %v2999 = vld [vmem:[%s501 + $0x158] sm:$0xff]
        %v3000 = vld [vmem:[%s501 + $0x168] sm:$0xff]
        %v3001 = vld [vmem:[%s501 + $0x170] sm:$0xff]
        %v3002 = vpack.c.bf16 %v2971, %v2970
        %v3003 = vpack.c.bf16 %v2973, %v2972
        %v3004 = vpack.c.bf16 %v2975, %v2974
        %v3005 = vpack.c.bf16 %v2977, %v2976
        %v3006 = vpack.c.bf16 %v2979, %v2978
        %v3007 = vpack.c.bf16 %v2981, %v2980
        %v3008 = vpack.c.bf16 %v2983, %v2982
        %v3009 = vpack.c.bf16 %v2985, %v2984
        %v3010 = vpack.c.bf16 %v2987, %v2986
        %v3011 = vpack.c.bf16 %v2989, %v2988
        %v3012 = vpack.c.bf16 %v2991, %v2990
        %v3013 = vpack.c.bf16 %v2993, %v2992
        %v3014 = vpack.c.bf16 %v2995, %v2994
        %v3015 = vpack.c.bf16 %v2997, %v2996
        %v3016 = vpack.c.bf16 %v2999, %v2998
        %v3017 = vpack.c.bf16 %v3001, %v3000
        %v3018 = vld [vmem:[%s501 + $0x1] sm:$0xff]
        %v3019 = vld [vmem:[%s501 + $0x9] sm:$0xff]
        %v3020 = vld [vmem:[%s501 + $0x19] sm:$0xff]
        %v3021 = vld [vmem:[%s501 + $0x21] sm:$0xff]
        %v3022 = vld [vmem:[%s501 + $0x31] sm:$0xff]
        %v3023 = vld [vmem:[%s501 + $0x39] sm:$0xff]
        %v3024 = vld [vmem:[%s501 + $0x49] sm:$0xff]
        %v3025 = vld [vmem:[%s501 + $0x51] sm:$0xff]
        %v3026 = vld [vmem:[%s501 + $0x61] sm:$0xff]
        %v3027 = vld [vmem:[%s501 + $0x69] sm:$0xff]
        %v3028 = vld [vmem:[%s501 + $0x79] sm:$0xff]
        %v3029 = vld [vmem:[%s501 + $0x81] sm:$0xff]
        %v3030 = vld [vmem:[%s501 + $0x91] sm:$0xff]
        %v3031 = vld [vmem:[%s501 + $0x99] sm:$0xff]
        %v3032 = vld [vmem:[%s501 + $0xa9] sm:$0xff]
        %v3033 = vld [vmem:[%s501 + $0xb1] sm:$0xff]
        %v3034 = vld [vmem:[%s501 + $0xc1] sm:$0xff]
        %v3035 = vld [vmem:[%s501 + $0xc9] sm:$0xff]
        %v3036 = vld [vmem:[%s501 + $0xd9] sm:$0xff]
        %v3037 = vld [vmem:[%s501 + $0xe1] sm:$0xff]
        %v3038 = vld [vmem:[%s501 + $0xf1] sm:$0xff]
        %v3039 = vld [vmem:[%s501 + $0xf9] sm:$0xff]
        %v3040 = vld [vmem:[%s501 + $0x109] sm:$0xff]
        %v3041 = vld [vmem:[%s501 + $0x111] sm:$0xff]
        %v3042 = vld [vmem:[%s501 + $0x121] sm:$0xff]
        %v3043 = vld [vmem:[%s501 + $0x129] sm:$0xff]
        %v3044 = vld [vmem:[%s501 + $0x139] sm:$0xff]
        %v3045 = vld [vmem:[%s501 + $0x141] sm:$0xff]
        %v3046 = vld [vmem:[%s501 + $0x151] sm:$0xff]
        %v3047 = vld [vmem:[%s501 + $0x159] sm:$0xff]
        %v3048 = vld [vmem:[%s501 + $0x169] sm:$0xff]
        %v3049 = vld [vmem:[%s501 + $0x171] sm:$0xff]
        %v3050 = vpack.c.bf16 %v3019, %v3018
        %v3051 = vpack.c.bf16 %v3021, %v3020
        %v3052 = vpack.c.bf16 %v3023, %v3022
        %v3053 = vpack.c.bf16 %v3025, %v3024
        %v3054 = vpack.c.bf16 %v3027, %v3026
        %v3055 = vpack.c.bf16 %v3029, %v3028
        %v3056 = vpack.c.bf16 %v3031, %v3030
        %v3057 = vpack.c.bf16 %v3033, %v3032
        %v3058 = vpack.c.bf16 %v3035, %v3034
        %v3059 = vpack.c.bf16 %v3037, %v3036
        %v3060 = vpack.c.bf16 %v3039, %v3038
        %v3061 = vpack.c.bf16 %v3041, %v3040
        %v3062 = vpack.c.bf16 %v3043, %v3042
        %v3063 = vpack.c.bf16 %v3045, %v3044
        %v3064 = vpack.c.bf16 %v3047, %v3046
        %v3065 = vpack.c.bf16 %v3049, %v3048
        %v3066 = vld [vmem:[%s501 + $0x2] sm:$0xff]
        %v3067 = vld [vmem:[%s501 + $0xa] sm:$0xff]
        %v3068 = vld [vmem:[%s501 + $0x1a] sm:$0xff]
        %v3069 = vld [vmem:[%s501 + $0x22] sm:$0xff]
        %v3070 = vld [vmem:[%s501 + $0x32] sm:$0xff]
        %v3071 = vld [vmem:[%s501 + $0x3a] sm:$0xff]
        %v3072 = vld [vmem:[%s501 + $0x4a] sm:$0xff]
        %v3073 = vld [vmem:[%s501 + $0x52] sm:$0xff]
        %v3074 = vld [vmem:[%s501 + $0x62] sm:$0xff]
        %v3075 = vld [vmem:[%s501 + $0x6a] sm:$0xff]
        %v3076 = vld [vmem:[%s501 + $0x7a] sm:$0xff]
        %v3077 = vld [vmem:[%s501 + $0x82] sm:$0xff]
        %v3078 = vld [vmem:[%s501 + $0x92] sm:$0xff]
        %v3079 = vld [vmem:[%s501 + $0x9a] sm:$0xff]
        %v3080 = vld [vmem:[%s501 + $0xaa] sm:$0xff]
        %v3081 = vld [vmem:[%s501 + $0xb2] sm:$0xff]
        %v3082 = vld [vmem:[%s501 + $0xc2] sm:$0xff]
        %v3083 = vld [vmem:[%s501 + $0xca] sm:$0xff]
        %v3084 = vld [vmem:[%s501 + $0xda] sm:$0xff]
        %v3085 = vld [vmem:[%s501 + $0xe2] sm:$0xff]
        %v3086 = vld [vmem:[%s501 + $0xf2] sm:$0xff]
        %v3087 = vld [vmem:[%s501 + $0xfa] sm:$0xff]
        %v3088 = vld [vmem:[%s501 + $0x10a] sm:$0xff]
        %v3089 = vld [vmem:[%s501 + $0x112] sm:$0xff]
        %v3090 = vld [vmem:[%s501 + $0x122] sm:$0xff]
        %v3091 = vld [vmem:[%s501 + $0x12a] sm:$0xff]
        %v3092 = vld [vmem:[%s501 + $0x13a] sm:$0xff]
        %v3093 = vld [vmem:[%s501 + $0x142] sm:$0xff]
        %v3094 = vld [vmem:[%s501 + $0x152] sm:$0xff]
        %v3095 = vld [vmem:[%s501 + $0x15a] sm:$0xff]
        %v3096 = vld [vmem:[%s501 + $0x16a] sm:$0xff]
        %v3097 = vld [vmem:[%s501 + $0x172] sm:$0xff]
        %v3098 = vpack.c.bf16 %v3067, %v3066
        %v3099 = vpack.c.bf16 %v3069, %v3068
        %v3100 = vpack.c.bf16 %v3071, %v3070
        %v3101 = vpack.c.bf16 %v3073, %v3072
        %v3102 = vpack.c.bf16 %v3075, %v3074
        %v3103 = vpack.c.bf16 %v3077, %v3076
        %v3104 = vpack.c.bf16 %v3079, %v3078
        %v3105 = vpack.c.bf16 %v3081, %v3080
        %v3106 = vpack.c.bf16 %v3083, %v3082
        %v3107 = vpack.c.bf16 %v3085, %v3084
        %v3108 = vpack.c.bf16 %v3087, %v3086
        %v3109 = vpack.c.bf16 %v3089, %v3088
        %v3110 = vpack.c.bf16 %v3091, %v3090
        %v3111 = vpack.c.bf16 %v3093, %v3092
        %v3112 = vpack.c.bf16 %v3095, %v3094
        %v3113 = vpack.c.bf16 %v3097, %v3096
        %v3114 = vld [vmem:[%s899] sm:$0xff]
        %v3115 = vld [vmem:[%s899 + $0x8] sm:$0xff]
        %v3116 = vld [vmem:[%s899 + $0x18] sm:$0xff]
        %v3117 = vld [vmem:[%s899 + $0x20] sm:$0xff]
        %v3118 = vld [vmem:[%s899 + $0x30] sm:$0xff]
        %v3119 = vld [vmem:[%s899 + $0x38] sm:$0xff]
        %v3120 = vld [vmem:[%s899 + $0x48] sm:$0xff]
        %v3121 = vld [vmem:[%s899 + $0x50] sm:$0xff]
        %v3122 = vld [vmem:[%s899 + $0x60] sm:$0xff]
        %v3123 = vld [vmem:[%s899 + $0x68] sm:$0xff]
        %v3124 = vld [vmem:[%s899 + $0x78] sm:$0xff]
        %v3125 = vld [vmem:[%s899 + $0x80] sm:$0xff]
        %v3126 = vld [vmem:[%s899 + $0x90] sm:$0xff]
        %v3127 = vld [vmem:[%s899 + $0x98] sm:$0xff]
        %v3128 = vld [vmem:[%s899 + $0xa8] sm:$0xff]
        %v3129 = vld [vmem:[%s899 + $0xb0] sm:$0xff]
        %v3130 = vld [vmem:[%s899 + $0xc0] sm:$0xff]
        %v3131 = vld [vmem:[%s899 + $0xc8] sm:$0xff]
        %v3132 = vld [vmem:[%s899 + $0xd8] sm:$0xff]
        %v3133 = vld [vmem:[%s899 + $0xe0] sm:$0xff]
        %v3134 = vld [vmem:[%s899 + $0xf0] sm:$0xff]
        %v3135 = vld [vmem:[%s899 + $0xf8] sm:$0xff]
        %v3136 = vld [vmem:[%s899 + $0x108] sm:$0xff]
        %v3137 = vld [vmem:[%s899 + $0x110] sm:$0xff]
        %v3138 = vld [vmem:[%s899 + $0x120] sm:$0xff]
        %v3139 = vld [vmem:[%s899 + $0x128] sm:$0xff]
        %v3140 = vld [vmem:[%s899 + $0x138] sm:$0xff]
        %v3141 = vld [vmem:[%s899 + $0x140] sm:$0xff]
        %v3142 = vld [vmem:[%s899 + $0x150] sm:$0xff]
        %v3143 = vld [vmem:[%s899 + $0x158] sm:$0xff]
        %v3144 = vld [vmem:[%s899 + $0x168] sm:$0xff]
        %v3145 = vld [vmem:[%s899 + $0x170] sm:$0xff]
        %v3146 = vpack.c.bf16 %v3115, %v3114
        %v3147 = vpack.c.bf16 %v3117, %v3116
        %v3148 = vpack.c.bf16 %v3119, %v3118
        %v3149 = vpack.c.bf16 %v3121, %v3120
        %v3150 = vpack.c.bf16 %v3123, %v3122
        %v3151 = vpack.c.bf16 %v3125, %v3124
        %v3152 = vpack.c.bf16 %v3127, %v3126
        %v3153 = vpack.c.bf16 %v3129, %v3128
        %v3154 = vpack.c.bf16 %v3131, %v3130
        %v3155 = vpack.c.bf16 %v3133, %v3132
        %v3156 = vpack.c.bf16 %v3135, %v3134
        %v3157 = vpack.c.bf16 %v3137, %v3136
        %v3158 = vpack.c.bf16 %v3139, %v3138
        %v3159 = vpack.c.bf16 %v3141, %v3140
        %v3160 = vpack.c.bf16 %v3143, %v3142
        %v3161 = vpack.c.bf16 %v3145, %v3144
        %v3162 = vld [vmem:[%s899 + $0x1] sm:$0xff]
        %v3163 = vld [vmem:[%s899 + $0x9] sm:$0xff]
        %v3164 = vld [vmem:[%s899 + $0x19] sm:$0xff]
        %v3165 = vld [vmem:[%s899 + $0x21] sm:$0xff]
        %v3166 = vld [vmem:[%s899 + $0x31] sm:$0xff]
        %v3167 = vld [vmem:[%s899 + $0x39] sm:$0xff]
        %v3168 = vld [vmem:[%s899 + $0x49] sm:$0xff]
        %v3169 = vld [vmem:[%s899 + $0x51] sm:$0xff]
        %v3170 = vld [vmem:[%s899 + $0x61] sm:$0xff]
        %v3171 = vld [vmem:[%s899 + $0x69] sm:$0xff]
        %v3172 = vld [vmem:[%s899 + $0x79] sm:$0xff]
        %v3173 = vld [vmem:[%s899 + $0x81] sm:$0xff]
        %v3174 = vld [vmem:[%s899 + $0x91] sm:$0xff]
        %v3175 = vld [vmem:[%s899 + $0x99] sm:$0xff]
        %v3176 = vld [vmem:[%s899 + $0xa9] sm:$0xff]
        %v3177 = vld [vmem:[%s899 + $0xb1] sm:$0xff]
        %v3178 = vld [vmem:[%s899 + $0xc1] sm:$0xff]
        %v3179 = vld [vmem:[%s899 + $0xc9] sm:$0xff]
        %v3180 = vld [vmem:[%s899 + $0xd9] sm:$0xff]
        %v3181 = vld [vmem:[%s899 + $0xe1] sm:$0xff]
        %v3182 = vld [vmem:[%s899 + $0xf1] sm:$0xff]
        %v3183 = vld [vmem:[%s899 + $0xf9] sm:$0xff]
        %v3184 = vld [vmem:[%s899 + $0x109] sm:$0xff]
        %v3185 = vld [vmem:[%s899 + $0x111] sm:$0xff]
        %v3186 = vld [vmem:[%s899 + $0x121] sm:$0xff]
        %v3187 = vld [vmem:[%s899 + $0x129] sm:$0xff]
        %v3188 = vld [vmem:[%s899 + $0x139] sm:$0xff]
        %v3189 = vld [vmem:[%s899 + $0x141] sm:$0xff]
        %v3190 = vld [vmem:[%s899 + $0x151] sm:$0xff]
        %v3191 = vld [vmem:[%s899 + $0x159] sm:$0xff]
        %v3192 = vld [vmem:[%s899 + $0x169] sm:$0xff]
        %v3193 = vld [vmem:[%s899 + $0x171] sm:$0xff]
        %v3194 = vpack.c.bf16 %v3163, %v3162
        %v3195 = vpack.c.bf16 %v3165, %v3164
        %v3196 = vpack.c.bf16 %v3167, %v3166
        %v3197 = vpack.c.bf16 %v3169, %v3168
        %v3198 = vpack.c.bf16 %v3171, %v3170
        %v3199 = vpack.c.bf16 %v3173, %v3172
        %v3200 = vpack.c.bf16 %v3175, %v3174
        %v3201 = vpack.c.bf16 %v3177, %v3176
        %v3202 = vpack.c.bf16 %v3179, %v3178
        %v3203 = vpack.c.bf16 %v3181, %v3180
        %v3204 = vpack.c.bf16 %v3183, %v3182
        %v3205 = vpack.c.bf16 %v3185, %v3184
        %v3206 = vpack.c.bf16 %v3187, %v3186
        %v3207 = vpack.c.bf16 %v3189, %v3188
        %v3208 = vpack.c.bf16 %v3191, %v3190
        %v3209 = vpack.c.bf16 %v3193, %v3192
        %v3210 = vld [vmem:[%s899 + $0x2] sm:$0xff]
        %v3211 = vld [vmem:[%s899 + $0xa] sm:$0xff]
        %v3212 = vld [vmem:[%s899 + $0x1a] sm:$0xff]
        %v3213 = vld [vmem:[%s899 + $0x22] sm:$0xff]
        %v3214 = vld [vmem:[%s899 + $0x32] sm:$0xff]
        %v3215 = vld [vmem:[%s899 + $0x3a] sm:$0xff]
        %v3216 = vld [vmem:[%s899 + $0x4a] sm:$0xff]
        %v3217 = vld [vmem:[%s899 + $0x52] sm:$0xff]
        %v3218 = vld [vmem:[%s899 + $0x62] sm:$0xff]
        %v3219 = vld [vmem:[%s899 + $0x6a] sm:$0xff]
        %v3220 = vld [vmem:[%s899 + $0x7a] sm:$0xff]
        %v3221 = vld [vmem:[%s899 + $0x82] sm:$0xff]
        %v3222 = vld [vmem:[%s899 + $0x92] sm:$0xff]
        %v3223 = vld [vmem:[%s899 + $0x9a] sm:$0xff]
        %v3224 = vld [vmem:[%s899 + $0xaa] sm:$0xff]
        %v3225 = vld [vmem:[%s899 + $0xb2] sm:$0xff]
        %v3226 = vld [vmem:[%s899 + $0xc2] sm:$0xff]
        %v3227 = vld [vmem:[%s899 + $0xca] sm:$0xff]
        %v3228 = vld [vmem:[%s899 + $0xda] sm:$0xff]
        %v3229 = vld [vmem:[%s899 + $0xe2] sm:$0xff]
        %v3230 = vld [vmem:[%s899 + $0xf2] sm:$0xff]
        %v3231 = vld [vmem:[%s899 + $0xfa] sm:$0xff]
        %v3232 = vld [vmem:[%s899 + $0x10a] sm:$0xff]
        %v3233 = vld [vmem:[%s899 + $0x112] sm:$0xff]
        %v3234 = vld [vmem:[%s899 + $0x122] sm:$0xff]
        %v3235 = vld [vmem:[%s899 + $0x12a] sm:$0xff]
        %v3236 = vld [vmem:[%s899 + $0x13a] sm:$0xff]
        %v3237 = vld [vmem:[%s899 + $0x142] sm:$0xff]
        %v3238 = vld [vmem:[%s899 + $0x152] sm:$0xff]
        %v3239 = vld [vmem:[%s899 + $0x15a] sm:$0xff]
        %v3240 = vld [vmem:[%s899 + $0x16a] sm:$0xff]
        %v3241 = vld [vmem:[%s899 + $0x172] sm:$0xff]
        %v3242 = vpack.c.bf16 %v3211, %v3210
        %v3243 = vpack.c.bf16 %v3213, %v3212
        %v3244 = vpack.c.bf16 %v3215, %v3214
        %v3245 = vpack.c.bf16 %v3217, %v3216
        %v3246 = vpack.c.bf16 %v3219, %v3218
        %v3247 = vpack.c.bf16 %v3221, %v3220
        %v3248 = vpack.c.bf16 %v3223, %v3222
        %v3249 = vpack.c.bf16 %v3225, %v3224
        %v3250 = vpack.c.bf16 %v3227, %v3226
        %v3251 = vpack.c.bf16 %v3229, %v3228
        %v3252 = vpack.c.bf16 %v3231, %v3230
        %v3253 = vpack.c.bf16 %v3233, %v3232
        %v3254 = vpack.c.bf16 %v3235, %v3234
        %v3255 = vpack.c.bf16 %v3237, %v3236
        %v3256 = vpack.c.bf16 %v3239, %v3238
        %v3257 = vpack.c.bf16 %v3241, %v3240
        %v3258 = vld [vmem:[#allocation4] sm:$0xf]
        %v3259 = vld [vmem:[#allocation4 + $0x4] sm:$0xf]
        %v3260 = vld [vmem:[#allocation4 + $0x8] sm:$0xf]
        %v3261 = vld [vmem:[#allocation4 + $0xc] sm:$0xf]
        %v3262 = vld [vmem:[#allocation4 + $0x10] sm:$0xf]
        %v3263 = vld [vmem:[#allocation4 + $0x14] sm:$0xf]
        %v3264 = vld [vmem:[#allocation4 + $0x18] sm:$0xf]
        %v3265 = vld [vmem:[#allocation4 + $0x1c] sm:$0xf]
        %v3266 = vld [vmem:[#allocation4 + $0x20] sm:$0xf]
        %v3267 = vld [vmem:[#allocation4 + $0x24] sm:$0xf]
        %v3268 = vld [vmem:[#allocation4 + $0x28] sm:$0xf]
        %v3269 = vld [vmem:[#allocation4 + $0x2c] sm:$0xf]
        %v3270 = vld [vmem:[#allocation4 + $0x30] sm:$0xf]
        %v3271 = vld [vmem:[#allocation4 + $0x34] sm:$0xf]
        %v3272 = vld [vmem:[#allocation4 + $0x38] sm:$0xf]
        %v3273 = vld [vmem:[#allocation4 + $0x3c] sm:$0xf]
        %v3274 = vld [vmem:[#allocation4 + $0x40] sm:$0xf]
        %v3275 = vld [vmem:[#allocation4 + $0x44] sm:$0xf]
        %v3276 = vld [vmem:[#allocation4 + $0x48] sm:$0xf]
        %v3277 = vld [vmem:[#allocation4 + $0x4c] sm:$0xf]
        %v3278 = vld [vmem:[#allocation4 + $0x50] sm:$0xf]
        %v3279 = vld [vmem:[#allocation4 + $0x54] sm:$0xf]
        %v3280 = vld [vmem:[#allocation4 + $0x58] sm:$0xf]
        %v3281 = vld [vmem:[#allocation4 + $0x5c] sm:$0xf]
        %v3282 = vld [vmem:[#allocation4 + $0x60] sm:$0xf]
        %v3283 = vld [vmem:[#allocation4 + $0x64] sm:$0xf]
        %v3284 = vld [vmem:[#allocation4 + $0x68] sm:$0xf]
        %v3285 = vld [vmem:[#allocation4 + $0x6c] sm:$0xf]
        %v3286 = vld [vmem:[#allocation4 + $0x70] sm:$0xf]
        %v3287 = vld [vmem:[#allocation4 + $0x74] sm:$0xf]
        %v3288 = vld [vmem:[#allocation4 + $0x78] sm:$0xf]
        %v3289 = vld [vmem:[#allocation4 + $0x7c] sm:$0xf]
        %v3290 = vld [vmem:[#allocation4 + $0x80] sm:$0xf]
        %v3291 = vld [vmem:[#allocation4 + $0x84] sm:$0xf]
        %v3292 = vld [vmem:[#allocation4 + $0x88] sm:$0xf]
        %v3293 = vld [vmem:[#allocation4 + $0x8c] sm:$0xf]
        %v3294 = vld [vmem:[#allocation4 + $0x90] sm:$0xf]
        %v3295 = vld [vmem:[#allocation4 + $0x94] sm:$0xf]
        %v3296 = vld [vmem:[#allocation4 + $0x98] sm:$0xf]
        %v3297 = vld [vmem:[#allocation4 + $0x9c] sm:$0xf]
        %v3298 = vld [vmem:[#allocation4 + $0xa0] sm:$0xf]
        %v3299 = vld [vmem:[#allocation4 + $0xa4] sm:$0xf]
        %v3300 = vld [vmem:[#allocation4 + $0xa8] sm:$0xf]
        %v3301 = vld [vmem:[#allocation4 + $0xac] sm:$0xf]
        %v3302 = vld [vmem:[#allocation4 + $0xb0] sm:$0xf]
        %v3303 = vld [vmem:[#allocation4 + $0xb4] sm:$0xf]
        %v3304 = vld [vmem:[#allocation4 + $0xb8] sm:$0xf]
        %v3305 = vld [vmem:[#allocation4 + $0xbc] sm:$0xf]
        %v3306 = vld [vmem:[#allocation4 + $0xc0] sm:$0xf]
        %v3307 = vld [vmem:[#allocation4 + $0xc4] sm:$0xf]
        %v3308 = vld [vmem:[#allocation4 + $0xc8] sm:$0xf]
        %v3309 = vld [vmem:[#allocation4 + $0xcc] sm:$0xf]
        %v3310 = vld [vmem:[#allocation4 + $0xd0] sm:$0xf]
        %v3311 = vld [vmem:[#allocation4 + $0xd4] sm:$0xf]
        %v3312 = vld [vmem:[#allocation4 + $0xd8] sm:$0xf]
        %v3313 = vld [vmem:[#allocation4 + $0xdc] sm:$0xf]
        %v3314 = vld [vmem:[#allocation4 + $0xe0] sm:$0xf]
        %v3315 = vld [vmem:[#allocation4 + $0xe4] sm:$0xf]
        %v3316 = vld [vmem:[#allocation4 + $0xe8] sm:$0xf]
        %v3317 = vld [vmem:[#allocation4 + $0xec] sm:$0xf]
        %v3318 = vld [vmem:[#allocation4 + $0xf0] sm:$0xf]
        %v3319 = vld [vmem:[#allocation4 + $0xf4] sm:$0xf]
        %v3320 = vld [vmem:[#allocation4 + $0xf8] sm:$0xf]
        %v3321 = vld [vmem:[#allocation4 + $0xfc] sm:$0xf]
        %v3322 = vld [vmem:[#allocation4 + $0x100] sm:$0xf]
        %v3323 = vld [vmem:[#allocation4 + $0x104] sm:$0xf]
        %v3324 = vld [vmem:[#allocation4 + $0x108] sm:$0xf]
        %v3325 = vld [vmem:[#allocation4 + $0x10c] sm:$0xf]
        %v3326 = vld [vmem:[#allocation4 + $0x110] sm:$0xf]
        %v3327 = vld [vmem:[#allocation4 + $0x114] sm:$0xf]
        %v3328 = vld [vmem:[#allocation4 + $0x118] sm:$0xf]
        %v3329 = vld [vmem:[#allocation4 + $0x11c] sm:$0xf]
        %v3330 = vld [vmem:[#allocation4 + $0x120] sm:$0xf]
        %v3331 = vld [vmem:[#allocation4 + $0x124] sm:$0xf]
        %v3332 = vld [vmem:[#allocation4 + $0x128] sm:$0xf]
        %v3333 = vld [vmem:[#allocation4 + $0x12c] sm:$0xf]
        %v3334 = vld [vmem:[#allocation4 + $0x130] sm:$0xf]
        %v3335 = vld [vmem:[#allocation4 + $0x134] sm:$0xf]
        %v3336 = vld [vmem:[#allocation4 + $0x138] sm:$0xf]
        %v3337 = vld [vmem:[#allocation4 + $0x13c] sm:$0xf]
        %v3338 = vld [vmem:[#allocation4 + $0x140] sm:$0xf]
        %v3339 = vld [vmem:[#allocation4 + $0x144] sm:$0xf]
        %v3340 = vld [vmem:[#allocation4 + $0x148] sm:$0xf]
        %v3341 = vld [vmem:[#allocation4 + $0x14c] sm:$0xf]
        %v3342 = vld [vmem:[#allocation4 + $0x150] sm:$0xf]
        %v3343 = vld [vmem:[#allocation4 + $0x154] sm:$0xf]
        %v3344 = vld [vmem:[#allocation4 + $0x158] sm:$0xf]
        %v3345 = vld [vmem:[#allocation4 + $0x15c] sm:$0xf]
        %v3346 = vld [vmem:[#allocation4 + $0x160] sm:$0xf]
        %v3347 = vld [vmem:[#allocation4 + $0x164] sm:$0xf]
        %v3348 = vld [vmem:[#allocation4 + $0x168] sm:$0xf]
        %v3349 = vld [vmem:[#allocation4 + $0x16c] sm:$0xf]
        %v3350 = vld [vmem:[#allocation4 + $0x170] sm:$0xf]
        %v3351 = vld [vmem:[#allocation4 + $0x174] sm:$0xf]
        %v3352 = vld [vmem:[#allocation4 + $0x178] sm:$0xf]
        %v3353 = vld [vmem:[#allocation4 + $0x17c] sm:$0xf]
        %v3354 = vld [vmem:[#allocation4 + $0x180] sm:$0xf]
        %v3355 = vld [vmem:[#allocation4 + $0x184] sm:$0xf]
        %v3356 = vld [vmem:[#allocation4 + $0x188] sm:$0xf]
        %v3357 = vld [vmem:[#allocation4 + $0x18c] sm:$0xf]
        %v3358 = vld [vmem:[#allocation4 + $0x190] sm:$0xf]
        %v3359 = vld [vmem:[#allocation4 + $0x194] sm:$0xf]
        %v3360 = vld [vmem:[#allocation4 + $0x198] sm:$0xf]
        %v3361 = vld [vmem:[#allocation4 + $0x19c] sm:$0xf]
        %v3362 = vld [vmem:[#allocation4 + $0x1a0] sm:$0xf]
        %v3363 = vld [vmem:[#allocation4 + $0x1a4] sm:$0xf]
        %v3364 = vld [vmem:[#allocation4 + $0x1a8] sm:$0xf]
        %v3365 = vld [vmem:[#allocation4 + $0x1ac] sm:$0xf]
        %v3366 = vld [vmem:[#allocation4 + $0x1b0] sm:$0xf]
        %v3367 = vld [vmem:[#allocation4 + $0x1b4] sm:$0xf]
        %v3368 = vld [vmem:[#allocation4 + $0x1b8] sm:$0xf]
        %v3369 = vld [vmem:[#allocation4 + $0x1bc] sm:$0xf]
        %v3370 = vld [vmem:[#allocation4 + $0x1c0] sm:$0xf]
        %v3371 = vld [vmem:[#allocation4 + $0x1c4] sm:$0xf]
        %v3372 = vld [vmem:[#allocation4 + $0x1c8] sm:$0xf]
        %v3373 = vld [vmem:[#allocation4 + $0x1cc] sm:$0xf]
        %v3374 = vld [vmem:[#allocation4 + $0x1d0] sm:$0xf]
        %v3375 = vld [vmem:[#allocation4 + $0x1d4] sm:$0xf]
        %v3376 = vld [vmem:[#allocation4 + $0x1d8] sm:$0xf]
        %v3377 = vld [vmem:[#allocation4 + $0x1dc] sm:$0xf]
        %v3378 = vld [vmem:[#allocation4 + $0x1e0] sm:$0xf]
        %v3379 = vld [vmem:[#allocation4 + $0x1e4] sm:$0xf]
        %v3380 = vld [vmem:[#allocation4 + $0x1e8] sm:$0xf]
        %v3381 = vld [vmem:[#allocation4 + $0x1ec] sm:$0xf]
        %v3382 = vld [vmem:[#allocation4 + $0x1f0] sm:$0xf]
        %v3383 = vld [vmem:[#allocation4 + $0x1f4] sm:$0xf]
        %v3384 = vld [vmem:[#allocation4 + $0x1f8] sm:$0xf]
        %v3385 = vld [vmem:[#allocation4 + $0x1fc] sm:$0xf]
        %v3386 = vld [vmem:[#allocation4 + $0x200] sm:$0xf]
        %v3387 = vld [vmem:[#allocation4 + $0x204] sm:$0xf]
        %v3388 = vld [vmem:[#allocation4 + $0x208] sm:$0xf]
        %v3389 = vld [vmem:[#allocation4 + $0x20c] sm:$0xf]
        %v3390 = vld [vmem:[#allocation4 + $0x210] sm:$0xf]
        %v3391 = vld [vmem:[#allocation4 + $0x214] sm:$0xf]
        %v3392 = vld [vmem:[#allocation4 + $0x218] sm:$0xf]
        %v3393 = vld [vmem:[#allocation4 + $0x21c] sm:$0xf]
        %v3394 = vld [vmem:[#allocation4 + $0x220] sm:$0xf]
        %v3395 = vld [vmem:[#allocation4 + $0x224] sm:$0xf]
        %v3396 = vld [vmem:[#allocation4 + $0x228] sm:$0xf]
        %v3397 = vld [vmem:[#allocation4 + $0x22c] sm:$0xf]
        %v3398 = vld [vmem:[#allocation4 + $0x230] sm:$0xf]
        %v3399 = vld [vmem:[#allocation4 + $0x234] sm:$0xf]
        %v3400 = vld [vmem:[#allocation4 + $0x238] sm:$0xf]
        %v3401 = vld [vmem:[#allocation4 + $0x23c] sm:$0xf]
        %v3403 = vlaneseq
        %v3404 = vshrl.u32 %v3403, 7
        %v3405 = vsub.s32 0, %v3404
        %v3406 = vrot.slane %v2715, %v3405
        %v3552 = vunpack.c.l.b16 %v3258
        %v3553 = vunpack.c.l.b16 %v3259
        %v3554 = vunpack.c.l.b16 %v3260
        %v3555 = vunpack.c.l.b16 %v3261
        %v3556 = vunpack.c.l.b16 %v3262
        %v3557 = vunpack.c.l.b16 %v3263
        %v3558 = vunpack.c.l.b16 %v3264
        %v3559 = vunpack.c.l.b16 %v3265
        %v3560 = vunpack.c.l.b16 %v3266
        %v3561 = vunpack.c.l.b16 %v3267
        %v3562 = vunpack.c.l.b16 %v3268
        %v3563 = vunpack.c.l.b16 %v3269
        %v3564 = vunpack.c.l.b16 %v3270
        %v3565 = vunpack.c.l.b16 %v3271
        %v3566 = vunpack.c.l.b16 %v3272
        %v3567 = vunpack.c.l.b16 %v3273
        %v3568 = vunpack.c.l.b16 %v3274
        %v3569 = vunpack.c.l.b16 %v3275
        %v3570 = vunpack.c.l.b16 %v3276
        %v3571 = vunpack.c.l.b16 %v3277
        %v3572 = vunpack.c.l.b16 %v3278
        %v3573 = vunpack.c.l.b16 %v3279
        %v3574 = vunpack.c.l.b16 %v3280
        %v3575 = vunpack.c.l.b16 %v3281
        %v3576 = vunpack.c.l.b16 %v3282
        %v3577 = vunpack.c.l.b16 %v3283
        %v3578 = vunpack.c.l.b16 %v3284
        %v3579 = vunpack.c.l.b16 %v3285
        %v3580 = vunpack.c.l.b16 %v3286
        %v3581 = vunpack.c.l.b16 %v3287
        %v3582 = vunpack.c.l.b16 %v3288
        %v3583 = vunpack.c.l.b16 %v3289
        %v3584 = vunpack.c.l.b16 %v3290
        %v3585 = vunpack.c.l.b16 %v3291
        %v3586 = vunpack.c.l.b16 %v3292
        %v3587 = vunpack.c.l.b16 %v3293
        %v3588 = vunpack.c.l.b16 %v3294
        %v3589 = vunpack.c.l.b16 %v3295
        %v3590 = vunpack.c.l.b16 %v3296
        %v3591 = vunpack.c.l.b16 %v3297
        %v3592 = vunpack.c.l.b16 %v3298
        %v3593 = vunpack.c.l.b16 %v3299
        %v3594 = vunpack.c.l.b16 %v3300
        %v3595 = vunpack.c.l.b16 %v3301
        %v3596 = vunpack.c.l.b16 %v3302
        %v3597 = vunpack.c.l.b16 %v3303
        %v3598 = vunpack.c.l.b16 %v3304
        %v3599 = vunpack.c.l.b16 %v3305
        %v3600 = vunpack.c.l.b16 %v3306
        %v3601 = vunpack.c.l.b16 %v3307
        %v3602 = vunpack.c.l.b16 %v3308
        %v3603 = vunpack.c.l.b16 %v3309
        %v3604 = vunpack.c.l.b16 %v3310
        %v3605 = vunpack.c.l.b16 %v3311
        %v3606 = vunpack.c.l.b16 %v3312
        %v3607 = vunpack.c.l.b16 %v3313
        %v3608 = vunpack.c.l.b16 %v3314
        %v3609 = vunpack.c.l.b16 %v3315
        %v3610 = vunpack.c.l.b16 %v3316
        %v3611 = vunpack.c.l.b16 %v3317
        %v3612 = vunpack.c.l.b16 %v3318
        %v3613 = vunpack.c.l.b16 %v3319
        %v3614 = vunpack.c.l.b16 %v3320
        %v3615 = vunpack.c.l.b16 %v3321
        %v3616 = vunpack.c.l.b16 %v3322
        %v3617 = vunpack.c.l.b16 %v3323
        %v3618 = vunpack.c.l.b16 %v3324
        %v3619 = vunpack.c.l.b16 %v3325
        %v3620 = vunpack.c.l.b16 %v3326
        %v3621 = vunpack.c.l.b16 %v3327
        %v3622 = vunpack.c.l.b16 %v3328
        %v3623 = vunpack.c.l.b16 %v3329
        %v3624 = vunpack.c.l.b16 %v3330
        %v3625 = vunpack.c.l.b16 %v3331
        %v3626 = vunpack.c.l.b16 %v3332
        %v3627 = vunpack.c.l.b16 %v3333
        %v3628 = vunpack.c.l.b16 %v3334
        %v3629 = vunpack.c.l.b16 %v3335
        %v3630 = vunpack.c.l.b16 %v3336
        %v3631 = vunpack.c.l.b16 %v3337
        %v3632 = vunpack.c.l.b16 %v3338
        %v3633 = vunpack.c.l.b16 %v3339
        %v3634 = vunpack.c.l.b16 %v3340
        %v3635 = vunpack.c.l.b16 %v3341
        %v3636 = vunpack.c.l.b16 %v3342
        %v3637 = vunpack.c.l.b16 %v3343
        %v3638 = vunpack.c.l.b16 %v3344
        %v3639 = vunpack.c.l.b16 %v3345
        %v3640 = vunpack.c.l.b16 %v3346
        %v3641 = vunpack.c.l.b16 %v3347
        %v3642 = vunpack.c.l.b16 %v3348
        %v3643 = vunpack.c.l.b16 %v3349
        %v3644 = vunpack.c.l.b16 %v3350
        %v3645 = vunpack.c.l.b16 %v3351
        %v3646 = vunpack.c.l.b16 %v3352
        %v3647 = vunpack.c.l.b16 %v3353
        %v3648 = vunpack.c.l.b16 %v3354
        %v3649 = vunpack.c.l.b16 %v3355
        %v3650 = vunpack.c.l.b16 %v3356
        %v3651 = vunpack.c.l.b16 %v3357
        %v3652 = vunpack.c.l.b16 %v3358
        %v3653 = vunpack.c.l.b16 %v3359
        %v3654 = vunpack.c.l.b16 %v3360
        %v3655 = vunpack.c.l.b16 %v3361
        %v3656 = vunpack.c.l.b16 %v3362
        %v3657 = vunpack.c.l.b16 %v3363
        %v3658 = vunpack.c.l.b16 %v3364
        %v3659 = vunpack.c.l.b16 %v3365
        %v3660 = vunpack.c.l.b16 %v3366
        %v3661 = vunpack.c.l.b16 %v3367
        %v3662 = vunpack.c.l.b16 %v3368
        %v3663 = vunpack.c.l.b16 %v3369
        %v3664 = vunpack.c.l.b16 %v3370
        %v3665 = vunpack.c.l.b16 %v3371
        %v3666 = vunpack.c.l.b16 %v3372
        %v3667 = vunpack.c.l.b16 %v3373
        %v3668 = vunpack.c.l.b16 %v3374
        %v3669 = vunpack.c.l.b16 %v3375
        %v3670 = vunpack.c.l.b16 %v3376
        %v3671 = vunpack.c.l.b16 %v3377
        %v3672 = vunpack.c.l.b16 %v3378
        %v3673 = vunpack.c.l.b16 %v3379
        %v3674 = vunpack.c.l.b16 %v3380
        %v3675 = vunpack.c.l.b16 %v3381
        %v3676 = vunpack.c.l.b16 %v3382
        %v3677 = vunpack.c.l.b16 %v3383
        %v3678 = vunpack.c.l.b16 %v3384
        %v3679 = vunpack.c.l.b16 %v3385
        %v3680 = vunpack.c.l.b16 %v3386
        %v3681 = vunpack.c.l.b16 %v3387
        %v3682 = vunpack.c.l.b16 %v3388
        %v3683 = vunpack.c.l.b16 %v3389
        %v3684 = vunpack.c.l.b16 %v3390
        %v3685 = vunpack.c.l.b16 %v3391
        %v3686 = vunpack.c.l.b16 %v3392
        %v3687 = vunpack.c.l.b16 %v3393
        %v3688 = vunpack.c.l.b16 %v3394
        %v3689 = vunpack.c.l.b16 %v3395
        %v3690 = vunpack.c.l.b16 %v3396
        %v3691 = vunpack.c.l.b16 %v3397
        %v3692 = vunpack.c.l.b16 %v3398
        %v3693 = vunpack.c.l.b16 %v3399
        %v3694 = vunpack.c.l.b16 %v3400
        %v3695 = vunpack.c.l.b16 %v3401
        %v3696 = vpack.c.b16 %v3553, %v3552
        %v3697 = vpack.c.b16 %v3555, %v3554
        %v3698 = vpack.c.b16 %v3557, %v3556
        %v3699 = vpack.c.b16 %v3559, %v3558
        %v3700 = vpack.c.b16 %v3561, %v3560
        %v3701 = vpack.c.b16 %v3563, %v3562
        %v3702 = vpack.c.b16 %v3565, %v3564
        %v3703 = vpack.c.b16 %v3567, %v3566
        %v3704 = vpack.c.b16 %v3569, %v3568
        %v3705 = vpack.c.b16 %v3571, %v3570
        %v3706 = vpack.c.b16 %v3573, %v3572
        %v3707 = vpack.c.b16 %v3575, %v3574
        %v3708 = vpack.c.b16 %v3577, %v3576
        %v3709 = vpack.c.b16 %v3579, %v3578
        %v3710 = vpack.c.b16 %v3581, %v3580
        %v3711 = vpack.c.b16 %v3583, %v3582
        %v3712 = vpack.c.b16 %v3585, %v3584
        %v3713 = vpack.c.b16 %v3587, %v3586
        %v3714 = vpack.c.b16 %v3589, %v3588
        %v3715 = vpack.c.b16 %v3591, %v3590
        %v3716 = vpack.c.b16 %v3593, %v3592
        %v3717 = vpack.c.b16 %v3595, %v3594
        %v3718 = vpack.c.b16 %v3597, %v3596
        %v3719 = vpack.c.b16 %v3599, %v3598
        %v3720 = vpack.c.b16 %v3601, %v3600
        %v3721 = vpack.c.b16 %v3603, %v3602
        %v3722 = vpack.c.b16 %v3605, %v3604
        %v3723 = vpack.c.b16 %v3607, %v3606
        %v3724 = vpack.c.b16 %v3609, %v3608
        %v3725 = vpack.c.b16 %v3611, %v3610
        %v3726 = vpack.c.b16 %v3613, %v3612
        %v3727 = vpack.c.b16 %v3615, %v3614
        %v3728 = vpack.c.b16 %v3617, %v3616
        %v3729 = vpack.c.b16 %v3619, %v3618
        %v3730 = vpack.c.b16 %v3621, %v3620
        %v3731 = vpack.c.b16 %v3623, %v3622
        %v3732 = vpack.c.b16 %v3625, %v3624
        %v3733 = vpack.c.b16 %v3627, %v3626
        %v3734 = vpack.c.b16 %v3629, %v3628
        %v3735 = vpack.c.b16 %v3631, %v3630
        %v3736 = vpack.c.b16 %v3633, %v3632
        %v3737 = vpack.c.b16 %v3635, %v3634
        %v3738 = vpack.c.b16 %v3637, %v3636
        %v3739 = vpack.c.b16 %v3639, %v3638
        %v3740 = vpack.c.b16 %v3641, %v3640
        %v3741 = vpack.c.b16 %v3643, %v3642
        %v3742 = vpack.c.b16 %v3645, %v3644
        %v3743 = vpack.c.b16 %v3647, %v3646
        %v3744 = vpack.c.b16 %v3649, %v3648
        %v3745 = vpack.c.b16 %v3651, %v3650
        %v3746 = vpack.c.b16 %v3653, %v3652
        %v3747 = vpack.c.b16 %v3655, %v3654
        %v3748 = vpack.c.b16 %v3657, %v3656
        %v3749 = vpack.c.b16 %v3659, %v3658
        %v3750 = vpack.c.b16 %v3661, %v3660
        %v3751 = vpack.c.b16 %v3663, %v3662
        %v3752 = vpack.c.b16 %v3665, %v3664
        %v3753 = vpack.c.b16 %v3667, %v3666
        %v3754 = vpack.c.b16 %v3669, %v3668
        %v3755 = vpack.c.b16 %v3671, %v3670
        %v3756 = vpack.c.b16 %v3673, %v3672
        %v3757 = vpack.c.b16 %v3675, %v3674
        %v3758 = vpack.c.b16 %v3677, %v3676
        %v3759 = vpack.c.b16 %v3679, %v3678
        %v3760 = vpack.c.b16 %v3681, %v3680
        %v3761 = vpack.c.b16 %v3683, %v3682
        %v3762 = vpack.c.b16 %v3685, %v3684
        %v3763 = vpack.c.b16 %v3687, %v3686
        %v3764 = vpack.c.b16 %v3689, %v3688
        %v3765 = vpack.c.b16 %v3691, %v3690
        %v3766 = vpack.c.b16 %v3693, %v3692
        %v3767 = vpack.c.b16 %v3695, %v3694
        %3840 = vmatprep.subr.bf16.mxu0 0
        %3841 = vmatpush1.bf16.msra.mxu0 %v3703
        %3842 = vmatprep.subr.bf16.mxu0 0
        %3843 = vmatpush1.bf16.msra.mxu0 %v3702
        %3844 = vmatprep.subr.bf16.mxu0 0
        %3845 = vmatpush1.bf16.msra.mxu0 %v3701
        %3846 = vmatprep.subr.bf16.mxu0 0
        %3847 = vmatpush1.bf16.msra.mxu0 %v3700
        %3848 = vmatprep.subr.bf16.mxu0 0
        %3849 = vmatpush1.bf16.msra.mxu0 %v3699
        %3850 = vmatprep.subr.bf16.mxu0 0
        %3851 = vmatpush1.bf16.msra.mxu0 %v3698
        %3852 = vmatprep.subr.bf16.mxu0 0
        %3853 = vmatpush1.bf16.msra.mxu0 %v3697
        %3854 = vmatprep.subr.bf16.mxu0 0
        %3855 = vmatpush1.bf16.msra.mxu0 %v3696
        %3856 = vmatprep.subr.bf16.mxu0 0
        %3857 = vmatpush2.bf16.msra.mxu0 %v3711
        %3858 = vmatprep.subr.bf16.mxu0 0
        %3859 = vmatpush2.bf16.msra.mxu0 %v3710
        %3860 = vmatprep.subr.bf16.mxu0 0
        %3861 = vmatpush2.bf16.msra.mxu0 %v3709
        %3862 = vmatprep.subr.bf16.mxu0 0
        %3863 = vmatpush2.bf16.msra.mxu0 %v3708
        %3864 = vmatprep.subr.bf16.mxu0 0
        %3865 = vmatpush2.bf16.msra.mxu0 %v3707
        %3866 = vmatprep.subr.bf16.mxu0 0
        %3867 = vmatpush2.bf16.msra.mxu0 %v3706
        %3868 = vmatprep.subr.bf16.mxu0 0
        %3869 = vmatpush2.bf16.msra.mxu0 %v3705
        %3870 = vmatprep.subr.bf16.mxu0 0
        %3871 = vmatpush2.bf16.msra.mxu0 %v3704
        %3872 = vmatprep.mubr.bf16.mxu0 %v2906
        %3873 = vmatmul.mubr.bf16.gmra.mxu0 %v2858
        %v3874 = vpop.f32.mrf.mxu0
        %v3875 = vadd.f32 %v3406, %v3874
        %v3876 = vpop.f32.mrf.mxu0
        %v3877 = vpop.f32.mrf.mxu0
        %v3878 = vadd.f32 %v3406, %v3877
        %v3879 = vpop.f32.mrf.mxu0
        %3880 = vmatprep.mubr.bf16.mxu0 %v2907
        %3881 = vmatmul.mubr.bf16.gmra.mxu0 %v2859
        %v3882 = vpop.f32.mrf.mxu0
        %v3883 = vadd.f32 %v3406, %v3882
        %v3884 = vpop.f32.mrf.mxu0
        %v3885 = vpop.f32.mrf.mxu0
        %v3886 = vadd.f32 %v3406, %v3885
        %v3887 = vpop.f32.mrf.mxu0
        %3888 = vmatprep.mubr.bf16.mxu0 %v2908
        %3889 = vmatmul.mubr.bf16.gmra.mxu0 %v2860
        %v3890 = vpop.f32.mrf.mxu0
        %v3891 = vadd.f32 %v3406, %v3890
        %v3892 = vpop.f32.mrf.mxu0
        %v3893 = vpop.f32.mrf.mxu0
        %v3894 = vadd.f32 %v3406, %v3893
        %v3895 = vpop.f32.mrf.mxu0
        %3896 = vmatprep.mubr.bf16.mxu0 %v2909
        %3897 = vmatmul.mubr.bf16.gmra.mxu0 %v2861
        %v3898 = vpop.f32.mrf.mxu0
        %v3899 = vadd.f32 %v3406, %v3898
        %v3900 = vpop.f32.mrf.mxu0
        %v3901 = vpop.f32.mrf.mxu0
        %v3902 = vadd.f32 %v3406, %v3901
        %v3903 = vpop.f32.mrf.mxu0
        %3904 = vmatprep.mubr.bf16.mxu0 %v2910
        %3905 = vmatmul.mubr.bf16.gmra.mxu0 %v2862
        %v3906 = vpop.f32.mrf.mxu0
        %v3907 = vadd.f32 %v3406, %v3906
        %v3908 = vpop.f32.mrf.mxu0
        %v3909 = vpop.f32.mrf.mxu0
        %v3910 = vadd.f32 %v3406, %v3909
        %v3911 = vpop.f32.mrf.mxu0
        %3912 = vmatprep.mubr.bf16.mxu0 %v2911
        %3913 = vmatmul.mubr.bf16.gmra.mxu0 %v2863
        %v3914 = vpop.f32.mrf.mxu0
        %v3915 = vadd.f32 %v3406, %v3914
        %v3916 = vpop.f32.mrf.mxu0
        %v3917 = vpop.f32.mrf.mxu0
        %v3918 = vadd.f32 %v3406, %v3917
        %v3919 = vpop.f32.mrf.mxu0
        %3920 = vmatprep.mubr.bf16.mxu0 %v2912
        %3921 = vmatmul.mubr.bf16.gmra.mxu0 %v2864
        %v3922 = vpop.f32.mrf.mxu0
        %v3923 = vadd.f32 %v3406, %v3922
        %v3924 = vpop.f32.mrf.mxu0
        %v3925 = vpop.f32.mrf.mxu0
        %v3926 = vadd.f32 %v3406, %v3925
        %v3927 = vpop.f32.mrf.mxu0
        %3928 = vmatprep.mubr.bf16.mxu0 %v2913
        %3929 = vmatmul.mubr.bf16.gmra.mxu0 %v2865
        %v3930 = vpop.f32.mrf.mxu0
        %v3931 = vadd.f32 %v3406, %v3930
        %v3932 = vpop.f32.mrf.mxu0
        %v3933 = vpop.f32.mrf.mxu0
        %v3934 = vadd.f32 %v3406, %v3933
        %v3935 = vpop.f32.mrf.mxu0
        %3936 = vmatprep.mubr.bf16.mxu0 %v2914
        %3937 = vmatmul.mubr.bf16.gmra.mxu0 %v2866
        %v3938 = vpop.f32.mrf.mxu0
        %v3939 = vadd.f32 %v3406, %v3938
        %v3940 = vpop.f32.mrf.mxu0
        %v3941 = vpop.f32.mrf.mxu0
        %v3942 = vadd.f32 %v3406, %v3941
        %v3943 = vpop.f32.mrf.mxu0
        %3944 = vmatprep.mubr.bf16.mxu0 %v2915
        %3945 = vmatmul.mubr.bf16.gmra.mxu0 %v2867
        %v3946 = vpop.f32.mrf.mxu0
        %v3947 = vadd.f32 %v3406, %v3946
        %v3948 = vpop.f32.mrf.mxu0
        %v3949 = vpop.f32.mrf.mxu0
        %v3950 = vadd.f32 %v3406, %v3949
        %v3951 = vpop.f32.mrf.mxu0
        %3952 = vmatprep.mubr.bf16.mxu0 %v2916
        %3953 = vmatmul.mubr.bf16.gmra.mxu0 %v2868
        %v3954 = vpop.f32.mrf.mxu0
        %v3955 = vadd.f32 %v3406, %v3954
        %v3956 = vpop.f32.mrf.mxu0
        %v3957 = vpop.f32.mrf.mxu0
        %v3958 = vadd.f32 %v3406, %v3957
        %v3959 = vpop.f32.mrf.mxu0
        %3960 = vmatprep.mubr.bf16.mxu0 %v2917
        %3961 = vmatmul.mubr.bf16.gmra.mxu0 %v2869
        %v3962 = vpop.f32.mrf.mxu0
        %v3963 = vadd.f32 %v3406, %v3962
        %v3964 = vpop.f32.mrf.mxu0
        %v3965 = vpop.f32.mrf.mxu0
        %v3966 = vadd.f32 %v3406, %v3965
        %v3967 = vpop.f32.mrf.mxu0
        %3968 = vmatprep.mubr.bf16.mxu0 %v2918
        %3969 = vmatmul.mubr.bf16.gmra.mxu0 %v2870
        %v3970 = vpop.f32.mrf.mxu0
        %v3971 = vadd.f32 %v3406, %v3970
        %v3972 = vpop.f32.mrf.mxu0
        %v3973 = vpop.f32.mrf.mxu0
        %v3974 = vadd.f32 %v3406, %v3973
        %v3975 = vpop.f32.mrf.mxu0
        %3976 = vmatprep.mubr.bf16.mxu0 %v2919
        %3977 = vmatmul.mubr.bf16.gmra.mxu0 %v2871
        %v3978 = vpop.f32.mrf.mxu0
        %v3979 = vadd.f32 %v3406, %v3978
        %v3980 = vpop.f32.mrf.mxu0
        %v3981 = vpop.f32.mrf.mxu0
        %v3982 = vadd.f32 %v3406, %v3981
        %v3983 = vpop.f32.mrf.mxu0
        %3984 = vmatprep.mubr.bf16.mxu0 %v2920
        %3985 = vmatmul.mubr.bf16.gmra.mxu0 %v2872
        %v3986 = vpop.f32.mrf.mxu0
        %v3987 = vadd.f32 %v3406, %v3986
        %v3988 = vpop.f32.mrf.mxu0
        %v3989 = vpop.f32.mrf.mxu0
        %v3990 = vadd.f32 %v3406, %v3989
        %v3991 = vpop.f32.mrf.mxu0
        %3992 = vmatprep.mubr.bf16.mxu0 %v2921
        %3993 = vmatmul.mubr.bf16.gmra.mxu0 %v2873
        %v3994 = vpop.f32.mrf.mxu0
        %v3995 = vadd.f32 %v3406, %v3994
        %v3996 = vpop.f32.mrf.mxu0
        %v3997 = vpop.f32.mrf.mxu0
        %v3998 = vadd.f32 %v3406, %v3997
        %v3999 = vpop.f32.mrf.mxu0
        %4000 = vdwg.mxu0
        %4001 = vmatprep.subr.bf16.mxu0 0
        %4002 = vmatpush1.bf16.msra.mxu0 %v3719
        %4003 = vmatprep.subr.bf16.mxu0 0
        %4004 = vmatpush1.bf16.msra.mxu0 %v3718
        %4005 = vmatprep.subr.bf16.mxu0 0
        %4006 = vmatpush1.bf16.msra.mxu0 %v3717
        %4007 = vmatprep.subr.bf16.mxu0 0
        %4008 = vmatpush1.bf16.msra.mxu0 %v3716
        %4009 = vmatprep.subr.bf16.mxu0 0
        %4010 = vmatpush1.bf16.msra.mxu0 %v3715
        %4011 = vmatprep.subr.bf16.mxu0 0
        %4012 = vmatpush1.bf16.msra.mxu0 %v3714
        %4013 = vmatprep.subr.bf16.mxu0 0
        %4014 = vmatpush1.bf16.msra.mxu0 %v3713
        %4015 = vmatprep.subr.bf16.mxu0 0
        %4016 = vmatpush1.bf16.msra.mxu0 %v3712
        %4017 = vmatprep.subr.bf16.mxu0 0
        %4018 = vmatpush2.bf16.msra.mxu0 %v3727
        %4019 = vmatprep.subr.bf16.mxu0 0
        %4020 = vmatpush2.bf16.msra.mxu0 %v3726
        %4021 = vmatprep.subr.bf16.mxu0 0
        %4022 = vmatpush2.bf16.msra.mxu0 %v3725
        %4023 = vmatprep.subr.bf16.mxu0 0
        %4024 = vmatpush2.bf16.msra.mxu0 %v3724
        %4025 = vmatprep.subr.bf16.mxu0 0
        %4026 = vmatpush2.bf16.msra.mxu0 %v3723
        %4027 = vmatprep.subr.bf16.mxu0 0
        %4028 = vmatpush2.bf16.msra.mxu0 %v3722
        %4029 = vmatprep.subr.bf16.mxu0 0
        %4030 = vmatpush2.bf16.msra.mxu0 %v3721
        %4031 = vmatprep.subr.bf16.mxu0 0
        %4032 = vmatpush2.bf16.msra.mxu0 %v3720
        %4033 = vmatprep.mubr.bf16.mxu0 %v3002
        %4034 = vmatmul.mubr.bf16.gmra.mxu0 %v2954
        %v4035 = vpop.f32.mrf.mxu0
        %v4036 = vadd.f32 %v3875, %v4035
        %v4037 = vpop.f32.mrf.mxu0
        %v4038 = vpop.f32.mrf.mxu0
        %v4039 = vadd.f32 %v3878, %v4038
        %v4040 = vpop.f32.mrf.mxu0
        %4041 = vmatprep.mubr.bf16.mxu0 %v3003
        %4042 = vmatmul.mubr.bf16.gmra.mxu0 %v2955
        %v4043 = vpop.f32.mrf.mxu0
        %v4044 = vadd.f32 %v3883, %v4043
        %v4045 = vpop.f32.mrf.mxu0
        %v4046 = vpop.f32.mrf.mxu0
        %v4047 = vadd.f32 %v3886, %v4046
        %v4048 = vpop.f32.mrf.mxu0
        %4049 = vmatprep.mubr.bf16.mxu0 %v3004
        %4050 = vmatmul.mubr.bf16.gmra.mxu0 %v2956
        %v4051 = vpop.f32.mrf.mxu0
        %v4052 = vadd.f32 %v3891, %v4051
        %v4053 = vpop.f32.mrf.mxu0
        %v4054 = vpop.f32.mrf.mxu0
        %v4055 = vadd.f32 %v3894, %v4054
        %v4056 = vpop.f32.mrf.mxu0
        %4057 = vmatprep.mubr.bf16.mxu0 %v3005
        %4058 = vmatmul.mubr.bf16.gmra.mxu0 %v2957
        %v4059 = vpop.f32.mrf.mxu0
        %v4060 = vadd.f32 %v3899, %v4059
        %v4061 = vpop.f32.mrf.mxu0
        %v4062 = vpop.f32.mrf.mxu0
        %v4063 = vadd.f32 %v3902, %v4062
        %v4064 = vpop.f32.mrf.mxu0
        %4065 = vmatprep.mubr.bf16.mxu0 %v3006
        %4066 = vmatmul.mubr.bf16.gmra.mxu0 %v2958
        %v4067 = vpop.f32.mrf.mxu0
        %v4068 = vadd.f32 %v3907, %v4067
        %v4069 = vpop.f32.mrf.mxu0
        %v4070 = vpop.f32.mrf.mxu0
        %v4071 = vadd.f32 %v3910, %v4070
        %v4072 = vpop.f32.mrf.mxu0
        %4073 = vmatprep.mubr.bf16.mxu0 %v3007
        %4074 = vmatmul.mubr.bf16.gmra.mxu0 %v2959
        %v4075 = vpop.f32.mrf.mxu0
        %v4076 = vadd.f32 %v3915, %v4075
        %v4077 = vpop.f32.mrf.mxu0
        %v4078 = vpop.f32.mrf.mxu0
        %v4079 = vadd.f32 %v3918, %v4078
        %v4080 = vpop.f32.mrf.mxu0
        %4081 = vmatprep.mubr.bf16.mxu0 %v3008
        %4082 = vmatmul.mubr.bf16.gmra.mxu0 %v2960
        %v4083 = vpop.f32.mrf.mxu0
        %v4084 = vadd.f32 %v3923, %v4083
        %v4085 = vpop.f32.mrf.mxu0
        %v4086 = vpop.f32.mrf.mxu0
        %v4087 = vadd.f32 %v3926, %v4086
        %v4088 = vpop.f32.mrf.mxu0
        %4089 = vmatprep.mubr.bf16.mxu0 %v3009
        %4090 = vmatmul.mubr.bf16.gmra.mxu0 %v2961
        %v4091 = vpop.f32.mrf.mxu0
        %v4092 = vadd.f32 %v3931, %v4091
        %v4093 = vpop.f32.mrf.mxu0
        %v4094 = vpop.f32.mrf.mxu0
        %v4095 = vadd.f32 %v3934, %v4094
        %v4096 = vpop.f32.mrf.mxu0
        %4097 = vmatprep.mubr.bf16.mxu0 %v3010
        %4098 = vmatmul.mubr.bf16.gmra.mxu0 %v2962
        %v4099 = vpop.f32.mrf.mxu0
        %v4100 = vadd.f32 %v3939, %v4099
        %v4101 = vpop.f32.mrf.mxu0
        %v4102 = vpop.f32.mrf.mxu0
        %v4103 = vadd.f32 %v3942, %v4102
        %v4104 = vpop.f32.mrf.mxu0
        %4105 = vmatprep.mubr.bf16.mxu0 %v3011
        %4106 = vmatmul.mubr.bf16.gmra.mxu0 %v2963
        %v4107 = vpop.f32.mrf.mxu0
        %v4108 = vadd.f32 %v3947, %v4107
        %v4109 = vpop.f32.mrf.mxu0
        %v4110 = vpop.f32.mrf.mxu0
        %v4111 = vadd.f32 %v3950, %v4110
        %v4112 = vpop.f32.mrf.mxu0
        %4113 = vmatprep.mubr.bf16.mxu0 %v3012
        %4114 = vmatmul.mubr.bf16.gmra.mxu0 %v2964
        %v4115 = vpop.f32.mrf.mxu0
        %v4116 = vadd.f32 %v3955, %v4115
        %v4117 = vpop.f32.mrf.mxu0
        %v4118 = vpop.f32.mrf.mxu0
        %v4119 = vadd.f32 %v3958, %v4118
        %v4120 = vpop.f32.mrf.mxu0
        %4121 = vmatprep.mubr.bf16.mxu0 %v3013
        %4122 = vmatmul.mubr.bf16.gmra.mxu0 %v2965
        %v4123 = vpop.f32.mrf.mxu0
        %v4124 = vadd.f32 %v3963, %v4123
        %v4125 = vpop.f32.mrf.mxu0
        %v4126 = vpop.f32.mrf.mxu0
        %v4127 = vadd.f32 %v3966, %v4126
        %v4128 = vpop.f32.mrf.mxu0
        %4129 = vmatprep.mubr.bf16.mxu0 %v3014
        %4130 = vmatmul.mubr.bf16.gmra.mxu0 %v2966
        %v4131 = vpop.f32.mrf.mxu0
        %v4132 = vadd.f32 %v3971, %v4131
        %v4133 = vpop.f32.mrf.mxu0
        %v4134 = vpop.f32.mrf.mxu0
        %v4135 = vadd.f32 %v3974, %v4134
        %v4136 = vpop.f32.mrf.mxu0
        %4137 = vmatprep.mubr.bf16.mxu0 %v3015
        %4138 = vmatmul.mubr.bf16.gmra.mxu0 %v2967
        %v4139 = vpop.f32.mrf.mxu0
        %v4140 = vadd.f32 %v3979, %v4139
        %v4141 = vpop.f32.mrf.mxu0
        %v4142 = vpop.f32.mrf.mxu0
        %v4143 = vadd.f32 %v3982, %v4142
        %v4144 = vpop.f32.mrf.mxu0
        %4145 = vmatprep.mubr.bf16.mxu0 %v3016
        %4146 = vmatmul.mubr.bf16.gmra.mxu0 %v2968
        %v4147 = vpop.f32.mrf.mxu0
        %v4148 = vadd.f32 %v3987, %v4147
        %v4149 = vpop.f32.mrf.mxu0
        %v4150 = vpop.f32.mrf.mxu0
        %v4151 = vadd.f32 %v3990, %v4150
        %v4152 = vpop.f32.mrf.mxu0
        %4153 = vmatprep.mubr.bf16.mxu0 %v3017
        %4154 = vmatmul.mubr.bf16.gmra.mxu0 %v2969
        %v4155 = vpop.f32.mrf.mxu0
        %v4156 = vadd.f32 %v3995, %v4155
        %v4157 = vpop.f32.mrf.mxu0
        %v4158 = vpop.f32.mrf.mxu0
        %v4159 = vadd.f32 %v3998, %v4158
        %v4160 = vpop.f32.mrf.mxu0
        %4161 = vdwg.mxu0
        %4162 = vmatprep.subr.bf16.mxu0 0
        %4163 = vmatpush1.bf16.msra.mxu0 %v3735
        %4164 = vmatprep.subr.bf16.mxu0 0
        %4165 = vmatpush1.bf16.msra.mxu0 %v3734
        %4166 = vmatprep.subr.bf16.mxu0 0
        %4167 = vmatpush1.bf16.msra.mxu0 %v3733
        %4168 = vmatprep.subr.bf16.mxu0 0
        %4169 = vmatpush1.bf16.msra.mxu0 %v3732
        %4170 = vmatprep.subr.bf16.mxu0 0
        %4171 = vmatpush1.bf16.msra.mxu0 %v3731
        %4172 = vmatprep.subr.bf16.mxu0 0
        %4173 = vmatpush1.bf16.msra.mxu0 %v3730
        %4174 = vmatprep.subr.bf16.mxu0 0
        %4175 = vmatpush1.bf16.msra.mxu0 %v3729
        %4176 = vmatprep.subr.bf16.mxu0 0
        %4177 = vmatpush1.bf16.msra.mxu0 %v3728
        %4178 = vmatprep.subr.bf16.mxu0 0
        %4179 = vmatpush2.bf16.msra.mxu0 %v3743
        %4180 = vmatprep.subr.bf16.mxu0 0
        %4181 = vmatpush2.bf16.msra.mxu0 %v3742
        %4182 = vmatprep.subr.bf16.mxu0 0
        %4183 = vmatpush2.bf16.msra.mxu0 %v3741
        %4184 = vmatprep.subr.bf16.mxu0 0
        %4185 = vmatpush2.bf16.msra.mxu0 %v3740
        %4186 = vmatprep.subr.bf16.mxu0 0
        %4187 = vmatpush2.bf16.msra.mxu0 %v3739
        %4188 = vmatprep.subr.bf16.mxu0 0
        %4189 = vmatpush2.bf16.msra.mxu0 %v3738
        %4190 = vmatprep.subr.bf16.mxu0 0
        %4191 = vmatpush2.bf16.msra.mxu0 %v3737
        %4192 = vmatprep.subr.bf16.mxu0 0
        %4193 = vmatpush2.bf16.msra.mxu0 %v3736
        %4194 = vmatprep.mubr.bf16.mxu0 %v3098
        %4195 = vmatmul.mubr.bf16.gmra.mxu0 %v3050
        %v4196 = vpop.f32.mrf.mxu0
        %v4197 = vadd.f32 %v4036, %v4196
        %v4198 = vpop.f32.mrf.mxu0
        %v4199 = vpop.f32.mrf.mxu0
        %v4200 = vadd.f32 %v4039, %v4199
        %v4201 = vpop.f32.mrf.mxu0
        %4202 = vmatprep.mubr.bf16.mxu0 %v3099
        %4203 = vmatmul.mubr.bf16.gmra.mxu0 %v3051
        %v4204 = vpop.f32.mrf.mxu0
        %v4205 = vadd.f32 %v4044, %v4204
        %v4206 = vpop.f32.mrf.mxu0
        %v4207 = vpop.f32.mrf.mxu0
        %v4208 = vadd.f32 %v4047, %v4207
        %v4209 = vpop.f32.mrf.mxu0
        %4210 = vmatprep.mubr.bf16.mxu0 %v3100
        %4211 = vmatmul.mubr.bf16.gmra.mxu0 %v3052
        %v4212 = vpop.f32.mrf.mxu0
        %v4213 = vadd.f32 %v4052, %v4212
        %v4214 = vpop.f32.mrf.mxu0
        %v4215 = vpop.f32.mrf.mxu0
        %v4216 = vadd.f32 %v4055, %v4215
        %v4217 = vpop.f32.mrf.mxu0
        %4218 = vmatprep.mubr.bf16.mxu0 %v3101
        %4219 = vmatmul.mubr.bf16.gmra.mxu0 %v3053
        %v4220 = vpop.f32.mrf.mxu0
        %v4221 = vadd.f32 %v4060, %v4220
        %v4222 = vpop.f32.mrf.mxu0
        %v4223 = vpop.f32.mrf.mxu0
        %v4224 = vadd.f32 %v4063, %v4223
        %v4225 = vpop.f32.mrf.mxu0
        %4226 = vmatprep.mubr.bf16.mxu0 %v3102
        %4227 = vmatmul.mubr.bf16.gmra.mxu0 %v3054
        %v4228 = vpop.f32.mrf.mxu0
        %v4229 = vadd.f32 %v4068, %v4228
        %v4230 = vpop.f32.mrf.mxu0
        %v4231 = vpop.f32.mrf.mxu0
        %v4232 = vadd.f32 %v4071, %v4231
        %v4233 = vpop.f32.mrf.mxu0
        %4234 = vmatprep.mubr.bf16.mxu0 %v3103
        %4235 = vmatmul.mubr.bf16.gmra.mxu0 %v3055
        %v4236 = vpop.f32.mrf.mxu0
        %v4237 = vadd.f32 %v4076, %v4236
        %v4238 = vpop.f32.mrf.mxu0
        %v4239 = vpop.f32.mrf.mxu0
        %v4240 = vadd.f32 %v4079, %v4239
        %v4241 = vpop.f32.mrf.mxu0
        %4242 = vmatprep.mubr.bf16.mxu0 %v3104
        %4243 = vmatmul.mubr.bf16.gmra.mxu0 %v3056
        %v4244 = vpop.f32.mrf.mxu0
        %v4245 = vadd.f32 %v4084, %v4244
        %v4246 = vpop.f32.mrf.mxu0
        %v4247 = vpop.f32.mrf.mxu0
        %v4248 = vadd.f32 %v4087, %v4247
        %v4249 = vpop.f32.mrf.mxu0
        %4250 = vmatprep.mubr.bf16.mxu0 %v3105
        %4251 = vmatmul.mubr.bf16.gmra.mxu0 %v3057
        %v4252 = vpop.f32.mrf.mxu0
        %v4253 = vadd.f32 %v4092, %v4252
        %v4254 = vpop.f32.mrf.mxu0
        %v4255 = vpop.f32.mrf.mxu0
        %v4256 = vadd.f32 %v4095, %v4255
        %v4257 = vpop.f32.mrf.mxu0
        %4258 = vmatprep.mubr.bf16.mxu0 %v3106
        %4259 = vmatmul.mubr.bf16.gmra.mxu0 %v3058
        %v4260 = vpop.f32.mrf.mxu0
        %v4261 = vadd.f32 %v4100, %v4260
        %v4262 = vpop.f32.mrf.mxu0
        %v4263 = vpop.f32.mrf.mxu0
        %v4264 = vadd.f32 %v4103, %v4263
        %v4265 = vpop.f32.mrf.mxu0
        %4266 = vmatprep.mubr.bf16.mxu0 %v3107
        %4267 = vmatmul.mubr.bf16.gmra.mxu0 %v3059
        %v4268 = vpop.f32.mrf.mxu0
        %v4269 = vadd.f32 %v4108, %v4268
        %v4270 = vpop.f32.mrf.mxu0
        %v4271 = vpop.f32.mrf.mxu0
        %v4272 = vadd.f32 %v4111, %v4271
        %v4273 = vpop.f32.mrf.mxu0
        %4274 = vmatprep.mubr.bf16.mxu0 %v3108
        %4275 = vmatmul.mubr.bf16.gmra.mxu0 %v3060
        %v4276 = vpop.f32.mrf.mxu0
        %v4277 = vadd.f32 %v4116, %v4276
        %v4278 = vpop.f32.mrf.mxu0
        %v4279 = vpop.f32.mrf.mxu0
        %v4280 = vadd.f32 %v4119, %v4279
        %v4281 = vpop.f32.mrf.mxu0
        %4282 = vmatprep.mubr.bf16.mxu0 %v3109
        %4283 = vmatmul.mubr.bf16.gmra.mxu0 %v3061
        %v4284 = vpop.f32.mrf.mxu0
        %v4285 = vadd.f32 %v4124, %v4284
        %v4286 = vpop.f32.mrf.mxu0
        %v4287 = vpop.f32.mrf.mxu0
        %v4288 = vadd.f32 %v4127, %v4287
        %v4289 = vpop.f32.mrf.mxu0
        %4290 = vmatprep.mubr.bf16.mxu0 %v3110
        %4291 = vmatmul.mubr.bf16.gmra.mxu0 %v3062
        %v4292 = vpop.f32.mrf.mxu0
        %v4293 = vadd.f32 %v4132, %v4292
        %v4294 = vpop.f32.mrf.mxu0
        %v4295 = vpop.f32.mrf.mxu0
        %v4296 = vadd.f32 %v4135, %v4295
        %v4297 = vpop.f32.mrf.mxu0
        %4298 = vmatprep.mubr.bf16.mxu0 %v3111
        %4299 = vmatmul.mubr.bf16.gmra.mxu0 %v3063
        %v4300 = vpop.f32.mrf.mxu0
        %v4301 = vadd.f32 %v4140, %v4300
        %v4302 = vpop.f32.mrf.mxu0
        %v4303 = vpop.f32.mrf.mxu0
        %v4304 = vadd.f32 %v4143, %v4303
        %v4305 = vpop.f32.mrf.mxu0
        %4306 = vmatprep.mubr.bf16.mxu0 %v3112
        %4307 = vmatmul.mubr.bf16.gmra.mxu0 %v3064
        %v4308 = vpop.f32.mrf.mxu0
        %v4309 = vadd.f32 %v4148, %v4308
        %v4310 = vpop.f32.mrf.mxu0
        %v4311 = vpop.f32.mrf.mxu0
        %v4312 = vadd.f32 %v4151, %v4311
        %v4313 = vpop.f32.mrf.mxu0
        %4314 = vmatprep.mubr.bf16.mxu0 %v3113
        %4315 = vmatmul.mubr.bf16.gmra.mxu0 %v3065
        %v4316 = vpop.f32.mrf.mxu0
        %v4317 = vadd.f32 %v4156, %v4316
        %v4318 = vpop.f32.mrf.mxu0
        %v4319 = vpop.f32.mrf.mxu0
        %v4320 = vadd.f32 %v4159, %v4319
        %v4321 = vpop.f32.mrf.mxu0
        %4322 = vdwg.mxu0
        %4323 = vmatprep.subr.bf16.mxu0 0
        %4324 = vmatpush1.bf16.msra.mxu0 %v3751
        %4325 = vmatprep.subr.bf16.mxu0 0
        %4326 = vmatpush1.bf16.msra.mxu0 %v3750
        %4327 = vmatprep.subr.bf16.mxu0 0
        %4328 = vmatpush1.bf16.msra.mxu0 %v3749
        %4329 = vmatprep.subr.bf16.mxu0 0
        %4330 = vmatpush1.bf16.msra.mxu0 %v3748
        %4331 = vmatprep.subr.bf16.mxu0 0
        %4332 = vmatpush1.bf16.msra.mxu0 %v3747
        %4333 = vmatprep.subr.bf16.mxu0 0
        %4334 = vmatpush1.bf16.msra.mxu0 %v3746
        %4335 = vmatprep.subr.bf16.mxu0 0
        %4336 = vmatpush1.bf16.msra.mxu0 %v3745
        %4337 = vmatprep.subr.bf16.mxu0 0
        %4338 = vmatpush1.bf16.msra.mxu0 %v3744
        %4339 = vmatprep.subr.bf16.mxu0 0
        %4340 = vmatpush2.bf16.msra.mxu0 %v3759
        %4341 = vmatprep.subr.bf16.mxu0 0
        %4342 = vmatpush2.bf16.msra.mxu0 %v3758
        %4343 = vmatprep.subr.bf16.mxu0 0
        %4344 = vmatpush2.bf16.msra.mxu0 %v3757
        %4345 = vmatprep.subr.bf16.mxu0 0
        %4346 = vmatpush2.bf16.msra.mxu0 %v3756
        %4347 = vmatprep.subr.bf16.mxu0 0
        %4348 = vmatpush2.bf16.msra.mxu0 %v3755
        %4349 = vmatprep.subr.bf16.mxu0 0
        %4350 = vmatpush2.bf16.msra.mxu0 %v3754
        %4351 = vmatprep.subr.bf16.mxu0 0
        %4352 = vmatpush2.bf16.msra.mxu0 %v3753
        %4353 = vmatprep.subr.bf16.mxu0 0
        %4354 = vmatpush2.bf16.msra.mxu0 %v3752
        %4355 = vmatprep.mubr.bf16.mxu0 %v3194
        %4356 = vmatmul.mubr.bf16.gmra.mxu0 %v3146
        %v4357 = vpop.f32.mrf.mxu0
        %v4358 = vadd.f32 %v4197, %v4357
        %v4359 = vpop.f32.mrf.mxu0
        %v4360 = vpop.f32.mrf.mxu0
        %v4361 = vadd.f32 %v4200, %v4360
        %v4362 = vpop.f32.mrf.mxu0
        %4363 = vmatprep.mubr.bf16.mxu0 %v3195
        %4364 = vmatmul.mubr.bf16.gmra.mxu0 %v3147
        %v4365 = vpop.f32.mrf.mxu0
        %v4366 = vadd.f32 %v4205, %v4365
        %v4367 = vpop.f32.mrf.mxu0
        %v4368 = vpop.f32.mrf.mxu0
        %v4369 = vadd.f32 %v4208, %v4368
        %v4370 = vpop.f32.mrf.mxu0
        %4371 = vmatprep.mubr.bf16.mxu0 %v3196
        %4372 = vmatmul.mubr.bf16.gmra.mxu0 %v3148
        %v4373 = vpop.f32.mrf.mxu0
        %v4374 = vadd.f32 %v4213, %v4373
        %v4375 = vpop.f32.mrf.mxu0
        %v4376 = vpop.f32.mrf.mxu0
        %v4377 = vadd.f32 %v4216, %v4376
        %v4378 = vpop.f32.mrf.mxu0
        %4379 = vmatprep.mubr.bf16.mxu0 %v3197
        %4380 = vmatmul.mubr.bf16.gmra.mxu0 %v3149
        %v4381 = vpop.f32.mrf.mxu0
        %v4382 = vadd.f32 %v4221, %v4381
        %v4383 = vpop.f32.mrf.mxu0
        %v4384 = vpop.f32.mrf.mxu0
        %v4385 = vadd.f32 %v4224, %v4384
        %v4386 = vpop.f32.mrf.mxu0
        %4387 = vmatprep.mubr.bf16.mxu0 %v3198
        %4388 = vmatmul.mubr.bf16.gmra.mxu0 %v3150
        %v4389 = vpop.f32.mrf.mxu0
        %v4390 = vadd.f32 %v4229, %v4389
        %v4391 = vpop.f32.mrf.mxu0
        %v4392 = vpop.f32.mrf.mxu0
        %v4393 = vadd.f32 %v4232, %v4392
        %v4394 = vpop.f32.mrf.mxu0
        %4395 = vmatprep.mubr.bf16.mxu0 %v3199
        %4396 = vmatmul.mubr.bf16.gmra.mxu0 %v3151
        %v4397 = vpop.f32.mrf.mxu0
        %v4398 = vadd.f32 %v4237, %v4397
        %v4399 = vpop.f32.mrf.mxu0
        %v4400 = vpop.f32.mrf.mxu0
        %v4401 = vadd.f32 %v4240, %v4400
        %v4402 = vpop.f32.mrf.mxu0
        %4403 = vmatprep.mubr.bf16.mxu0 %v3200
        %4404 = vmatmul.mubr.bf16.gmra.mxu0 %v3152
        %v4405 = vpop.f32.mrf.mxu0
        %v4406 = vadd.f32 %v4245, %v4405
        %v4407 = vpop.f32.mrf.mxu0
        %v4408 = vpop.f32.mrf.mxu0
        %v4409 = vadd.f32 %v4248, %v4408
        %v4410 = vpop.f32.mrf.mxu0
        %4411 = vmatprep.mubr.bf16.mxu0 %v3201
        %4412 = vmatmul.mubr.bf16.gmra.mxu0 %v3153
        %v4413 = vpop.f32.mrf.mxu0
        %v4414 = vadd.f32 %v4253, %v4413
        %v4415 = vpop.f32.mrf.mxu0
        %v4416 = vpop.f32.mrf.mxu0
        %v4417 = vadd.f32 %v4256, %v4416
        %v4418 = vpop.f32.mrf.mxu0
        %4419 = vmatprep.mubr.bf16.mxu0 %v3202
        %4420 = vmatmul.mubr.bf16.gmra.mxu0 %v3154
        %v4421 = vpop.f32.mrf.mxu0
        %v4422 = vadd.f32 %v4261, %v4421
        %v4423 = vpop.f32.mrf.mxu0
        %v4424 = vpop.f32.mrf.mxu0
        %v4425 = vadd.f32 %v4264, %v4424
        %v4426 = vpop.f32.mrf.mxu0
        %4427 = vmatprep.mubr.bf16.mxu0 %v3203
        %4428 = vmatmul.mubr.bf16.gmra.mxu0 %v3155
        %v4429 = vpop.f32.mrf.mxu0
        %v4430 = vadd.f32 %v4269, %v4429
        %v4431 = vpop.f32.mrf.mxu0
        %v4432 = vpop.f32.mrf.mxu0
        %v4433 = vadd.f32 %v4272, %v4432
        %v4434 = vpop.f32.mrf.mxu0
        %4435 = vmatprep.mubr.bf16.mxu0 %v3204
        %4436 = vmatmul.mubr.bf16.gmra.mxu0 %v3156
        %v4437 = vpop.f32.mrf.mxu0
        %v4438 = vadd.f32 %v4277, %v4437
        %v4439 = vpop.f32.mrf.mxu0
        %v4440 = vpop.f32.mrf.mxu0
        %v4441 = vadd.f32 %v4280, %v4440
        %v4442 = vpop.f32.mrf.mxu0
        %4443 = vmatprep.mubr.bf16.mxu0 %v3205
        %4444 = vmatmul.mubr.bf16.gmra.mxu0 %v3157
        %v4445 = vpop.f32.mrf.mxu0
        %v4446 = vadd.f32 %v4285, %v4445
        %v4447 = vpop.f32.mrf.mxu0
        %v4448 = vpop.f32.mrf.mxu0
        %v4449 = vadd.f32 %v4288, %v4448
        %v4450 = vpop.f32.mrf.mxu0
        %4451 = vmatprep.mubr.bf16.mxu0 %v3206
        %4452 = vmatmul.mubr.bf16.gmra.mxu0 %v3158
        %v4453 = vpop.f32.mrf.mxu0
        %v4454 = vadd.f32 %v4293, %v4453
        %v4455 = vpop.f32.mrf.mxu0
        %v4456 = vpop.f32.mrf.mxu0
        %v4457 = vadd.f32 %v4296, %v4456
        %v4458 = vpop.f32.mrf.mxu0
        %4459 = vmatprep.mubr.bf16.mxu0 %v3207
        %4460 = vmatmul.mubr.bf16.gmra.mxu0 %v3159
        %v4461 = vpop.f32.mrf.mxu0
        %v4462 = vadd.f32 %v4301, %v4461
        %v4463 = vpop.f32.mrf.mxu0
        %v4464 = vpop.f32.mrf.mxu0
        %v4465 = vadd.f32 %v4304, %v4464
        %v4466 = vpop.f32.mrf.mxu0
        %4467 = vmatprep.mubr.bf16.mxu0 %v3208
        %4468 = vmatmul.mubr.bf16.gmra.mxu0 %v3160
        %v4469 = vpop.f32.mrf.mxu0
        %v4470 = vadd.f32 %v4309, %v4469
        %v4471 = vpop.f32.mrf.mxu0
        %v4472 = vpop.f32.mrf.mxu0
        %v4473 = vadd.f32 %v4312, %v4472
        %v4474 = vpop.f32.mrf.mxu0
        %4475 = vmatprep.mubr.bf16.mxu0 %v3209
        %4476 = vmatmul.mubr.bf16.gmra.mxu0 %v3161
        %v4477 = vpop.f32.mrf.mxu0
        %v4478 = vadd.f32 %v4317, %v4477
        %v4479 = vpop.f32.mrf.mxu0
        %v4480 = vpop.f32.mrf.mxu0
        %v4481 = vadd.f32 %v4320, %v4480
        %v4482 = vpop.f32.mrf.mxu0
        %4483 = vdwg.mxu0
        %4484 = vmatprep.subr.bf16.mxu0 0
        %4485 = vmatpush1.bf16.msra.mxu0 %v3767
        %4486 = vmatprep.subr.bf16.mxu0 0
        %4487 = vmatpush1.bf16.msra.mxu0 %v3766
        %4488 = vmatprep.subr.bf16.mxu0 0
        %4489 = vmatpush1.bf16.msra.mxu0 %v3765
        %4490 = vmatprep.subr.bf16.mxu0 0
        %4491 = vmatpush1.bf16.msra.mxu0 %v3764
        %4492 = vmatprep.subr.bf16.mxu0 0
        %4493 = vmatpush1.bf16.msra.mxu0 %v3763
        %4494 = vmatprep.subr.bf16.mxu0 0
        %4495 = vmatpush1.bf16.msra.mxu0 %v3762
        %4496 = vmatprep.subr.bf16.mxu0 0
        %4497 = vmatpush1.bf16.msra.mxu0 %v3761
        %4498 = vmatprep.subr.bf16.mxu0 0
        %4499 = vmatpush1.bf16.msra.mxu0 %v3760
        %4500 = vmatprep.subr.bf16.mxu0 0
        %4501 = vmatpush2.bf16.msra.mxu0 0
        %4502 = vmatprep.subr.bf16.mxu0 0
        %4503 = vmatpush2.bf16.msra.mxu0 0
        %4504 = vmatprep.subr.bf16.mxu0 0
        %4505 = vmatpush2.bf16.msra.mxu0 0
        %4506 = vmatprep.subr.bf16.mxu0 0
        %4507 = vmatpush2.bf16.msra.mxu0 0
        %4508 = vmatprep.subr.bf16.mxu0 0
        %4509 = vmatpush2.bf16.msra.mxu0 0
        %4510 = vmatprep.subr.bf16.mxu0 0
        %4511 = vmatpush2.bf16.msra.mxu0 0
        %4512 = vmatprep.subr.bf16.mxu0 0
        %4513 = vmatpush2.bf16.msra.mxu0 0
        %4514 = vmatprep.subr.bf16.mxu0 0
        %4515 = vmatpush2.bf16.msra.mxu0 0
        %4516 = vmatprep.mubr.bf16.mxu0 0
        %4517 = vmatmul.mubr.bf16.gmra.mxu0 %v3242
        %v4518 = vpop.f32.mrf.mxu0
        %v4519 = vadd.f32 %v4358, %v4518
        %v4520 = vpop.f32.mrf.mxu0
        %v4521 = vpop.f32.mrf.mxu0
        %v4522 = vadd.f32 %v4361, %v4521
        %v4523 = vpop.f32.mrf.mxu0
        %4524 = vmatprep.mubr.bf16.mxu0 0
        %4525 = vmatmul.mubr.bf16.gmra.mxu0 %v3243
        %v4526 = vpop.f32.mrf.mxu0
        %v4527 = vadd.f32 %v4366, %v4526
        %v4528 = vpop.f32.mrf.mxu0
        %v4529 = vpop.f32.mrf.mxu0
        %v4530 = vadd.f32 %v4369, %v4529
        %v4531 = vpop.f32.mrf.mxu0
        %4532 = vmatprep.mubr.bf16.mxu0 0
        %4533 = vmatmul.mubr.bf16.gmra.mxu0 %v3244
        %v4534 = vpop.f32.mrf.mxu0
        %v4535 = vadd.f32 %v4374, %v4534
        %v4536 = vpop.f32.mrf.mxu0
        %v4537 = vpop.f32.mrf.mxu0
        %v4538 = vadd.f32 %v4377, %v4537
        %v4539 = vpop.f32.mrf.mxu0
        %4540 = vmatprep.mubr.bf16.mxu0 0
        %4541 = vmatmul.mubr.bf16.gmra.mxu0 %v3245
        %v4542 = vpop.f32.mrf.mxu0
        %v4543 = vadd.f32 %v4382, %v4542
        %v4544 = vpop.f32.mrf.mxu0
        %v4545 = vpop.f32.mrf.mxu0
        %v4546 = vadd.f32 %v4385, %v4545
        %v4547 = vpop.f32.mrf.mxu0
        %4548 = vmatprep.mubr.bf16.mxu0 0
        %4549 = vmatmul.mubr.bf16.gmra.mxu0 %v3246
        %v4550 = vpop.f32.mrf.mxu0
        %v4551 = vadd.f32 %v4390, %v4550
        %v4552 = vpop.f32.mrf.mxu0
        %v4553 = vpop.f32.mrf.mxu0
        %v4554 = vadd.f32 %v4393, %v4553
        %v4555 = vpop.f32.mrf.mxu0
        %4556 = vmatprep.mubr.bf16.mxu0 0
        %4557 = vmatmul.mubr.bf16.gmra.mxu0 %v3247
        %v4558 = vpop.f32.mrf.mxu0
        %v4559 = vadd.f32 %v4398, %v4558
        %v4560 = vpop.f32.mrf.mxu0
        %v4561 = vpop.f32.mrf.mxu0
        %v4562 = vadd.f32 %v4401, %v4561
        %v4563 = vpop.f32.mrf.mxu0
        %4564 = vmatprep.mubr.bf16.mxu0 0
        %4565 = vmatmul.mubr.bf16.gmra.mxu0 %v3248
        %v4566 = vpop.f32.mrf.mxu0
        %v4567 = vadd.f32 %v4406, %v4566
        %v4568 = vpop.f32.mrf.mxu0
        %v4569 = vpop.f32.mrf.mxu0
        %v4570 = vadd.f32 %v4409, %v4569
        %v4571 = vpop.f32.mrf.mxu0
        %4572 = vmatprep.mubr.bf16.mxu0 0
        %4573 = vmatmul.mubr.bf16.gmra.mxu0 %v3249
        %v4574 = vpop.f32.mrf.mxu0
        %v4575 = vadd.f32 %v4414, %v4574
        %v4576 = vpop.f32.mrf.mxu0
        %v4577 = vpop.f32.mrf.mxu0
        %v4578 = vadd.f32 %v4417, %v4577
        %v4579 = vpop.f32.mrf.mxu0
        %4580 = vmatprep.mubr.bf16.mxu0 0
        %4581 = vmatmul.mubr.bf16.gmra.mxu0 %v3250
        %v4582 = vpop.f32.mrf.mxu0
        %v4583 = vadd.f32 %v4422, %v4582
        %v4584 = vpop.f32.mrf.mxu0
        %v4585 = vpop.f32.mrf.mxu0
        %v4586 = vadd.f32 %v4425, %v4585
        %v4587 = vpop.f32.mrf.mxu0
        %4588 = vmatprep.mubr.bf16.mxu0 0
        %4589 = vmatmul.mubr.bf16.gmra.mxu0 %v3251
        %v4590 = vpop.f32.mrf.mxu0
        %v4591 = vadd.f32 %v4430, %v4590
        %v4592 = vpop.f32.mrf.mxu0
        %v4593 = vpop.f32.mrf.mxu0
        %v4594 = vadd.f32 %v4433, %v4593
        %v4595 = vpop.f32.mrf.mxu0
        %4596 = vmatprep.mubr.bf16.mxu0 0
        %4597 = vmatmul.mubr.bf16.gmra.mxu0 %v3252
        %v4598 = vpop.f32.mrf.mxu0
        %v4599 = vadd.f32 %v4438, %v4598
        %v4600 = vpop.f32.mrf.mxu0
        %v4601 = vpop.f32.mrf.mxu0
        %v4602 = vadd.f32 %v4441, %v4601
        %v4603 = vpop.f32.mrf.mxu0
        %4604 = vmatprep.mubr.bf16.mxu0 0
        %4605 = vmatmul.mubr.bf16.gmra.mxu0 %v3253
        %v4606 = vpop.f32.mrf.mxu0
        %v4607 = vadd.f32 %v4446, %v4606
        %v4608 = vpop.f32.mrf.mxu0
        %v4609 = vpop.f32.mrf.mxu0
        %v4610 = vadd.f32 %v4449, %v4609
        %v4611 = vpop.f32.mrf.mxu0
        %4612 = vmatprep.mubr.bf16.mxu0 0
        %4613 = vmatmul.mubr.bf16.gmra.mxu0 %v3254
        %v4614 = vpop.f32.mrf.mxu0
        %v4615 = vadd.f32 %v4454, %v4614
        %v4616 = vpop.f32.mrf.mxu0
        %v4617 = vpop.f32.mrf.mxu0
        %v4618 = vadd.f32 %v4457, %v4617
        %v4619 = vpop.f32.mrf.mxu0
        %4620 = vmatprep.mubr.bf16.mxu0 0
        %4621 = vmatmul.mubr.bf16.gmra.mxu0 %v3255
        %v4622 = vpop.f32.mrf.mxu0
        %v4623 = vadd.f32 %v4462, %v4622
        %v4624 = vpop.f32.mrf.mxu0
        %v4625 = vpop.f32.mrf.mxu0
        %v4626 = vadd.f32 %v4465, %v4625
        %v4627 = vpop.f32.mrf.mxu0
        %4628 = vmatprep.mubr.bf16.mxu0 0
        %4629 = vmatmul.mubr.bf16.gmra.mxu0 %v3256
        %v4630 = vpop.f32.mrf.mxu0
        %v4631 = vadd.f32 %v4470, %v4630
        %v4632 = vpop.f32.mrf.mxu0
        %v4633 = vpop.f32.mrf.mxu0
        %v4634 = vadd.f32 %v4473, %v4633
        %v4635 = vpop.f32.mrf.mxu0
        %4636 = vmatprep.mubr.bf16.mxu0 0
        %4637 = vmatmul.mubr.bf16.gmra.mxu0 %v3257
        %v4638 = vpop.f32.mrf.mxu0
        %v4639 = vadd.f32 %v4478, %v4638
        %v4640 = vpop.f32.mrf.mxu0
        %v4641 = vpop.f32.mrf.mxu0
        %v4642 = vadd.f32 %v4481, %v4641
        %v4643 = vpop.f32.mrf.mxu0
        %4644 = vdwg.mxu0
        %v4645 = vadd.f32 %v4519, %v4522
        %v4646 = vadd.f32 %v4645, %v4527
        %v4647 = vadd.f32 %v4646, %v4530
        %v4648 = vadd.f32 %v4647, %v4535
        %v4649 = vadd.f32 %v4648, %v4538
        %v4650 = vadd.f32 %v4649, %v4543
        %v4651 = vadd.f32 %v4650, %v4546
        %v4652 = vadd.f32 %v4651, %v4551
        %v4653 = vadd.f32 %v4652, %v4554
        %v4654 = vadd.f32 %v4653, %v4559
        %v4655 = vadd.f32 %v4654, %v4562
        %v4656 = vadd.f32 %v4655, %v4567
        %v4657 = vadd.f32 %v4656, %v4570
        %v4658 = vadd.f32 %v4657, %v4575
        %v4659 = vadd.f32 %v4658, %v4578
        %v4660 = vadd.f32 %v4659, %v4583
        %v4661 = vadd.f32 %v4660, %v4586
        %v4662 = vadd.f32 %v4661, %v4591
        %v4663 = vadd.f32 %v4662, %v4594
        %v4664 = vadd.f32 %v4663, %v4599
        %v4665 = vadd.f32 %v4664, %v4602
        %v4666 = vadd.f32 %v4665, %v4607
        %v4667 = vadd.f32 %v4666, %v4610
        %v4668 = vadd.f32 %v4667, %v4615
        %v4669 = vadd.f32 %v4668, %v4618
        %v4670 = vadd.f32 %v4669, %v4623
        %v4671 = vadd.f32 %v4670, %v4626
        %v4672 = vadd.f32 %v4671, %v4631
        %v4673 = vadd.f32 %v4672, %v4634
        %v4674 = vadd.f32 %v4673, %v4639
        %v4675 = vadd.f32 %v4674, %v4642
        %v4676 = vrot.slane %v4675, 4
        %v4677 = vadd.f32 %v4675, %v4676
        %v4678 = vrot.slane %v4677, 2
        %v4679 = vadd.f32 %v4677, %v4678
        %v4680 = vrot.slane %v4679, 1
        %v4681 = vadd.f32 %v4679, %v4680
        %v4682 = vmul.f32 %v4519, %v4519
        %v4683 = vmul.f32 %v4522, %v4522
        %v4684 = vmul.f32 %v4527, %v4527
        %v4685 = vmul.f32 %v4530, %v4530
        %v4686 = vmul.f32 %v4535, %v4535
        %v4687 = vmul.f32 %v4538, %v4538
        %v4688 = vmul.f32 %v4543, %v4543
        %v4689 = vmul.f32 %v4546, %v4546
        %v4690 = vmul.f32 %v4551, %v4551
        %v4691 = vmul.f32 %v4554, %v4554
        %v4692 = vmul.f32 %v4559, %v4559
        %v4693 = vmul.f32 %v4562, %v4562
        %v4694 = vmul.f32 %v4567, %v4567
        %v4695 = vmul.f32 %v4570, %v4570
        %v4696 = vmul.f32 %v4575, %v4575
        %v4697 = vmul.f32 %v4578, %v4578
        %v4698 = vmul.f32 %v4583, %v4583
        %v4699 = vmul.f32 %v4586, %v4586
        %v4700 = vmul.f32 %v4591, %v4591
        %v4701 = vmul.f32 %v4594, %v4594
        %v4702 = vmul.f32 %v4599, %v4599
        %v4703 = vmul.f32 %v4602, %v4602
        %v4704 = vmul.f32 %v4607, %v4607
        %v4705 = vmul.f32 %v4610, %v4610
        %v4706 = vmul.f32 %v4615, %v4615
        %v4707 = vmul.f32 %v4618, %v4618
        %v4708 = vmul.f32 %v4623, %v4623
        %v4709 = vmul.f32 %v4626, %v4626
        %v4710 = vmul.f32 %v4631, %v4631
        %v4711 = vmul.f32 %v4634, %v4634
        %v4712 = vmul.f32 %v4639, %v4639
        %v4713 = vmul.f32 %v4642, %v4642
        %v4714 = vadd.f32 %v4682, %v4683
        %v4715 = vadd.f32 %v4714, %v4684
        %v4716 = vadd.f32 %v4715, %v4685
        %v4717 = vadd.f32 %v4716, %v4686
        %v4718 = vadd.f32 %v4717, %v4687
        %v4719 = vadd.f32 %v4718, %v4688
        %v4720 = vadd.f32 %v4719, %v4689
        %v4721 = vadd.f32 %v4720, %v4690
        %v4722 = vadd.f32 %v4721, %v4691
        %v4723 = vadd.f32 %v4722, %v4692
        %v4724 = vadd.f32 %v4723, %v4693
        %v4725 = vadd.f32 %v4724, %v4694
        %v4726 = vadd.f32 %v4725, %v4695
        %v4727 = vadd.f32 %v4726, %v4696
        %v4728 = vadd.f32 %v4727, %v4697
        %v4729 = vadd.f32 %v4728, %v4698
        %v4730 = vadd.f32 %v4729, %v4699
        %v4731 = vadd.f32 %v4730, %v4700
        %v4732 = vadd.f32 %v4731, %v4701
        %v4733 = vadd.f32 %v4732, %v4702
        %v4734 = vadd.f32 %v4733, %v4703
        %v4735 = vadd.f32 %v4734, %v4704
        %v4736 = vadd.f32 %v4735, %v4705
        %v4737 = vadd.f32 %v4736, %v4706
        %v4738 = vadd.f32 %v4737, %v4707
        %v4739 = vadd.f32 %v4738, %v4708
        %v4740 = vadd.f32 %v4739, %v4709
        %v4741 = vadd.f32 %v4740, %v4710
        %v4742 = vadd.f32 %v4741, %v4711
        %v4743 = vadd.f32 %v4742, %v4712
        %v4744 = vadd.f32 %v4743, %v4713
        %v4745 = vrot.slane %v4744, 4
        %v4746 = vadd.f32 %v4744, %v4745
        %v4747 = vrot.slane %v4746, 2
        %v4748 = vadd.f32 %v4746, %v4747
        %v4749 = vrot.slane %v4748, 1
        %v4750 = vadd.f32 %v4748, %v4749
        %v4751 = vmul.f32 %v4681, 0.00390625
        %v4752 = vmul.f32 %v4750, 0.00390625
        %v4753 = vmul.f32 %v4751, %v4751
        %v4754 = vsub.f32 %v4752, %v4753
        %v4755 = vsub.f32 %v4519, %v4751
        %v4756 = vsub.f32 %v4522, %v4751
        %v4757 = vsub.f32 %v4527, %v4751
        %v4758 = vsub.f32 %v4530, %v4751
        %v4759 = vsub.f32 %v4535, %v4751
        %v4760 = vsub.f32 %v4538, %v4751
        %v4761 = vsub.f32 %v4543, %v4751
        %v4762 = vsub.f32 %v4546, %v4751
        %v4763 = vsub.f32 %v4551, %v4751
        %v4764 = vsub.f32 %v4554, %v4751
        %v4765 = vsub.f32 %v4559, %v4751
        %v4766 = vsub.f32 %v4562, %v4751
        %v4767 = vsub.f32 %v4567, %v4751
        %v4768 = vsub.f32 %v4570, %v4751
        %v4769 = vsub.f32 %v4575, %v4751
        %v4770 = vsub.f32 %v4578, %v4751
        %v4771 = vsub.f32 %v4583, %v4751
        %v4772 = vsub.f32 %v4586, %v4751
        %v4773 = vsub.f32 %v4591, %v4751
        %v4774 = vsub.f32 %v4594, %v4751
        %v4775 = vsub.f32 %v4599, %v4751
        %v4776 = vsub.f32 %v4602, %v4751
        %v4777 = vsub.f32 %v4607, %v4751
        %v4778 = vsub.f32 %v4610, %v4751
        %v4779 = vsub.f32 %v4615, %v4751
        %v4780 = vsub.f32 %v4618, %v4751
        %v4781 = vsub.f32 %v4623, %v4751
        %v4782 = vsub.f32 %v4626, %v4751
        %v4783 = vsub.f32 %v4631, %v4751
        %v4784 = vsub.f32 %v4634, %v4751
        %v4785 = vsub.f32 %v4639, %v4751
        %v4786 = vsub.f32 %v4642, %v4751
        %v4787 = vadd.f32 %v4754, 1e-05
        %v4788 = vrsqrt.pop %v4787
        %v4789 = vmul.f32 %v4755, %v4788
        %v4790 = vmul.f32 %v4756, %v4788
        %v4791 = vmul.f32 %v4757, %v4788
        %v4792 = vmul.f32 %v4758, %v4788
        %v4793 = vmul.f32 %v4759, %v4788
        %v4794 = vmul.f32 %v4760, %v4788
        %v4795 = vmul.f32 %v4761, %v4788
        %v4796 = vmul.f32 %v4762, %v4788
        %v4797 = vmul.f32 %v4763, %v4788
        %v4798 = vmul.f32 %v4764, %v4788
        %v4799 = vmul.f32 %v4765, %v4788
        %v4800 = vmul.f32 %v4766, %v4788
        %v4801 = vmul.f32 %v4767, %v4788
        %v4802 = vmul.f32 %v4768, %v4788
        %v4803 = vmul.f32 %v4769, %v4788
        %v4804 = vmul.f32 %v4770, %v4788
        %v4805 = vmul.f32 %v4771, %v4788
        %v4806 = vmul.f32 %v4772, %v4788
        %v4807 = vmul.f32 %v4773, %v4788
        %v4808 = vmul.f32 %v4774, %v4788
        %v4809 = vmul.f32 %v4775, %v4788
        %v4810 = vmul.f32 %v4776, %v4788
        %v4811 = vmul.f32 %v4777, %v4788
        %v4812 = vmul.f32 %v4778, %v4788
        %v4813 = vmul.f32 %v4779, %v4788
        %v4814 = vmul.f32 %v4780, %v4788
        %v4815 = vmul.f32 %v4781, %v4788
        %v4816 = vmul.f32 %v4782, %v4788
        %v4817 = vmul.f32 %v4783, %v4788
        %v4818 = vmul.f32 %v4784, %v4788
        %v4819 = vmul.f32 %v4785, %v4788
        %v4820 = vmul.f32 %v4786, %v4788
        %v4822 = vlaneseq
        %v4823 = vshrl.u32 %v4822, 7
        %v4824 = vsub.s32 0, %v4823
        %v4825 = vrot.slane %v2716, %v4824
        %v4827 = vmul.f32 %v4789, %v4825
        %v4828 = vmul.f32 %v4790, %v4825
        %v4829 = vmul.f32 %v4791, %v4825
        %v4830 = vmul.f32 %v4792, %v4825
        %v4831 = vmul.f32 %v4793, %v4825
        %v4832 = vmul.f32 %v4794, %v4825
        %v4833 = vmul.f32 %v4795, %v4825
        %v4834 = vmul.f32 %v4796, %v4825
        %v4835 = vmul.f32 %v4797, %v4825
        %v4836 = vmul.f32 %v4798, %v4825
        %v4837 = vmul.f32 %v4799, %v4825
        %v4838 = vmul.f32 %v4800, %v4825
        %v4839 = vmul.f32 %v4801, %v4825
        %v4840 = vmul.f32 %v4802, %v4825
        %v4841 = vmul.f32 %v4803, %v4825
        %v4842 = vmul.f32 %v4804, %v4825
        %v4843 = vmul.f32 %v4805, %v4825
        %v4844 = vmul.f32 %v4806, %v4825
        %v4845 = vmul.f32 %v4807, %v4825
        %v4846 = vmul.f32 %v4808, %v4825
        %v4847 = vmul.f32 %v4809, %v4825
        %v4848 = vmul.f32 %v4810, %v4825
        %v4849 = vmul.f32 %v4811, %v4825
        %v4850 = vmul.f32 %v4812, %v4825
        %v4851 = vmul.f32 %v4813, %v4825
        %v4852 = vmul.f32 %v4814, %v4825
        %v4853 = vmul.f32 %v4815, %v4825
        %v4854 = vmul.f32 %v4816, %v4825
        %v4855 = vmul.f32 %v4817, %v4825
        %v4856 = vmul.f32 %v4818, %v4825
        %v4857 = vmul.f32 %v4819, %v4825
        %v4858 = vmul.f32 %v4820, %v4825
        %v4860 = vlaneseq
        %v4861 = vshrl.u32 %v4860, 7
        %v4862 = vsub.s32 0, %v4861
        %v4863 = vrot.slane %v2717, %v4862
        %v4865 = vadd.f32 %v4827, %v4863
        %v4866 = vadd.f32 %v4828, %v4863
        %v4867 = vadd.f32 %v4829, %v4863
        %v4868 = vadd.f32 %v4830, %v4863
        %v4869 = vadd.f32 %v4831, %v4863
        %v4870 = vadd.f32 %v4832, %v4863
        %v4871 = vadd.f32 %v4833, %v4863
        %v4872 = vadd.f32 %v4834, %v4863
        %v4873 = vadd.f32 %v4835, %v4863
        %v4874 = vadd.f32 %v4836, %v4863
        %v4875 = vadd.f32 %v4837, %v4863
        %v4876 = vadd.f32 %v4838, %v4863
        %v4877 = vadd.f32 %v4839, %v4863
        %v4878 = vadd.f32 %v4840, %v4863
        %v4879 = vadd.f32 %v4841, %v4863
        %v4880 = vadd.f32 %v4842, %v4863
        %v4881 = vadd.f32 %v4843, %v4863
        %v4882 = vadd.f32 %v4844, %v4863
        %v4883 = vadd.f32 %v4845, %v4863
        %v4884 = vadd.f32 %v4846, %v4863
        %v4885 = vadd.f32 %v4847, %v4863
        %v4886 = vadd.f32 %v4848, %v4863
        %v4887 = vadd.f32 %v4849, %v4863
        %v4888 = vadd.f32 %v4850, %v4863
        %v4889 = vadd.f32 %v4851, %v4863
        %v4890 = vadd.f32 %v4852, %v4863
        %v4891 = vadd.f32 %v4853, %v4863
        %v4892 = vadd.f32 %v4854, %v4863
        %v4893 = vadd.f32 %v4855, %v4863
        %v4894 = vadd.f32 %v4856, %v4863
        %v4895 = vadd.f32 %v4857, %v4863
        %v4896 = vadd.f32 %v4858, %v4863
        %v4897 = vld [vmem:[#allocation3] sm:$0xff]
        %v4898 = vld [vmem:[#allocation3 + $0x8] sm:$0xff]
        %v4899 = vld [vmem:[#allocation3 + $0x10] sm:$0xff]
        %v4900 = vld [vmem:[#allocation3 + $0x18] sm:$0xff]
        %v4901 = vld [vmem:[#allocation3 + $0x20] sm:$0xff]
        %v4902 = vld [vmem:[#allocation3 + $0x28] sm:$0xff]
        %v4903 = vld [vmem:[#allocation3 + $0x30] sm:$0xff]
        %v4904 = vld [vmem:[#allocation3 + $0x38] sm:$0xff]
        %v4905 = vld [vmem:[#allocation3 + $0x40] sm:$0xff]
        %v4906 = vld [vmem:[#allocation3 + $0x48] sm:$0xff]
        %v4907 = vld [vmem:[#allocation3 + $0x50] sm:$0xff]
        %v4908 = vld [vmem:[#allocation3 + $0x58] sm:$0xff]
        %v4909 = vld [vmem:[#allocation3 + $0x60] sm:$0xff]
        %v4910 = vld [vmem:[#allocation3 + $0x68] sm:$0xff]
        %v4911 = vld [vmem:[#allocation3 + $0x70] sm:$0xff]
        %v4912 = vld [vmem:[#allocation3 + $0x78] sm:$0xff]
        %v4913 = vld [vmem:[#allocation3 + $0x80] sm:$0xff]
        %v4914 = vld [vmem:[#allocation3 + $0x88] sm:$0xff]
        %v4915 = vld [vmem:[#allocation3 + $0x90] sm:$0xff]
        %v4916 = vld [vmem:[#allocation3 + $0x98] sm:$0xff]
        %v4917 = vld [vmem:[#allocation3 + $0xa0] sm:$0xff]
        %v4918 = vld [vmem:[#allocation3 + $0xa8] sm:$0xff]
        %v4919 = vld [vmem:[#allocation3 + $0xb0] sm:$0xff]
        %v4920 = vld [vmem:[#allocation3 + $0xb8] sm:$0xff]
        %v4921 = vld [vmem:[#allocation3 + $0xc0] sm:$0xff]
        %v4922 = vld [vmem:[#allocation3 + $0xc8] sm:$0xff]
        %v4923 = vld [vmem:[#allocation3 + $0xd0] sm:$0xff]
        %v4924 = vld [vmem:[#allocation3 + $0xd8] sm:$0xff]
        %v4925 = vld [vmem:[#allocation3 + $0xe0] sm:$0xff]
        %v4926 = vld [vmem:[#allocation3 + $0xe8] sm:$0xff]
        %v4927 = vld [vmem:[#allocation3 + $0xf0] sm:$0xff]
        %v4928 = vld [vmem:[#allocation3 + $0xf8] sm:$0xff]
        %v4929 = vadd.f32 %v4865, %v4897
        %v4930 = vadd.f32 %v4866, %v4898
        %v4931 = vadd.f32 %v4867, %v4899
        %v4932 = vadd.f32 %v4868, %v4900
        %v4933 = vadd.f32 %v4869, %v4901
        %v4934 = vadd.f32 %v4870, %v4902
        %v4935 = vadd.f32 %v4871, %v4903
        %v4936 = vadd.f32 %v4872, %v4904
        %v4937 = vadd.f32 %v4873, %v4905
        %v4938 = vadd.f32 %v4874, %v4906
        %v4939 = vadd.f32 %v4875, %v4907
        %v4940 = vadd.f32 %v4876, %v4908
        %v4941 = vadd.f32 %v4877, %v4909
        %v4942 = vadd.f32 %v4878, %v4910
        %v4943 = vadd.f32 %v4879, %v4911
        %v4944 = vadd.f32 %v4880, %v4912
        %v4945 = vadd.f32 %v4881, %v4913
        %v4946 = vadd.f32 %v4882, %v4914
        %v4947 = vadd.f32 %v4883, %v4915
        %v4948 = vadd.f32 %v4884, %v4916
        %v4949 = vadd.f32 %v4885, %v4917
        %v4950 = vadd.f32 %v4886, %v4918
        %v4951 = vadd.f32 %v4887, %v4919
        %v4952 = vadd.f32 %v4888, %v4920
        %v4953 = vadd.f32 %v4889, %v4921
        %v4954 = vadd.f32 %v4890, %v4922
        %v4955 = vadd.f32 %v4891, %v4923
        %v4956 = vadd.f32 %v4892, %v4924
        %v4957 = vadd.f32 %v4893, %v4925
        %v4958 = vadd.f32 %v4894, %v4926
        %v4959 = vadd.f32 %v4895, %v4927
        %v4960 = vadd.f32 %v4896, %v4928
        %4961 = vst [vmem:[%s340] sm:$0xff] %v4929
        %4962 = vst [vmem:[%s340 + $0x8] sm:$0xff] %v4930
        %4963 = vst [vmem:[%s340 + $0x10] sm:$0xff] %v4931
        %4964 = vst [vmem:[%s340 + $0x18] sm:$0xff] %v4932
        %4965 = vst [vmem:[%s340 + $0x20] sm:$0xff] %v4933
        %4966 = vst [vmem:[%s340 + $0x28] sm:$0xff] %v4934
        %4967 = vst [vmem:[%s340 + $0x30] sm:$0xff] %v4935
        %4968 = vst [vmem:[%s340 + $0x38] sm:$0xff] %v4936
        %4969 = vst [vmem:[%s340 + $0x40] sm:$0xff] %v4937
        %4970 = vst [vmem:[%s340 + $0x48] sm:$0xff] %v4938
        %4971 = vst [vmem:[%s340 + $0x50] sm:$0xff] %v4939
        %4972 = vst [vmem:[%s340 + $0x58] sm:$0xff] %v4940
        %4973 = vst [vmem:[%s340 + $0x60] sm:$0xff] %v4941
        %4974 = vst [vmem:[%s340 + $0x68] sm:$0xff] %v4942
        %4975 = vst [vmem:[%s340 + $0x70] sm:$0xff] %v4943
        %4976 = vst [vmem:[%s340 + $0x78] sm:$0xff] %v4944
        %4977 = vst [vmem:[%s340 + $0x80] sm:$0xff] %v4945
        %4978 = vst [vmem:[%s340 + $0x88] sm:$0xff] %v4946
        %4979 = vst [vmem:[%s340 + $0x90] sm:$0xff] %v4947
        %4980 = vst [vmem:[%s340 + $0x98] sm:$0xff] %v4948
        %4981 = vst [vmem:[%s340 + $0xa0] sm:$0xff] %v4949
        %4982 = vst [vmem:[%s340 + $0xa8] sm:$0xff] %v4950
        %4983 = vst [vmem:[%s340 + $0xb0] sm:$0xff] %v4951
        %4984 = vst [vmem:[%s340 + $0xb8] sm:$0xff] %v4952
        %4985 = vst [vmem:[%s340 + $0xc0] sm:$0xff] %v4953
        %4986 = vst [vmem:[%s340 + $0xc8] sm:$0xff] %v4954
        %4987 = vst [vmem:[%s340 + $0xd0] sm:$0xff] %v4955
        %4988 = vst [vmem:[%s340 + $0xd8] sm:$0xff] %v4956
        %4989 = vst [vmem:[%s340 + $0xe0] sm:$0xff] %v4957
        %4990 = vst [vmem:[%s340 + $0xe8] sm:$0xff] %v4958
        %4991 = vst [vmem:[%s340 + $0xf0] sm:$0xff] %v4959
        %4992 = vst [vmem:[%s340 + $0xf8] sm:$0xff] %v4960
        %s4993 = sand.u32 %s226, 1
        %s4994 = scalar_lea.sflag [#allocation6], %s4993
        %s4995 = sand.u32 %s226, 1
        %s4996 = smul.addr %s4995, 256
        %s4997 = scalar_lea.vmem [#allocation7], %s4996
        // Predicated region
        $region61: #{tpu_custom_call.1} parent=55 // pred_check
          %p4998 = pneg %p236
        $region62: #{tpu_custom_call.1} parent=55 // pred_check_branch
          %5000 = sbr.rel (%p4998) target = $region64
        $region63: #{tpu_custom_call.1} parent=55 // pred_region
          %s5002 = ssub.s32 4096, 4096
          %5003 = vsyncadd %s4994, %s5002
          %s5004 = smul.addr %s24, 32
          %s5005 = smul.addr %s5004, 128
          %s5006 = scalar_lea.hbm %s9, %s5005
          %s5007 = sshll.u32 %s4997, 4
          %s5008 = int_to_ptr.vmem [resolvable:$true] %s5007
          %5013 = dma.vmem_to_hbm [thread:$0]  %s5008, 4096, %s5006, %s4994, 128, 128, 8
        $region64: #{tpu_custom_call.1} parent=55 // pred_fallthru
          _
      $region56: #{tpu_custom_call.1} parent=5 // pred_fallthru
        _
      %p5014 = scmp.le.s32.totalorder 2, %s19
      // Predicated region
      $region65: #{tpu_custom_call.1} parent=5 // pred_check
        %p5015 = pneg %p5014
      $region66: #{tpu_custom_call.1} parent=5 // pred_check_branch
        %5017 = sbr.rel (%p5015) target = $region68
      $region67: #{tpu_custom_call.1} parent=5 // pred_region
        %s5018 = ssub.s32 %s19, 2
        // Predicated region
        $region69: #{tpu_custom_call.1} parent=67 // pred_check
          %p5019 = pneg %p242
        $region70: #{tpu_custom_call.1} parent=67 // pred_check_branch
          %5021 = sbr.rel (%p5019) target = $region72
        $region71: #{tpu_custom_call.1} parent=67 // pred_region
          %s5022 = sand.u32 %s227, 1
          %s5023 = scalar_lea.sflag [#allocation6], %s5022
          %s5024 = sand.u32 %s227, 1
          %s5025 = smul.addr %s5024, 256
          %s5026 = scalar_lea.vmem [#allocation7], %s5025
          %5027 = dma.done %s5023, 4096
        $region72: #{tpu_custom_call.1} parent=67 // pred_fallthru
          _
      $region68: #{tpu_custom_call.1} parent=5 // pred_fallthru
        _
    $region6: #{tpu_custom_call.1} parent=1 // loop_footer
      %s23 = sadd.s32 1, %s19
    $region7: #{tpu_custom_call.1} parent=1 // loop_footer_branch
      %18 = sbr.rel target = $region3
    $region8: #{tpu_custom_call.1} parent=1 // loop_exit
      _
    %5028 = vsyncpa [#allocation5], 1
    %s5029 = scalar_lea.sflag [#allocation5], 1
    %5030 = vsyncpa %s5029, 1
    %5031 = vsyncpa [#allocation6], 1
    %s5032 = scalar_lea.sflag [#allocation6], 1
    %5033 = vsyncpa %s5032, 1

</llo_original>
